<compile_context>
chip_gen: v7x
topology: tpu7x:2x2x1
jax: 0.10.0
libtpu: 0.0.40
codegen_flags: <defaults>
</compile_context>

<pallas_src>
import functools

import jax
import jax.numpy as jnp
from jax.experimental import pallas as pl
from jax.experimental.pallas import tpu as pltpu


# ----------------------------------------------------------------------------
# Utilities
# ----------------------------------------------------------------------------
def get_bit_num(number):
    """Port of DdpgUtility.get_bit_num (number of bits of `number - 1`)."""
    def rec(n, count):
        if n in (0, 1):
            return count
        return rec(n // 2, count + 1)
    return rec(number - 1, 1)


def _round_up(x, m):
    return ((x + m - 1) // m) * m


FC1_TK = 1536  # K-tile for the fused fc1/fc2/fc3 kernel (multiple of 128)


# ----------------------------------------------------------------------------
# Pallas kernels
# ----------------------------------------------------------------------------
def _conv_matmul_kernel(x_ref, w_ref, b_ref, o_ref):
    """o = relu(x @ w + b). Single K step; grid axis tiles M (parallel)."""
    o_ref[...] = jnp.maximum(
        jnp.dot(x_ref[...], w_ref[...], preferred_element_type=jnp.float32)
        + b_ref[...],
        0.0,
    )


def _mlp_head_kernel(x_ref, w1_ref, b1_ref, w2_ref, b2_ref, w3_ref, b3_ref,
                     o_ref, acc_ref, *, nk):
    """Fused fc1 (K-tiled) -> relu -> fc2 -> relu -> fc3 -> relu."""
    k = pl.program_id(0)

    @pl.when(k == 0)
    def _():
        acc_ref[...] = jnp.zeros_like(acc_ref)

    acc_ref[...] += jnp.dot(x_ref[...], w1_ref[...],
                            preferred_element_type=jnp.float32)

    @pl.when(k == nk - 1)
    def _():
        h = jnp.maximum(acc_ref[...] + b1_ref[...], 0.0)                 # fc1
        h = jnp.maximum(
            jnp.dot(h, w2_ref[...], preferred_element_type=jnp.float32)
            + b2_ref[...], 0.0)                                          # fc2
        h = jnp.maximum(
            jnp.dot(h, w3_ref[...], preferred_element_type=jnp.float32)
            + b3_ref[...], 0.0)                                          # fc3
        o_ref[...] = h


# ----------------------------------------------------------------------------
# Kernel wrappers
# ----------------------------------------------------------------------------
def conv_matmul(cols, w, b, *, n_m_tiles=2):
    """relu(cols @ w + b) with an M-parallel grid (uses both TCs on v7x)."""
    M, K = cols.shape
    Kw, N = w.shape
    assert K == Kw, (K, Kw)
    nm = max(1, n_m_tiles)
    tm = _round_up(-(-M // nm), 8)
    Mp = tm * nm
    if Mp != M:
        cols = jnp.pad(cols, ((0, Mp - M), (0, 0)))

    out = pl.pallas_call(
        _conv_matmul_kernel,
        out_shape=jax.ShapeDtypeStruct((Mp, N), jnp.float32),
        grid_spec=pltpu.PrefetchScalarGridSpec(
            num_scalar_prefetch=0,
            grid=(nm,),
            in_specs=[
                pl.BlockSpec((tm, K), lambda m: (m, 0)),
                pl.BlockSpec((K, N), lambda m: (0, 0)),
                pl.BlockSpec((1, N), lambda m: (0, 0)),
            ],
            out_specs=pl.BlockSpec((tm, N), lambda m: (m, 0)),
        ),
        compiler_params=pltpu.CompilerParams(
            dimension_semantics=("parallel",)),
    )(cols, w, b)
    return out[:M] if Mp != M else out


def mlp_head(x, prep):
    """Fused fc1/fc2/fc3 (+ReLU) on pre-padded weights. x: (B, 10432)."""
    B, K = x.shape
    Kp, N1 = prep["fc1_w"].shape
    assert K <= Kp and Kp % FC1_TK == 0, (K, Kp)
    nk = Kp // FC1_TK
    n2 = prep["fc2_w"].shape[1]
    n3 = prep["fc3_w"].shape[1]
    Mp = _round_up(B, 8)
    xp = jnp.pad(x, ((0, Mp - B), (0, Kp - K)))

    out = pl.pallas_call(
        functools.partial(_mlp_head_kernel, nk=nk),
        out_shape=jax.ShapeDtypeStruct((Mp, n3), jnp.float32),
        grid_spec=pltpu.PrefetchScalarGridSpec(
            num_scalar_prefetch=0,
            grid=(nk,),
            in_specs=[
                pl.BlockSpec((Mp, FC1_TK), lambda k: (0, k)),
                pl.BlockSpec((FC1_TK, N1), lambda k: (k, 0)),
                pl.BlockSpec((1, N1), lambda k: (0, 0)),
                pl.BlockSpec((N1, n2), lambda k: (0, 0)),
                pl.BlockSpec((1, n2), lambda k: (0, 0)),
                pl.BlockSpec((n2, n3), lambda k: (0, 0)),
                pl.BlockSpec((1, n3), lambda k: (0, 0)),
            ],
            out_specs=pl.BlockSpec((Mp, n3), lambda k: (0, 0)),
            scratch_shapes=[pltpu.VMEM((Mp, N1), jnp.float32)],
        ),
        compiler_params=pltpu.CompilerParams(
            dimension_semantics=("arbitrary",)),
    )(xp, prep["fc1_w"], prep["fc1_b"], prep["fc2_w"], prep["fc2_b"],
      prep["fc3_w"], prep["fc3_b"])
    return out[:B, :1]


# ----------------------------------------------------------------------------
# im2col glue (plain JAX)
# ----------------------------------------------------------------------------
def im2col_nchw(x, k, stride):
    """NCHW input -> (B*OH*OW, C*k*k); patch flat order (c, kh, kw)."""
    B, C, H, W = x.shape
    OH = (H - k) // stride + 1
    OW = (W - k) // stride + 1
    cols = jnp.stack(
        [x[:, :, i:i + stride * (OH - 1) + 1:stride,
                j:j + stride * (OW - 1) + 1:stride]
         for i in range(k) for j in range(k)],
        axis=2)                                     # (B, C, k*k, OH, OW)
    cols = cols.reshape(B, C * k * k, OH, OW)
    cols = cols.transpose(0, 2, 3, 1).reshape(B * OH * OW, C * k * k)
    return cols, OH, OW


def im2col_nhwc(x, k, stride):
    """NHWC input -> (B*OH*OW, k*k*C); patch flat order (kh, kw, c)."""
    B, H, W, C = x.shape
    OH = (H - k) // stride + 1
    OW = (W - k) // stride + 1
    cols = jnp.stack(
        [x[:, i:i + stride * (OH - 1) + 1:stride,
              j:j + stride * (OW - 1) + 1:stride, :]
         for i in range(k) for j in range(k)],
        axis=3)                                     # (B, OH, OW, k*k, C)
    return cols.reshape(B * OH * OW, k * k * C), OH, OW


# ----------------------------------------------------------------------------
# One-time parameter preparation (reshape / reorder / pad -- done ONCE)
# ----------------------------------------------------------------------------
def prepare_params(p):
    # conv1: OIHW -> (cin*kh*kw, cout); row order (c, kh, kw) for NCHW im2col.
    conv1_w = p["conv1_w"].reshape(p["conv1_w"].shape[0], -1).T     # (256, 32)
    # conv2: OIHW -> (kh*kw*cin, cout); row order (kh, kw, c) for NHWC im2col.
    conv2_w = p["conv2_w"].transpose(2, 3, 1, 0).reshape(
        -1, p["conv2_w"].shape[0])                                  # (288, 32)

    # fc1: permute state rows from PyTorch (c, h, w) flatten order to our NHWC
    # (h, w, c) order; keep trailing 64 action rows; pad K to multiple of tk.
    c2, oh2, ow2 = 32, 18, 18
    n_state = c2 * oh2 * ow2                                        # 10368
    n1 = p["fc1_w"].shape[1]                                        # 400
    w_state = p["fc1_w"][:n_state].reshape(c2, oh2, ow2, n1)
    w_state = w_state.transpose(1, 2, 0, 3).reshape(n_state, n1)
    w_fc1 = jnp.concatenate([w_state, p["fc1_w"][n_state:]], axis=0)
    kp = _round_up(w_fc1.shape[0], FC1_TK)                          # 10752
    fc1_w = jnp.zeros((kp, n1), jnp.float32).at[:w_fc1.shape[0]].set(w_fc1)

    # fc3: pad output width 1 -> 128 so the fused kernel's store is lane-dense.
    k3 = p["fc3_w"].shape[0]                                        # 300
    fc3_w = jnp.zeros((k3, 128), jnp.float32).at[:, :1].set(p["fc3_w"])
    fc3_b = jnp.zeros((1, 128), jnp.float32).at[0, :1].set(p["fc3_b"])

    return {
        "conv1_w": conv1_w, "conv1_b": p["conv1_b"].reshape(1, -1),
        "conv2_w": conv2_w, "conv2_b": p["conv2_b"].reshape(1, -1),
        "afc1_w": p["afc1_w"], "afc1_b": p["afc1_b"],
        "afc2_w": p["afc2_w"], "afc2_b": p["afc2_b"],
        "fc1_w": fc1_w, "fc1_b": p["fc1_b"].reshape(1, -1),
        "fc2_w": p["fc2_w"], "fc2_b": p["fc2_b"].reshape(1, -1),
        "fc3_w": fc3_w, "fc3_b": fc3_b,
    }


# ----------------------------------------------------------------------------
# CriticNetwork forward (Pallas-backed)
# ----------------------------------------------------------------------------
def critic_forward(prep, state, action):
    B = state.shape[0]

    # conv1: Conv2d(4, 32, k=8, s=4) + ReLU   (NCHW im2col -> Pallas matmul)
    cols1, oh1, ow1 = im2col_nchw(state, 8, 4)
    h1 = conv_matmul(cols1, prep["conv1_w"], prep["conv1_b"])   # (B*20*20, 32)
    h1 = h1.reshape(B, oh1, ow1, 32)                            # NHWC

    # conv2: Conv2d(32, 32, k=3, s=1) + ReLU  (NHWC im2col -> Pallas matmul)
    cols2, oh2, ow2 = im2col_nhwc(h1, 3, 1)
    h2 = conv_matmul(cols2, prep["conv2_w"], prep["conv2_b"])   # (B*18*18, 32)
    # NHWC flatten; fc1_w rows were permuted at prep time to match this order.
    state_flat = h2.reshape(B, oh2 * ow2 * 32)                  # (B, 10368)

    # action path: Linear(1,64) -> ReLU -> Linear(64,64) -> ReLU. Tiny -> jnp.
    prec = jax.lax.Precision.HIGHEST
    a = action.reshape(B, 1)
    a = jnp.maximum(jnp.dot(a, prep["afc1_w"], precision=prec)
                    + prep["afc1_b"], 0.0)
    a = jnp.maximum(jnp.dot(a, prep["afc2_w"], precision=prec)
                    + prep["afc2_b"], 0.0)

    # concat + fused fc1/fc2/fc3 (ReLU on all of them, as in the reference)
    x = jnp.concatenate([state_flat, a], axis=1)                # (B, 10432)
    return mlp_head(x, prep)                                    # (B, 1)


# ----------------------------------------------------------------------------
# Pure-JAX reference for correctness checking (uses the raw PyTorch-layout
# parameters, NCHW flatten order -- matches the original nn.Module exactly).
# ----------------------------------------------------------------------------
def reference_forward(p, state, action):
    prec = jax.lax.Precision.HIGHEST
    dn = ("NCHW", "OIHW", "NCHW")
    h = jax.lax.conv_general_dilated(state, p["conv1_w"], (4, 4), "VALID",
                                     dimension_numbers=dn, precision=prec)
    h = jnp.maximum(h + p["conv1_b"][None, :, None, None], 0.0)
    h = jax.lax.conv_general_dilated(h, p["conv2_w"], (1, 1), "VALID",
                                     dimension_numbers=dn, precision=prec)
    h = jnp.maximum(h + p["conv2_b"][None, :, None, None], 0.0)
    s = h.reshape(h.shape[0], -1)
    a = action.reshape(-1, 1)
    a = jnp.maximum(jnp.dot(a, p["afc1_w"], precision=prec) + p["afc1_b"], 0.0)
    a = jnp.maximum(jnp.dot(a, p["afc2_w"], precision=prec) + p["afc2_b"], 0.0)
    x = jnp.concatenate([s, a], axis=1)
    x = jnp.maximum(jnp.dot(x, p["fc1_w"], precision=prec) + p["fc1_b"], 0.0)
    x = jnp.maximum(jnp.dot(x, p["fc2_w"], precision=prec) + p["fc2_b"], 0.0)
    x = jnp.maximum(jnp.dot(x, p["fc3_w"], precision=prec) + p["fc3_b"], 0.0)
    return x


# ----------------------------------------------------------------------------
# Deterministic parameter init
# ----------------------------------------------------------------------------
def init_params(key, output=2):
    bit_num = get_bit_num(output)  # = 1 for output=2 (action is (B,))

    def uni(k, shape, fan_in):
        bound = 1.0 / float(fan_in) ** 0.5
        return jax.random.uniform(k, shape, jnp.float32, -bound, bound)

    ks = jax.random.split(key, 14)
    return {
        "conv1_w": uni(ks[0], (32, 4, 8, 8), 4 * 8 * 8),
        "conv1_b": uni(ks[1], (32,), 4 * 8 * 8),
        "conv2_w": uni(ks[2], (32, 32, 3, 3), 32 * 3 * 3),
        "conv2_b": uni(ks[3], (32,), 32 * 3 * 3),
        "afc1_w": uni(ks[4], (bit_num, 64), bit_num),
        "afc1_b": uni(ks[5], (64,), bit_num),
        "afc2_w": uni(ks[6], (64, 64), 64),
        "afc2_b": uni(ks[7], (64,), 64),
        "fc1_w": uni(ks[8], (18 * 18 * 32 + 64, 400), 18 * 18 * 32 + 64),
        "fc1_b": uni(ks[9], (400,), 18 * 18 * 32 + 64),
        "fc2_w": uni(ks[10], (400, 300), 400),
        "fc2_b": uni(ks[11], (300,), 400),
        "fc3_w": uni(ks[12], (300, 1), 300),
        "fc3_b": uni(ks[13], (1,), 300),
    }


if __name__ == "__main__":
    key = jax.random.PRNGKey(0)
    kp, ks, ka = jax.random.split(key, 3)

    # fc1 expects 18*18*32 conv features => state must be (B, 4, 84, 84)
    B = 2
    params = init_params(kp, output=2)
    prep = prepare_params(params)          # one-time weight reorder / padding
    state = jax.random.uniform(ks, (B, 4, 84, 84), jnp.float32)
    action = jax.random.uniform(ka, (B,), jnp.float32, -1.0, 1.0)

    out = jax.jit(critic_forward)(prep, state, action)
    out = jax.block_until_ready(out)
    assert out.shape == (B, 1), out.shape

    ref = reference_forward(params, state, action)
    assert jnp.allclose(out, ref, rtol=1e-3, atol=1e-3), (out, ref)

    print("KERNEL_OK")
</pallas_src>

<mosaic_0001>
module attributes {stable_mosaic.version = 11 : i64} {
  func.func @_conv_matmul_kernel(%arg0: i32, %arg1: memref<400x256xf32, #tpu.memory_space<vmem>>, %arg2: memref<256x32xf32, #tpu.memory_space<vmem>>, %arg3: memref<1x32xf32, #tpu.memory_space<vmem>>, %arg4: memref<400x32xf32, #tpu.memory_space<vmem>>) attributes {dimension_semantics = [#tpu.dimension_semantics<parallel>], iteration_bounds = array<i64: 2>, scalar_prefetch = 0 : i64, scratch_operands = 0 : i64, tpu.core_type = #tpu.core_type<tc>, window_params = [{transform_indices = @transform_0, window_bounds = array<i64: 400, 256>}, {pipeline_mode = #tpu.pipeline_mode<synchronous>, transform_indices = @transform_1, window_bounds = array<i64: 256, 32>}, {pipeline_mode = #tpu.pipeline_mode<synchronous>, transform_indices = @transform_2, window_bounds = array<i64: 1, 32>}, {transform_indices = @transform_3, window_bounds = array<i64: 400, 32>}]} {
    %c0 = arith.constant 0 : index
    %c0_0 = arith.constant 0 : index
    %0 = vector.load %arg1[%c0, %c0_0] : memref<400x256xf32, #tpu.memory_space<vmem>>, vector<400x256xf32>
    %c0_1 = arith.constant 0 : index
    %c0_2 = arith.constant 0 : index
    %1 = vector.load %arg2[%c0_1, %c0_2] : memref<256x32xf32, #tpu.memory_space<vmem>>, vector<256x32xf32>
    %cst = arith.constant dense<0.000000e+00> : vector<400x32xf32>
    %2 = tpu.matmul %0, %1, %cst {dimension_numbers = #tpu.dot_dimension_numbers<[1], [0], [0], [1], [0, 0, 1, 1], [], []>} : vector<400x256xf32>, vector<256x32xf32>, vector<400x32xf32> -> vector<400x32xf32>
    %c0_3 = arith.constant 0 : index
    %c0_4 = arith.constant 0 : index
    %3 = vector.load %arg3[%c0_3, %c0_4] : memref<1x32xf32, #tpu.memory_space<vmem>>, vector<1x32xf32>
    %4 = vector.broadcast %3 : vector<1x32xf32> to vector<400x32xf32>
    %5 = arith.addf %2, %4 : vector<400x32xf32>
    %cst_5 = arith.constant 0.000000e+00 : f32
    %6 = vector.broadcast %cst_5 : f32 to vector<400x32xf32>
    %7 = arith.maximumf %5, %6 : vector<400x32xf32>
    %c0_6 = arith.constant 0 : index
    %c0_7 = arith.constant 0 : index
    %8 = vector.load %arg4[%c0_6, %c0_7] : memref<400x32xf32, #tpu.memory_space<vmem>>, vector<400x32xf32>
    tpu.vector_store %arg4[%c0_6, %c0_7], %7 {strides = array<i32>} : memref<400x32xf32, #tpu.memory_space<vmem>>, vector<400x32xf32>,
    return
  }
  func.func @transform_0(%arg0: i32) -> (i32, i32) {
    %c0_i32 = arith.constant 0 : i32
    %c0_i32_0 = arith.constant 0 : i32
    return %arg0, %c0_i32 : i32, i32
  }
  func.func @transform_1(%arg0: i32) -> (i32, i32) {
    %c0_i32 = arith.constant 0 : i32
    %c0_i32_0 = arith.constant 0 : i32
    %c0_i32_1 = arith.constant 0 : i32
    return %c0_i32, %c0_i32_0 : i32, i32
  }
  func.func @transform_2(%arg0: i32) -> (i32, i32) {
    %c0_i32 = arith.constant 0 : i32
    %c0_i32_0 = arith.constant 0 : i32
    %c0_i32_1 = arith.constant 0 : i32
    return %c0_i32, %c0_i32_0 : i32, i32
  }
  func.func @transform_3(%arg0: i32) -> (i32, i32) {
    %c0_i32 = arith.constant 0 : i32
    %c0_i32_0 = arith.constant 0 : i32
    return %arg0, %c0_i32 : i32, i32
  }
}

module attributes {stable_mosaic.version = 11 : i64} {
  func.func @_conv_matmul_kernel(%arg0: i32, %arg1: memref<328x288xf32, #tpu.memory_space<vmem>>, %arg2: memref<288x32xf32, #tpu.memory_space<vmem>>, %arg3: memref<1x32xf32, #tpu.memory_space<vmem>>, %arg4: memref<328x32xf32, #tpu.memory_space<vmem>>) attributes {dimension_semantics = [#tpu.dimension_semantics<parallel>], iteration_bounds = array<i64: 2>, scalar_prefetch = 0 : i64, scratch_operands = 0 : i64, tpu.core_type = #tpu.core_type<tc>, window_params = [{transform_indices = @transform_0, window_bounds = array<i64: 328, 288>}, {pipeline_mode = #tpu.pipeline_mode<synchronous>, transform_indices = @transform_1, window_bounds = array<i64: 288, 32>}, {pipeline_mode = #tpu.pipeline_mode<synchronous>, transform_indices = @transform_2, window_bounds = array<i64: 1, 32>}, {transform_indices = @transform_3, window_bounds = array<i64: 328, 32>}]} {
    %c0 = arith.constant 0 : index
    %c0_0 = arith.constant 0 : index
    %0 = vector.load %arg1[%c0, %c0_0] : memref<328x288xf32, #tpu.memory_space<vmem>>, vector<328x288xf32>
    %c0_1 = arith.constant 0 : index
    %c0_2 = arith.constant 0 : index
    %1 = vector.load %arg2[%c0_1, %c0_2] : memref<288x32xf32, #tpu.memory_space<vmem>>, vector<288x32xf32>
    %cst = arith.constant dense<0.000000e+00> : vector<328x32xf32>
    %2 = tpu.matmul %0, %1, %cst {dimension_numbers = #tpu.dot_dimension_numbers<[1], [0], [0], [1], [0, 0, 1, 1], [], []>} : vector<328x288xf32>, vector<288x32xf32>, vector<328x32xf32> -> vector<328x32xf32>
    %c0_3 = arith.constant 0 : index
    %c0_4 = arith.constant 0 : index
    %3 = vector.load %arg3[%c0_3, %c0_4] : memref<1x32xf32, #tpu.memory_space<vmem>>, vector<1x32xf32>
    %4 = vector.broadcast %3 : vector<1x32xf32> to vector<328x32xf32>
    %5 = arith.addf %2, %4 : vector<328x32xf32>
    %cst_5 = arith.constant 0.000000e+00 : f32
    %6 = vector.broadcast %cst_5 : f32 to vector<328x32xf32>
    %7 = arith.maximumf %5, %6 : vector<328x32xf32>
    %c0_6 = arith.constant 0 : index
    %c0_7 = arith.constant 0 : index
    %8 = vector.load %arg4[%c0_6, %c0_7] : memref<328x32xf32, #tpu.memory_space<vmem>>, vector<328x32xf32>
    tpu.vector_store %arg4[%c0_6, %c0_7], %7 {strides = array<i32>} : memref<328x32xf32, #tpu.memory_space<vmem>>, vector<328x32xf32>,
    return
  }
  func.func @transform_0(%arg0: i32) -> (i32, i32) {
    %c0_i32 = arith.constant 0 : i32
    %c0_i32_0 = arith.constant 0 : i32
    return %arg0, %c0_i32 : i32, i32
  }
  func.func @transform_1(%arg0: i32) -> (i32, i32) {
    %c0_i32 = arith.constant 0 : i32
    %c0_i32_0 = arith.constant 0 : i32
    %c0_i32_1 = arith.constant 0 : i32
    return %c0_i32, %c0_i32_0 : i32, i32
  }
  func.func @transform_2(%arg0: i32) -> (i32, i32) {
    %c0_i32 = arith.constant 0 : i32
    %c0_i32_0 = arith.constant 0 : i32
    %c0_i32_1 = arith.constant 0 : i32
    return %c0_i32, %c0_i32_0 : i32, i32
  }
  func.func @transform_3(%arg0: i32) -> (i32, i32) {
    %c0_i32 = arith.constant 0 : i32
    %c0_i32_0 = arith.constant 0 : i32
    return %arg0, %c0_i32 : i32, i32
  }
}

module attributes {stable_mosaic.version = 11 : i64} {
  func.func @_mlp_head_kernel(%arg0: i32, %arg1: memref<8x1536xf32, #tpu.memory_space<vmem>>, %arg2: memref<1536x400xf32, #tpu.memory_space<vmem>>, %arg3: memref<1x400xf32, #tpu.memory_space<vmem>>, %arg4: memref<400x300xf32, #tpu.memory_space<vmem>>, %arg5: memref<1x300xf32, #tpu.memory_space<vmem>>, %arg6: memref<300x128xf32, #tpu.memory_space<vmem>>, %arg7: memref<1x128xf32, #tpu.memory_space<vmem>>, %arg8: memref<8x128xf32, #tpu.memory_space<vmem>>, %arg9: memref<8x400xf32, #tpu.memory_space<vmem>>) attributes {dimension_semantics = [#tpu.dimension_semantics<arbitrary>], iteration_bounds = array<i64: 7>, scalar_prefetch = 0 : i64, scratch_operands = 1 : i64, tpu.core_type = #tpu.core_type<tc>, window_params = [{transform_indices = @transform_0, window_bounds = array<i64: 8, 1536>}, {transform_indices = @transform_1, window_bounds = array<i64: 1536, 400>}, {pipeline_mode = #tpu.pipeline_mode<synchronous>, transform_indices = @transform_2, window_bounds = array<i64: 1, 400>}, {pipeline_mode = #tpu.pipeline_mode<synchronous>, transform_indices = @transform_3, window_bounds = array<i64: 400, 300>}, {pipeline_mode = #tpu.pipeline_mode<synchronous>, transform_indices = @transform_4, window_bounds = array<i64: 1, 300>}, {pipeline_mode = #tpu.pipeline_mode<synchronous>, transform_indices = @transform_5, window_bounds = array<i64: 300, 128>}, {pipeline_mode = #tpu.pipeline_mode<synchronous>, transform_indices = @transform_6, window_bounds = array<i64: 1, 128>}, {pipeline_mode = #tpu.pipeline_mode<synchronous>, transform_indices = @transform_7, window_bounds = array<i64: 8, 128>}]} {
    %c0_i32 = arith.constant 0 : i32
    %0 = arith.cmpi eq, %arg0, %c0_i32 : i32
    %1 = arith.extui %0 : i1 to i32
    %c0_i32_0 = arith.constant 0 : i32
    %2 = arith.cmpi ne, %1, %c0_i32_0 : i32
    scf.if %2 {
      %cst_9 = arith.constant 0.000000e+00 : f32
      %12 = vector.broadcast %cst_9 : f32 to vector<8x400xf32>
      %c0_10 = arith.constant 0 : index
      %c0_11 = arith.constant 0 : index
      %13 = vector.load %arg9[%c0_10, %c0_11] : memref<8x400xf32, #tpu.memory_space<vmem>>, vector<8x400xf32>
      tpu.vector_store %arg9[%c0_10, %c0_11], %12 {strides = array<i32>} : memref<8x400xf32, #tpu.memory_space<vmem>>, vector<8x400xf32>,
    } else {
    }
    %c0 = arith.constant 0 : index
    %c0_1 = arith.constant 0 : index
    %3 = vector.load %arg9[%c0, %c0_1] : memref<8x400xf32, #tpu.memory_space<vmem>>, vector<8x400xf32>
    %c0_2 = arith.constant 0 : index
    %c0_3 = arith.constant 0 : index
    %4 = vector.load %arg1[%c0_2, %c0_3] : memref<8x1536xf32, #tpu.memory_space<vmem>>, vector<8x1536xf32>
    %c0_4 = arith.constant 0 : index
    %c0_5 = arith.constant 0 : index
    %5 = vector.load %arg2[%c0_4, %c0_5] : memref<1536x400xf32, #tpu.memory_space<vmem>>, vector<1536x400xf32>
    %cst = arith.constant dense<0.000000e+00> : vector<8x400xf32>
    %6 = tpu.matmul %4, %5, %cst {dimension_numbers = #tpu.dot_dimension_numbers<[1], [0], [0], [1], [0, 0, 1, 1], [], []>} : vector<8x1536xf32>, vector<1536x400xf32>, vector<8x400xf32> -> vector<8x400xf32>
    %7 = arith.addf %3, %6 : vector<8x400xf32>
    %c0_6 = arith.constant 0 : index
    %c0_7 = arith.constant 0 : index
    %8 = vector.load %arg9[%c0_6, %c0_7] : memref<8x400xf32, #tpu.memory_space<vmem>>, vector<8x400xf32>
    tpu.vector_store %arg9[%c0_6, %c0_7], %7 {strides = array<i32>} : memref<8x400xf32, #tpu.memory_space<vmem>>, vector<8x400xf32>,
    %c6_i32 = arith.constant 6 : i32
    %9 = arith.cmpi eq, %arg0, %c6_i32 : i32
    %10 = arith.extui %9 : i1 to i32
    %c0_i32_8 = arith.constant 0 : i32
    %11 = arith.cmpi ne, %10, %c0_i32_8 : i32
    scf.if %11 {
      %c0_9 = arith.constant 0 : index
      %c0_10 = arith.constant 0 : index
      %12 = vector.load %arg9[%c0_9, %c0_10] : memref<8x400xf32, #tpu.memory_space<vmem>>, vector<8x400xf32>
      %c0_11 = arith.constant 0 : index
      %c0_12 = arith.constant 0 : index
      %13 = vector.load %arg3[%c0_11, %c0_12] : memref<1x400xf32, #tpu.memory_space<vmem>>, vector<1x400xf32>
      %14 = vector.broadcast %13 : vector<1x400xf32> to vector<8x400xf32>
      %15 = arith.addf %12, %14 : vector<8x400xf32>
      %cst_13 = arith.constant 0.000000e+00 : f32
      %16 = vector.broadcast %cst_13 : f32 to vector<8x400xf32>
      %17 = arith.maximumf %15, %16 : vector<8x400xf32>
      %c0_14 = arith.constant 0 : index
      %c0_15 = arith.constant 0 : index
      %18 = vector.load %arg4[%c0_14, %c0_15] : memref<400x300xf32, #tpu.memory_space<vmem>>, vector<400x300xf32>
      %cst_16 = arith.constant dense<0.000000e+00> : vector<8x300xf32>
      %19 = tpu.matmul %17, %18, %cst_16 {dimension_numbers = #tpu.dot_dimension_numbers<[1], [0], [0], [1], [0, 0, 1, 1], [], []>} : vector<8x400xf32>, vector<400x300xf32>, vector<8x300xf32> -> vector<8x300xf32>
      %c0_17 = arith.constant 0 : index
      %c0_18 = arith.constant 0 : index
      %20 = vector.load %arg5[%c0_17, %c0_18] : memref<1x300xf32, #tpu.memory_space<vmem>>, vector<1x300xf32>
      %21 = vector.broadcast %20 : vector<1x300xf32> to vector<8x300xf32>
      %22 = arith.addf %19, %21 : vector<8x300xf32>
      %cst_19 = arith.constant 0.000000e+00 : f32
      %23 = vector.broadcast %cst_19 : f32 to vector<8x300xf32>
      %24 = arith.maximumf %22, %23 : vector<8x300xf32>
      %c0_20 = arith.constant 0 : index
      %c0_21 = arith.constant 0 : index
      %25 = vector.load %arg6[%c0_20, %c0_21] : memref<300x128xf32, #tpu.memory_space<vmem>>, vector<300x128xf32>
      %cst_22 = arith.constant dense<0.000000e+00> : vector<8x128xf32>
      %26 = tpu.matmul %24, %25, %cst_22 {dimension_numbers = #tpu.dot_dimension_numbers<[1], [0], [0], [1], [0, 0, 1, 1], [], []>} : vector<8x300xf32>, vector<300x128xf32>, vector<8x128xf32> -> vector<8x128xf32>
      %c0_23 = arith.constant 0 : index
      %c0_24 = arith.constant 0 : index
      %27 = vector.load %arg7[%c0_23, %c0_24] : memref<1x128xf32, #tpu.memory_space<vmem>>, vector<1x128xf32>
      %28 = vector.broadcast %27 : vector<1x128xf32> to vector<8x128xf32>
      %29 = arith.addf %26, %28 : vector<8x128xf32>
      %cst_25 = arith.constant 0.000000e+00 : f32
      %30 = vector.broadcast %cst_25 : f32 to vector<8x128xf32>
      %31 = arith.maximumf %29, %30 : vector<8x128xf32>
      %c0_26 = arith.constant 0 : index
      %c0_27 = arith.constant 0 : index
      %32 = vector.load %arg8[%c0_26, %c0_27] : memref<8x128xf32, #tpu.memory_space<vmem>>, vector<8x128xf32>
      tpu.vector_store %arg8[%c0_26, %c0_27], %31 {strides = array<i32>} : memref<8x128xf32, #tpu.memory_space<vmem>>, vector<8x128xf32>,
    } else {
    }
    return
  }
  func.func @transform_0(%arg0: i32) -> (i32, i32) {
    %c0_i32 = arith.constant 0 : i32
    %c0_i32_0 = arith.constant 0 : i32
    return %c0_i32, %arg0 : i32, i32
  }
  func.func @transform_1(%arg0: i32) -> (i32, i32) {
    %c0_i32 = arith.constant 0 : i32
    %c0_i32_0 = arith.constant 0 : i32
    return %arg0, %c0_i32 : i32, i32
  }
  func.func @transform_2(%arg0: i32) -> (i32, i32) {
    %c0_i32 = arith.constant 0 : i32
    %c0_i32_0 = arith.constant 0 : i32
    %c0_i32_1 = arith.constant 0 : i32
    return %c0_i32, %c0_i32_0 : i32, i32
  }
  func.func @transform_3(%arg0: i32) -> (i32, i32) {
    %c0_i32 = arith.constant 0 : i32
    %c0_i32_0 = arith.constant 0 : i32
    %c0_i32_1 = arith.constant 0 : i32
    return %c0_i32, %c0_i32_0 : i32, i32
  }
  func.func @transform_4(%arg0: i32) -> (i32, i32) {
    %c0_i32 = arith.constant 0 : i32
    %c0_i32_0 = arith.constant 0 : i32
    %c0_i32_1 = arith.constant 0 : i32
    return %c0_i32, %c0_i32_0 : i32, i32
  }
  func.func @transform_5(%arg0: i32) -> (i32, i32) {
    %c0_i32 = arith.constant 0 : i32
    %c0_i32_0 = arith.constant 0 : i32
    %c0_i32_1 = arith.constant 0 : i32
    return %c0_i32, %c0_i32_0 : i32, i32
  }
  func.func @transform_6(%arg0: i32) -> (i32, i32) {
    %c0_i32 = arith.constant 0 : i32
    %c0_i32_0 = arith.constant 0 : i32
    %c0_i32_1 = arith.constant 0 : i32
    return %c0_i32, %c0_i32_0 : i32, i32
  }
  func.func @transform_7(%arg0: i32) -> (i32, i32) {
    %c0_i32 = arith.constant 0 : i32
    %c0_i32_0 = arith.constant 0 : i32
    %c0_i32_1 = arith.constant 0 : i32
    return %c0_i32, %c0_i32_0 : i32, i32
  }
}

</mosaic_0001>

<llo_original>
// kernel: critic_forward.3
$region0: #{critic_forward.3}
  #allocation0 [shape = 'u32[]', space=smem, size = 0x4, offset = 0x4, fixed_abs, tag = 'smem constant byte address 0x4 - core index']
  #allocation1 [shape = 'u32[144,128]{1,0:T(1,128)}', space=vmem, size = 0x12000, scoped, tag = 'internal scratch']
  %s0 = inlined_call_operand.vmem [shape: f32[800,256], index: 0, kind: input, shape index: {}]
  %s1 = inlined_call_operand.vmem [shape: f32[256,32], index: 1, kind: input, shape index: {}]
  %s2 = inlined_call_operand.vmem [shape: f32[1,32], index: 2, kind: input, shape index: {}]
  %s3 = inlined_call_operand.vmem [shape: f32[800,32], index: 3, kind: output, shape index: {}]
  %s4 = sld [smem:[#allocation0]]
  $region45: #{critic_forward.3} parent=0
    _
  %s6 = ssub.s32 1, %s4
  %s7 = scalar_select 0, %s6, %s4
  loop: start=0, step=1, limit=4
  $region2: #{critic_forward.3} parent=0 // loop_pre_header
    _
  $region3: #{critic_forward.3} parent=0 // loop_header
    %s9 = sphi 0, %s13
    %p10 = scmp.ge.s32.totalorder %s9, 4
    %s19 = sphi 0, %s21
    %s22 = sphi 0, %s19
    %s23 = sphi 0, %s22
    %s39 = sphi 0, %s23
    %s43 = sphi 0, %s43
    %s45 = sphi 0, %s43
    %s46 = sphi 0, %s45
    %s60 = sphi 0, %s46
    %s64 = sphi 0, %s64
    %s66 = sphi 0, %s64
    %s67 = sphi 0, %s66
    %s81 = sphi 0, %s67
    %s87 = sphi 0, %s89
    %s90 = sphi 0, %s87
    %s91 = sphi 0, %s90
    %s107 = sphi 0, %s91
  $region4: #{critic_forward.3} parent=0 // loop_header_branch
    %12 = sbr.rel (%p10) target = $region8
  $region5: #{critic_forward.3} parent=0 // loop_body
    %s14 = ssub.s32 %s9, 1
    %s15 = ssub.s32 %s9, 2
    %s16 = sadd.s32 %s9, 1
    %s17 = ssub.s32 %s9, %s16
    %p18 = scmp.eq.s32.totalorder %s17, 0
    %s20 = sadd.s32 %s19, 1
    %s21 = scalar_select %p18, %s19, %s20
    %p24 = pneg %p18
    %p25 = scmp.eq.s32.totalorder %s9, 1
    %p26 = por %p24, %p25
    %p27 = scmp.ne.s32.totalorder %s19, %s22
    %p28 = scmp.eq.s32.totalorder %s9, 0
    %p29 = por %p27, %p28
    %p30 = scmp.ne.s32.totalorder %s19, %s22
    %p31 = scmp.eq.s32.totalorder %s14, 1
    %p32 = por %p30, %p31
    %p33 = scmp.ne.s32.totalorder %s22, %s23
    %p34 = scmp.eq.s32.totalorder %s14, 0
    %p35 = por %p33, %p34
    %p36 = scmp.ne.s32.totalorder %s22, %s23
    %p37 = scmp.eq.s32.totalorder %s15, 1
    %p38 = por %p36, %p37
    %p40 = scmp.ne.s32.totalorder %s23, %s39
    %p41 = scmp.eq.s32.totalorder %s15, 0
    %p42 = por %p40, %p41
    %s44 = sadd.s32 %s43, 1
    %p47 = scmp.eq.s32.totalorder %s9, 1
    %p48 = scmp.ne.s32.totalorder %s43, %s45
    %p49 = scmp.eq.s32.totalorder %s9, 0
    %p50 = por %p48, %p49
    %p51 = scmp.ne.s32.totalorder %s43, %s45
    %p52 = scmp.eq.s32.totalorder %s14, 1
    %p53 = por %p51, %p52
    %p54 = scmp.ne.s32.totalorder %s45, %s46
    %p55 = scmp.eq.s32.totalorder %s14, 0
    %p56 = por %p54, %p55
    %p57 = scmp.ne.s32.totalorder %s45, %s46
    %p58 = scmp.eq.s32.totalorder %s15, 1
    %p59 = por %p57, %p58
    %p61 = scmp.ne.s32.totalorder %s46, %s60
    %p62 = scmp.eq.s32.totalorder %s15, 0
    %p63 = por %p61, %p62
    %s65 = sadd.s32 %s64, 1
    %p68 = scmp.eq.s32.totalorder %s9, 1
    %p69 = scmp.ne.s32.totalorder %s64, %s66
    %p70 = scmp.eq.s32.totalorder %s9, 0
    %p71 = por %p69, %p70
    %p72 = scmp.ne.s32.totalorder %s64, %s66
    %p73 = scmp.eq.s32.totalorder %s14, 1
    %p74 = por %p72, %p73
    %p75 = scmp.ne.s32.totalorder %s66, %s67
    %p76 = scmp.eq.s32.totalorder %s14, 0
    %p77 = por %p75, %p76
    %p78 = scmp.ne.s32.totalorder %s66, %s67
    %p79 = scmp.eq.s32.totalorder %s15, 1
    %p80 = por %p78, %p79
    %p82 = scmp.ne.s32.totalorder %s67, %s81
    %p83 = scmp.eq.s32.totalorder %s15, 0
    %p84 = por %p82, %p83
    %s85 = ssub.s32 %s9, %s16
    %p86 = scmp.eq.s32.totalorder %s85, 0
    %s88 = sadd.s32 %s87, 1
    %s89 = scalar_select %p86, %s87, %s88
    %p92 = pneg %p86
    %p93 = scmp.eq.s32.totalorder %s9, 1
    %p94 = por %p92, %p93
    %p95 = scmp.ne.s32.totalorder %s87, %s90
    %p96 = scmp.eq.s32.totalorder %s9, 0
    %p97 = por %p95, %p96
    %p98 = scmp.ne.s32.totalorder %s87, %s90
    %p99 = scmp.eq.s32.totalorder %s14, 1
    %p100 = por %p98, %p99
    %p101 = scmp.ne.s32.totalorder %s90, %s91
    %p102 = scmp.eq.s32.totalorder %s14, 0
    %p103 = por %p101, %p102
    %p104 = scmp.ne.s32.totalorder %s90, %s91
    %p105 = scmp.eq.s32.totalorder %s15, 1
    %p106 = por %p104, %p105
    %p108 = scmp.ne.s32.totalorder %s91, %s107
    %p109 = scmp.eq.s32.totalorder %s15, 0
    %p110 = por %p108, %p109
    %p111 = scmp.le.s32.totalorder 1, %s9
    %p112 = scmp.lt.s32.totalorder %s9, 3
    %p113 = pnand %p111, %p112
    %p114 = pneg %p113
    // Predicated region
    $region9: #{critic_forward.3} parent=5 // pred_check
      _
    $region10: #{critic_forward.3} parent=5 // pred_check_branch
      %116 = sbr.rel (%p113) target = $region12
    $region11: #{critic_forward.3} parent=5 // pred_region
      %s117 = ssub.s32 %s9, 1
      // Predicated region
      $region13: #{critic_forward.3} parent=11 // pred_check
        %p118 = pneg %p56
      $region14: #{critic_forward.3} parent=11 // pred_check_branch
        %120 = sbr.rel (%p118) target = $region16
      $region15: #{critic_forward.3} parent=11 // pred_region
        _
      $region16: #{critic_forward.3} parent=11 // pred_fallthru
        _
      // Predicated region
      $region17: #{critic_forward.3} parent=11 // pred_check
        %p121 = pneg %p77
      $region18: #{critic_forward.3} parent=11 // pred_check_branch
        %123 = sbr.rel (%p121) target = $region20
      $region19: #{critic_forward.3} parent=11 // pred_region
        _
      $region20: #{critic_forward.3} parent=11 // pred_fallthru
        _
    $region12: #{critic_forward.3} parent=5 // pred_fallthru
      _
    %p124 = scmp.lt.s32.totalorder %s9, 2
    // Predicated region
    $region21: #{critic_forward.3} parent=5 // pred_check
      %p125 = pneg %p124
    $region22: #{critic_forward.3} parent=5 // pred_check_branch
      %127 = sbr.rel (%p125) target = $region24
    $region23: #{critic_forward.3} parent=5 // pred_region
      // Predicated region
      $region25: #{critic_forward.3} parent=23 // pred_check
        %p128 = pneg %p29
      $region26: #{critic_forward.3} parent=23 // pred_check_branch
        %130 = sbr.rel (%p128) target = $region28
      $region27: #{critic_forward.3} parent=23 // pred_region
        %s131 = smul.u32 50, %s9
        %p132 = scmp.lt.s32.totalorder %s131, 99
        %s133 = scalar_select %p132, %s131, 99
        %s134 = smul.addr %s133, 2
        %s135 = smul.addr %s134, 8
        %s136 = scalar_lea.vmem %s0, %s135
        %s137 = smul.u32 50, %s9
      $region28: #{critic_forward.3} parent=23 // pred_fallthru
        _
    $region24: #{critic_forward.3} parent=5 // pred_fallthru
      _
    %p138 = scmp.le.s32.totalorder 1, %s9
    %p139 = scmp.lt.s32.totalorder %s9, 3
    %p140 = pnand %p138, %p139
    %p141 = pneg %p140
    // Predicated region
    $region29: #{critic_forward.3} parent=5 // pred_check
      _
    $region30: #{critic_forward.3} parent=5 // pred_check_branch
      %143 = sbr.rel (%p140) target = $region32
    $region31: #{critic_forward.3} parent=5 // pred_region
      %s144 = ssub.s32 %s9, 1
      %s145 = smul.u32 50, %s14
      %p146 = scmp.lt.s32.totalorder %s145, 99
      %s147 = scalar_select %p146, %s145, 99
      %s148 = smul.addr %s147, 2
      %s149 = smul.addr %s148, 8
      %s150 = scalar_lea.vmem %s0, %s149
      %p151 = pneg %p35
      %p152 = pneg %p32
      %p153 = pneg %p56
      %p154 = pneg %p53
      %p155 = pneg %p77
      %p156 = pneg %p74
      %p157 = pneg %p103
      %p158 = pneg %p100
      %s159 = smul.u32 50, %s14
      %p160 = scmp.lt.s32.totalorder %s159, 99
      %s161 = scalar_select %p160, %s159, 99
      %s162 = smul.addr %s161, 8
      %s163 = scalar_lea.vmem %s3, %s162
      %s164 = smul.u32 50, %s14
      %p165 = scmp.lt.s32.totalorder %s164, 99
      %s166 = scalar_select %p165, %s164, 99
      %s167 = smul.addr %s166, 2
      %s168 = smul.addr %s167, 8
      %s169 = scalar_lea.vmem %s0, %s168
      %s170 = smul.u32 50, %s14
      %s171 = smul.u32 50, %s14
      %p172 = scmp.lt.s32.totalorder %s171, 99
      %s173 = scalar_select %p172, %s171, 99
      %s174 = smul.addr %s173, 8
      %s175 = scalar_lea.vmem %s3, %s174
      %s176 = smul.u32 50, %s14
      %v177 = vld [vmem:[%s169] sm:$0xff]
      %v178 = vld [vmem:[%s169 + $0x8] sm:$0xff]
      %v179 = vld [vmem:[%s169 + $0x10] sm:$0xff]
      %v180 = vld [vmem:[%s169 + $0x18] sm:$0xff]
      %v181 = vld [vmem:[%s169 + $0x20] sm:$0xff]
      %v182 = vld [vmem:[%s169 + $0x28] sm:$0xff]
      %v183 = vld [vmem:[%s169 + $0x30] sm:$0xff]
      %v184 = vld [vmem:[%s169 + $0x38] sm:$0xff]
      %v185 = vld [vmem:[%s169 + $0x40] sm:$0xff]
      %v186 = vld [vmem:[%s169 + $0x48] sm:$0xff]
      %v187 = vld [vmem:[%s169 + $0x50] sm:$0xff]
      %v188 = vld [vmem:[%s169 + $0x58] sm:$0xff]
      %v189 = vld [vmem:[%s169 + $0x60] sm:$0xff]
      %v190 = vld [vmem:[%s169 + $0x68] sm:$0xff]
      %v191 = vld [vmem:[%s169 + $0x70] sm:$0xff]
      %v192 = vld [vmem:[%s169 + $0x78] sm:$0xff]
      %v193 = vld [vmem:[%s169 + $0x80] sm:$0xff]
      %v194 = vld [vmem:[%s169 + $0x88] sm:$0xff]
      %v195 = vld [vmem:[%s169 + $0x90] sm:$0xff]
      %v196 = vld [vmem:[%s169 + $0x98] sm:$0xff]
      %v197 = vld [vmem:[%s169 + $0xa0] sm:$0xff]
      %v198 = vld [vmem:[%s169 + $0xa8] sm:$0xff]
      %v199 = vld [vmem:[%s169 + $0xb0] sm:$0xff]
      %v200 = vld [vmem:[%s169 + $0xb8] sm:$0xff]
      %v201 = vld [vmem:[%s169 + $0xc0] sm:$0xff]
      %v202 = vld [vmem:[%s169 + $0xc8] sm:$0xff]
      %v203 = vld [vmem:[%s169 + $0xd0] sm:$0xff]
      %v204 = vld [vmem:[%s169 + $0xd8] sm:$0xff]
      %v205 = vld [vmem:[%s169 + $0xe0] sm:$0xff]
      %v206 = vld [vmem:[%s169 + $0xe8] sm:$0xff]
      %v207 = vld [vmem:[%s169 + $0xf0] sm:$0xff]
      %v208 = vld [vmem:[%s169 + $0xf8] sm:$0xff]
      %v209 = vld [vmem:[%s169 + $0x100] sm:$0xff]
      %v210 = vld [vmem:[%s169 + $0x108] sm:$0xff]
      %v211 = vld [vmem:[%s169 + $0x110] sm:$0xff]
      %v212 = vld [vmem:[%s169 + $0x118] sm:$0xff]
      %v213 = vld [vmem:[%s169 + $0x120] sm:$0xff]
      %v214 = vld [vmem:[%s169 + $0x128] sm:$0xff]
      %v215 = vld [vmem:[%s169 + $0x130] sm:$0xff]
      %v216 = vld [vmem:[%s169 + $0x138] sm:$0xff]
      %v217 = vld [vmem:[%s169 + $0x140] sm:$0xff]
      %v218 = vld [vmem:[%s169 + $0x148] sm:$0xff]
      %v219 = vld [vmem:[%s169 + $0x150] sm:$0xff]
      %v220 = vld [vmem:[%s169 + $0x158] sm:$0xff]
      %v221 = vld [vmem:[%s169 + $0x160] sm:$0xff]
      %v222 = vld [vmem:[%s169 + $0x168] sm:$0xff]
      %v223 = vld [vmem:[%s169 + $0x170] sm:$0xff]
      %v224 = vld [vmem:[%s169 + $0x178] sm:$0xff]
      %v225 = vld [vmem:[%s169 + $0x180] sm:$0xff]
      %v226 = vld [vmem:[%s169 + $0x188] sm:$0xff]
      %v227 = vld [vmem:[%s169 + $0x190] sm:$0xff]
      %v228 = vld [vmem:[%s169 + $0x198] sm:$0xff]
      %v229 = vld [vmem:[%s169 + $0x1a0] sm:$0xff]
      %v230 = vld [vmem:[%s169 + $0x1a8] sm:$0xff]
      %v231 = vld [vmem:[%s169 + $0x1b0] sm:$0xff]
      %v232 = vld [vmem:[%s169 + $0x1b8] sm:$0xff]
      %v233 = vld [vmem:[%s169 + $0x1c0] sm:$0xff]
      %v234 = vld [vmem:[%s169 + $0x1c8] sm:$0xff]
      %v235 = vld [vmem:[%s169 + $0x1d0] sm:$0xff]
      %v236 = vld [vmem:[%s169 + $0x1d8] sm:$0xff]
      %v237 = vld [vmem:[%s169 + $0x1e0] sm:$0xff]
      %v238 = vld [vmem:[%s169 + $0x1e8] sm:$0xff]
      %v239 = vld [vmem:[%s169 + $0x1f0] sm:$0xff]
      %v240 = vld [vmem:[%s169 + $0x1f8] sm:$0xff]
      %v241 = vld [vmem:[%s169 + $0x200] sm:$0xff]
      %v242 = vld [vmem:[%s169 + $0x208] sm:$0xff]
      %v243 = vld [vmem:[%s169 + $0x210] sm:$0xff]
      %v244 = vld [vmem:[%s169 + $0x218] sm:$0xff]
      %v245 = vld [vmem:[%s169 + $0x220] sm:$0xff]
      %v246 = vld [vmem:[%s169 + $0x228] sm:$0xff]
      %v247 = vld [vmem:[%s169 + $0x230] sm:$0xff]
      %v248 = vld [vmem:[%s169 + $0x238] sm:$0xff]
      %v249 = vld [vmem:[%s169 + $0x240] sm:$0xff]
      %v250 = vld [vmem:[%s169 + $0x248] sm:$0xff]
      %v251 = vld [vmem:[%s169 + $0x250] sm:$0xff]
      %v252 = vld [vmem:[%s169 + $0x258] sm:$0xff]
      %v253 = vld [vmem:[%s169 + $0x260] sm:$0xff]
      %v254 = vld [vmem:[%s169 + $0x268] sm:$0xff]
      %v255 = vld [vmem:[%s169 + $0x270] sm:$0xff]
      %v256 = vld [vmem:[%s169 + $0x278] sm:$0xff]
      %v257 = vld [vmem:[%s169 + $0x280] sm:$0xff]
      %v258 = vld [vmem:[%s169 + $0x288] sm:$0xff]
      %v259 = vld [vmem:[%s169 + $0x290] sm:$0xff]
      %v260 = vld [vmem:[%s169 + $0x298] sm:$0xff]
      %v261 = vld [vmem:[%s169 + $0x2a0] sm:$0xff]
      %v262 = vld [vmem:[%s169 + $0x2a8] sm:$0xff]
      %v263 = vld [vmem:[%s169 + $0x2b0] sm:$0xff]
      %v264 = vld [vmem:[%s169 + $0x2b8] sm:$0xff]
      %v265 = vld [vmem:[%s169 + $0x2c0] sm:$0xff]
      %v266 = vld [vmem:[%s169 + $0x2c8] sm:$0xff]
      %v267 = vld [vmem:[%s169 + $0x2d0] sm:$0xff]
      %v268 = vld [vmem:[%s169 + $0x2d8] sm:$0xff]
      %v269 = vld [vmem:[%s169 + $0x2e0] sm:$0xff]
      %v270 = vld [vmem:[%s169 + $0x2e8] sm:$0xff]
      %v271 = vld [vmem:[%s169 + $0x2f0] sm:$0xff]
      %v272 = vld [vmem:[%s169 + $0x2f8] sm:$0xff]
      %v273 = vld [vmem:[%s169 + $0x300] sm:$0xff]
      %v274 = vld [vmem:[%s169 + $0x308] sm:$0xff]
      %v275 = vld [vmem:[%s169 + $0x310] sm:$0xff]
      %v276 = vld [vmem:[%s169 + $0x318] sm:$0xff]
      %v277 = vld [vmem:[%s1] sm:$0xff]
      %v278 = vld [vmem:[%s1 + $0x8] sm:$0xff]
      %v279 = vld [vmem:[%s1 + $0x10] sm:$0xff]
      %v280 = vld [vmem:[%s1 + $0x18] sm:$0xff]
      %v281 = vld [vmem:[%s1 + $0x20] sm:$0xff]
      %v282 = vld [vmem:[%s1 + $0x28] sm:$0xff]
      %v283 = vld [vmem:[%s1 + $0x30] sm:$0xff]
      %v284 = vld [vmem:[%s1 + $0x38] sm:$0xff]
      %v285 = vld [vmem:[%s1 + $0x40] sm:$0xff]
      %v286 = vld [vmem:[%s1 + $0x48] sm:$0xff]
      %v287 = vld [vmem:[%s1 + $0x50] sm:$0xff]
      %v288 = vld [vmem:[%s1 + $0x58] sm:$0xff]
      %v289 = vld [vmem:[%s1 + $0x60] sm:$0xff]
      %v290 = vld [vmem:[%s1 + $0x68] sm:$0xff]
      %v291 = vld [vmem:[%s1 + $0x70] sm:$0xff]
      %v292 = vld [vmem:[%s1 + $0x78] sm:$0xff]
      %v293 = vld [vmem:[%s1 + $0x80] sm:$0xff]
      %v294 = vld [vmem:[%s1 + $0x88] sm:$0xff]
      %v295 = vld [vmem:[%s1 + $0x90] sm:$0xff]
      %v296 = vld [vmem:[%s1 + $0x98] sm:$0xff]
      %v297 = vld [vmem:[%s1 + $0xa0] sm:$0xff]
      %v298 = vld [vmem:[%s1 + $0xa8] sm:$0xff]
      %v299 = vld [vmem:[%s1 + $0xb0] sm:$0xff]
      %v300 = vld [vmem:[%s1 + $0xb8] sm:$0xff]
      %v301 = vld [vmem:[%s1 + $0xc0] sm:$0xff]
      %v302 = vld [vmem:[%s1 + $0xc8] sm:$0xff]
      %v303 = vld [vmem:[%s1 + $0xd0] sm:$0xff]
      %v304 = vld [vmem:[%s1 + $0xd8] sm:$0xff]
      %v305 = vld [vmem:[%s1 + $0xe0] sm:$0xff]
      %v306 = vld [vmem:[%s1 + $0xe8] sm:$0xff]
      %v307 = vld [vmem:[%s1 + $0xf0] sm:$0xff]
      %v308 = vld [vmem:[%s1 + $0xf8] sm:$0xff]
      %v309 = vld [vmem:[%s2] sm:$0x1]
      %v311 = vlaneseq
      %v312 = vshrl.u32 %v311, 7
      %v313 = vsub.s32 0, %v312
      %v314 = vrot.slane %v309, %v313
      %316 = vmatprep.subr.mxu0 0.0
      %317 = vmatpush1.msra.mxu0 %v277
      %318 = vmatprep.subr.mxu0 0.0
      %319 = vmatpush1.msra.mxu0 %v278
      %320 = vmatprep.subr.mxu0 0.0
      %321 = vmatpush1.msra.mxu0 %v279
      %322 = vmatprep.subr.mxu0 0.0
      %323 = vmatpush1.msra.mxu0 %v280
      %324 = vmatprep.subr.mxu0 0.0
      %325 = vmatpush1.msra.mxu0 %v281
      %326 = vmatprep.subr.mxu0 0.0
      %327 = vmatpush1.msra.mxu0 %v282
      %328 = vmatprep.subr.mxu0 0.0
      %329 = vmatpush1.msra.mxu0 %v283
      %330 = vmatprep.subr.mxu0 0.0
      %331 = vmatpush1.msra.mxu0 %v284
      %332 = vmatprep.subr.mxu0 0.0
      %333 = vmatpush1.msra.mxu0 %v285
      %334 = vmatprep.subr.mxu0 0.0
      %335 = vmatpush1.msra.mxu0 %v286
      %336 = vmatprep.subr.mxu0 0.0
      %337 = vmatpush1.msra.mxu0 %v287
      %338 = vmatprep.subr.mxu0 0.0
      %339 = vmatpush1.msra.mxu0 %v288
      %340 = vmatprep.subr.mxu0 0.0
      %341 = vmatpush1.msra.mxu0 %v289
      %342 = vmatprep.subr.mxu0 0.0
      %343 = vmatpush1.msra.mxu0 %v290
      %344 = vmatprep.subr.mxu0 0.0
      %345 = vmatpush1.msra.mxu0 %v291
      %346 = vmatprep.subr.mxu0 0.0
      %347 = vmatpush1.msra.mxu0 %v292
      %348 = vmatprep.subr.mxu0 0.0
      %349 = vmatpush1.msra.mxu0 %v293
      %350 = vmatprep.subr.mxu0 0.0
      %351 = vmatpush1.msra.mxu0 %v294
      %352 = vmatprep.subr.mxu0 0.0
      %353 = vmatpush1.msra.mxu0 %v295
      %354 = vmatprep.subr.mxu0 0.0
      %355 = vmatpush1.msra.mxu0 %v296
      %356 = vmatprep.subr.mxu0 0.0
      %357 = vmatpush1.msra.mxu0 %v297
      %358 = vmatprep.subr.mxu0 0.0
      %359 = vmatpush1.msra.mxu0 %v298
      %360 = vmatprep.subr.mxu0 0.0
      %361 = vmatpush1.msra.mxu0 %v299
      %362 = vmatprep.subr.mxu0 0.0
      %363 = vmatpush1.msra.mxu0 %v300
      %364 = vmatprep.subr.mxu0 0.0
      %365 = vmatpush1.msra.mxu0 %v301
      %366 = vmatprep.subr.mxu0 0.0
      %367 = vmatpush1.msra.mxu0 %v302
      %368 = vmatprep.subr.mxu0 0.0
      %369 = vmatpush1.msra.mxu0 %v303
      %370 = vmatprep.subr.mxu0 0.0
      %371 = vmatpush1.msra.mxu0 %v304
      %372 = vmatprep.subr.mxu0 0.0
      %373 = vmatpush1.msra.mxu0 %v305
      %374 = vmatprep.subr.mxu0 0.0
      %375 = vmatpush1.msra.mxu0 %v306
      %376 = vmatprep.subr.mxu0 0.0
      %377 = vmatpush1.msra.mxu0 %v307
      %378 = vmatprep.subr.mxu0 0.0
      %379 = vmatpush1.msra.mxu0 %v308
      %380 = vmatprep.mubr.f32.mxu0 %v178
      %381 = vmatmul.mubr.f32.gmra.mrb[0].mxu0 %v177
      %v382 = vpop.f32.mrb[0].mxu0
      %v383 = vadd.f32 %v314, %v382
      %v384 = vpop.f32.mrb[0].mxu0
      %385 = vmatprep.mubr.f32.mxu0 %v180
      %386 = vmatmul.mubr.f32.gmra.mrb[0].mxu0 %v179
      %v387 = vpop.f32.mrb[0].mxu0
      %v388 = vadd.f32 %v314, %v387
      %v389 = vpop.f32.mrb[0].mxu0
      %390 = vmatprep.mubr.f32.mxu0 %v182
      %391 = vmatmul.mubr.f32.gmra.mrb[0].mxu0 %v181
      %v392 = vpop.f32.mrb[0].mxu0
      %v393 = vadd.f32 %v314, %v392
      %v394 = vpop.f32.mrb[0].mxu0
      %395 = vmatprep.mubr.f32.mxu0 %v184
      %396 = vmatmul.mubr.f32.gmra.mrb[0].mxu0 %v183
      %v397 = vpop.f32.mrb[0].mxu0
      %v398 = vadd.f32 %v314, %v397
      %v399 = vpop.f32.mrb[0].mxu0
      %400 = vmatprep.mubr.f32.mxu0 %v186
      %401 = vmatmul.mubr.f32.gmra.mrb[0].mxu0 %v185
      %v402 = vpop.f32.mrb[0].mxu0
      %v403 = vadd.f32 %v314, %v402
      %v404 = vpop.f32.mrb[0].mxu0
      %405 = vmatprep.mubr.f32.mxu0 %v188
      %406 = vmatmul.mubr.f32.gmra.mrb[0].mxu0 %v187
      %v407 = vpop.f32.mrb[0].mxu0
      %v408 = vadd.f32 %v314, %v407
      %v409 = vpop.f32.mrb[0].mxu0
      %410 = vmatprep.mubr.f32.mxu0 %v190
      %411 = vmatmul.mubr.f32.gmra.mrb[0].mxu0 %v189
      %v412 = vpop.f32.mrb[0].mxu0
      %v413 = vadd.f32 %v314, %v412
      %v414 = vpop.f32.mrb[0].mxu0
      %415 = vmatprep.mubr.f32.mxu0 %v192
      %416 = vmatmul.mubr.f32.gmra.mrb[0].mxu0 %v191
      %v417 = vpop.f32.mrb[0].mxu0
      %v418 = vadd.f32 %v314, %v417
      %v419 = vpop.f32.mrb[0].mxu0
      %420 = vmatprep.mubr.f32.mxu0 %v194
      %421 = vmatmul.mubr.f32.gmra.mrb[0].mxu0 %v193
      %v422 = vpop.f32.mrb[0].mxu0
      %v423 = vadd.f32 %v314, %v422
      %v424 = vpop.f32.mrb[0].mxu0
      %425 = vmatprep.mubr.f32.mxu0 %v196
      %426 = vmatmul.mubr.f32.gmra.mrb[0].mxu0 %v195
      %v427 = vpop.f32.mrb[0].mxu0
      %v428 = vadd.f32 %v314, %v427
      %v429 = vpop.f32.mrb[0].mxu0
      %430 = vmatprep.mubr.f32.mxu0 %v198
      %431 = vmatmul.mubr.f32.gmra.mrb[0].mxu0 %v197
      %v432 = vpop.f32.mrb[0].mxu0
      %v433 = vadd.f32 %v314, %v432
      %v434 = vpop.f32.mrb[0].mxu0
      %435 = vmatprep.mubr.f32.mxu0 %v200
      %436 = vmatmul.mubr.f32.gmra.mrb[0].mxu0 %v199
      %v437 = vpop.f32.mrb[0].mxu0
      %v438 = vadd.f32 %v314, %v437
      %v439 = vpop.f32.mrb[0].mxu0
      %440 = vmatprep.mubr.f32.mxu0 %v202
      %441 = vmatmul.mubr.f32.gmra.mrb[0].mxu0 %v201
      %v442 = vpop.f32.mrb[0].mxu0
      %v443 = vadd.f32 %v314, %v442
      %v444 = vpop.f32.mrb[0].mxu0
      %445 = vmatprep.mubr.f32.mxu0 %v204
      %446 = vmatmul.mubr.f32.gmra.mrb[0].mxu0 %v203
      %v447 = vpop.f32.mrb[0].mxu0
      %v448 = vadd.f32 %v314, %v447
      %v449 = vpop.f32.mrb[0].mxu0
      %450 = vmatprep.mubr.f32.mxu0 %v206
      %451 = vmatmul.mubr.f32.gmra.mrb[0].mxu0 %v205
      %v452 = vpop.f32.mrb[0].mxu0
      %v453 = vadd.f32 %v314, %v452
      %v454 = vpop.f32.mrb[0].mxu0
      %455 = vmatprep.mubr.f32.mxu0 %v208
      %456 = vmatmul.mubr.f32.gmra.mrb[0].mxu0 %v207
      %v457 = vpop.f32.mrb[0].mxu0
      %v458 = vadd.f32 %v314, %v457
      %v459 = vpop.f32.mrb[0].mxu0
      %460 = vmatprep.mubr.f32.mxu0 %v210
      %461 = vmatmul.mubr.f32.gmra.mrb[0].mxu0 %v209
      %v462 = vpop.f32.mrb[0].mxu0
      %v463 = vadd.f32 %v314, %v462
      %v464 = vpop.f32.mrb[0].mxu0
      %465 = vmatprep.mubr.f32.mxu0 %v212
      %466 = vmatmul.mubr.f32.gmra.mrb[0].mxu0 %v211
      %v467 = vpop.f32.mrb[0].mxu0
      %v468 = vadd.f32 %v314, %v467
      %v469 = vpop.f32.mrb[0].mxu0
      %470 = vmatprep.mubr.f32.mxu0 %v214
      %471 = vmatmul.mubr.f32.gmra.mrb[0].mxu0 %v213
      %v472 = vpop.f32.mrb[0].mxu0
      %v473 = vadd.f32 %v314, %v472
      %v474 = vpop.f32.mrb[0].mxu0
      %475 = vmatprep.mubr.f32.mxu0 %v216
      %476 = vmatmul.mubr.f32.gmra.mrb[0].mxu0 %v215
      %v477 = vpop.f32.mrb[0].mxu0
      %v478 = vadd.f32 %v314, %v477
      %v479 = vpop.f32.mrb[0].mxu0
      %480 = vmatprep.mubr.f32.mxu0 %v218
      %481 = vmatmul.mubr.f32.gmra.mrb[0].mxu0 %v217
      %v482 = vpop.f32.mrb[0].mxu0
      %v483 = vadd.f32 %v314, %v482
      %v484 = vpop.f32.mrb[0].mxu0
      %485 = vmatprep.mubr.f32.mxu0 %v220
      %486 = vmatmul.mubr.f32.gmra.mrb[0].mxu0 %v219
      %v487 = vpop.f32.mrb[0].mxu0
      %v488 = vadd.f32 %v314, %v487
      %v489 = vpop.f32.mrb[0].mxu0
      %490 = vmatprep.mubr.f32.mxu0 %v222
      %491 = vmatmul.mubr.f32.gmra.mrb[0].mxu0 %v221
      %v492 = vpop.f32.mrb[0].mxu0
      %v493 = vadd.f32 %v314, %v492
      %v494 = vpop.f32.mrb[0].mxu0
      %495 = vmatprep.mubr.f32.mxu0 %v224
      %496 = vmatmul.mubr.f32.gmra.mrb[0].mxu0 %v223
      %v497 = vpop.f32.mrb[0].mxu0
      %v498 = vadd.f32 %v314, %v497
      %v499 = vpop.f32.mrb[0].mxu0
      %500 = vmatprep.mubr.f32.mxu0 %v226
      %501 = vmatmul.mubr.f32.gmra.mrb[0].mxu0 %v225
      %v502 = vpop.f32.mrb[0].mxu0
      %v503 = vadd.f32 %v314, %v502
      %v504 = vpop.f32.mrb[0].mxu0
      %505 = vmatprep.mubr.f32.mxu0 %v228
      %506 = vmatmul.mubr.f32.gmra.mrb[0].mxu0 %v227
      %v507 = vpop.f32.mrb[0].mxu0
      %v508 = vadd.f32 %v314, %v507
      %v509 = vpop.f32.mrb[0].mxu0
      %510 = vmatprep.mubr.f32.mxu0 %v230
      %511 = vmatmul.mubr.f32.gmra.mrb[0].mxu0 %v229
      %v512 = vpop.f32.mrb[0].mxu0
      %v513 = vadd.f32 %v314, %v512
      %v514 = vpop.f32.mrb[0].mxu0
      %515 = vmatprep.mubr.f32.mxu0 %v232
      %516 = vmatmul.mubr.f32.gmra.mrb[0].mxu0 %v231
      %v517 = vpop.f32.mrb[0].mxu0
      %v518 = vadd.f32 %v314, %v517
      %v519 = vpop.f32.mrb[0].mxu0
      %520 = vmatprep.mubr.f32.mxu0 %v234
      %521 = vmatmul.mubr.f32.gmra.mrb[0].mxu0 %v233
      %v522 = vpop.f32.mrb[0].mxu0
      %v523 = vadd.f32 %v314, %v522
      %v524 = vpop.f32.mrb[0].mxu0
      %525 = vmatprep.mubr.f32.mxu0 %v236
      %526 = vmatmul.mubr.f32.gmra.mrb[0].mxu0 %v235
      %v527 = vpop.f32.mrb[0].mxu0
      %v528 = vadd.f32 %v314, %v527
      %v529 = vpop.f32.mrb[0].mxu0
      %530 = vmatprep.mubr.f32.mxu0 %v238
      %531 = vmatmul.mubr.f32.gmra.mrb[0].mxu0 %v237
      %v532 = vpop.f32.mrb[0].mxu0
      %v533 = vadd.f32 %v314, %v532
      %v534 = vpop.f32.mrb[0].mxu0
      %535 = vmatprep.mubr.f32.mxu0 %v240
      %536 = vmatmul.mubr.f32.gmra.mrb[0].mxu0 %v239
      %v537 = vpop.f32.mrb[0].mxu0
      %v538 = vadd.f32 %v314, %v537
      %v539 = vpop.f32.mrb[0].mxu0
      %540 = vmatprep.mubr.f32.mxu0 %v242
      %541 = vmatmul.mubr.f32.gmra.mrb[0].mxu0 %v241
      %v542 = vpop.f32.mrb[0].mxu0
      %v543 = vadd.f32 %v314, %v542
      %v544 = vpop.f32.mrb[0].mxu0
      %545 = vmatprep.mubr.f32.mxu0 %v244
      %546 = vmatmul.mubr.f32.gmra.mrb[0].mxu0 %v243
      %v547 = vpop.f32.mrb[0].mxu0
      %v548 = vadd.f32 %v314, %v547
      %v549 = vpop.f32.mrb[0].mxu0
      %550 = vmatprep.mubr.f32.mxu0 %v246
      %551 = vmatmul.mubr.f32.gmra.mrb[0].mxu0 %v245
      %v552 = vpop.f32.mrb[0].mxu0
      %v553 = vadd.f32 %v314, %v552
      %v554 = vpop.f32.mrb[0].mxu0
      %555 = vmatprep.mubr.f32.mxu0 %v248
      %556 = vmatmul.mubr.f32.gmra.mrb[0].mxu0 %v247
      %v557 = vpop.f32.mrb[0].mxu0
      %v558 = vadd.f32 %v314, %v557
      %v559 = vpop.f32.mrb[0].mxu0
      %560 = vmatprep.mubr.f32.mxu0 %v250
      %561 = vmatmul.mubr.f32.gmra.mrb[0].mxu0 %v249
      %v562 = vpop.f32.mrb[0].mxu0
      %v563 = vadd.f32 %v314, %v562
      %v564 = vpop.f32.mrb[0].mxu0
      %565 = vmatprep.mubr.f32.mxu0 %v252
      %566 = vmatmul.mubr.f32.gmra.mrb[0].mxu0 %v251
      %v567 = vpop.f32.mrb[0].mxu0
      %v568 = vadd.f32 %v314, %v567
      %v569 = vpop.f32.mrb[0].mxu0
      %570 = vmatprep.mubr.f32.mxu0 %v254
      %571 = vmatmul.mubr.f32.gmra.mrb[0].mxu0 %v253
      %v572 = vpop.f32.mrb[0].mxu0
      %v573 = vadd.f32 %v314, %v572
      %v574 = vpop.f32.mrb[0].mxu0
      %575 = vmatprep.mubr.f32.mxu0 %v256
      %576 = vmatmul.mubr.f32.gmra.mrb[0].mxu0 %v255
      %v577 = vpop.f32.mrb[0].mxu0
      %v578 = vadd.f32 %v314, %v577
      %v579 = vpop.f32.mrb[0].mxu0
      %580 = vmatprep.mubr.f32.mxu0 %v258
      %581 = vmatmul.mubr.f32.gmra.mrb[0].mxu0 %v257
      %v582 = vpop.f32.mrb[0].mxu0
      %v583 = vadd.f32 %v314, %v582
      %v584 = vpop.f32.mrb[0].mxu0
      %585 = vmatprep.mubr.f32.mxu0 %v260
      %586 = vmatmul.mubr.f32.gmra.mrb[0].mxu0 %v259
      %v587 = vpop.f32.mrb[0].mxu0
      %v588 = vadd.f32 %v314, %v587
      %v589 = vpop.f32.mrb[0].mxu0
      %590 = vmatprep.mubr.f32.mxu0 %v262
      %591 = vmatmul.mubr.f32.gmra.mrb[0].mxu0 %v261
      %v592 = vpop.f32.mrb[0].mxu0
      %v593 = vadd.f32 %v314, %v592
      %v594 = vpop.f32.mrb[0].mxu0
      %595 = vmatprep.mubr.f32.mxu0 %v264
      %596 = vmatmul.mubr.f32.gmra.mrb[0].mxu0 %v263
      %v597 = vpop.f32.mrb[0].mxu0
      %v598 = vadd.f32 %v314, %v597
      %v599 = vpop.f32.mrb[0].mxu0
      %600 = vmatprep.mubr.f32.mxu0 %v266
      %601 = vmatmul.mubr.f32.gmra.mrb[0].mxu0 %v265
      %v602 = vpop.f32.mrb[0].mxu0
      %v603 = vadd.f32 %v314, %v602
      %v604 = vpop.f32.mrb[0].mxu0
      %605 = vmatprep.mubr.f32.mxu0 %v268
      %606 = vmatmul.mubr.f32.gmra.mrb[0].mxu0 %v267
      %v607 = vpop.f32.mrb[0].mxu0
      %v608 = vadd.f32 %v314, %v607
      %v609 = vpop.f32.mrb[0].mxu0
      %610 = vmatprep.mubr.f32.mxu0 %v270
      %611 = vmatmul.mubr.f32.gmra.mrb[0].mxu0 %v269
      %v612 = vpop.f32.mrb[0].mxu0
      %v613 = vadd.f32 %v314, %v612
      %v614 = vpop.f32.mrb[0].mxu0
      %615 = vmatprep.mubr.f32.mxu0 %v272
      %616 = vmatmul.mubr.f32.gmra.mrb[0].mxu0 %v271
      %v617 = vpop.f32.mrb[0].mxu0
      %v618 = vadd.f32 %v314, %v617
      %v619 = vpop.f32.mrb[0].mxu0
      %620 = vmatprep.mubr.f32.mxu0 %v274
      %621 = vmatmul.mubr.f32.gmra.mrb[0].mxu0 %v273
      %v622 = vpop.f32.mrb[0].mxu0
      %v623 = vadd.f32 %v314, %v622
      %v624 = vpop.f32.mrb[0].mxu0
      %625 = vmatprep.mubr.f32.mxu0 %v276
      %626 = vmatmul.mubr.f32.gmra.mrb[0].mxu0 %v275
      %v627 = vpop.f32.mrb[0].mxu0
      %v628 = vadd.f32 %v314, %v627
      %v629 = vpop.f32.mrb[0].mxu0
      %630 = vdwg.mxu0
      %v631 = vmax.f32 %v383, 0.0
      %v632 = vmax.f32 %v388, 0.0
      %v633 = vmax.f32 %v393, 0.0
      %v634 = vmax.f32 %v398, 0.0
      %v635 = vmax.f32 %v403, 0.0
      %v636 = vmax.f32 %v408, 0.0
      %v637 = vmax.f32 %v413, 0.0
      %v638 = vmax.f32 %v418, 0.0
      %v639 = vmax.f32 %v423, 0.0
      %v640 = vmax.f32 %v428, 0.0
      %v641 = vmax.f32 %v433, 0.0
      %v642 = vmax.f32 %v438, 0.0
      %v643 = vmax.f32 %v443, 0.0
      %v644 = vmax.f32 %v448, 0.0
      %v645 = vmax.f32 %v453, 0.0
      %v646 = vmax.f32 %v458, 0.0
      %v647 = vmax.f32 %v463, 0.0
      %v648 = vmax.f32 %v468, 0.0
      %v649 = vmax.f32 %v473, 0.0
      %v650 = vmax.f32 %v478, 0.0
      %v651 = vmax.f32 %v483, 0.0
      %v652 = vmax.f32 %v488, 0.0
      %v653 = vmax.f32 %v493, 0.0
      %v654 = vmax.f32 %v498, 0.0
      %v655 = vmax.f32 %v503, 0.0
      %v656 = vmax.f32 %v508, 0.0
      %v657 = vmax.f32 %v513, 0.0
      %v658 = vmax.f32 %v518, 0.0
      %v659 = vmax.f32 %v523, 0.0
      %v660 = vmax.f32 %v528, 0.0
      %v661 = vmax.f32 %v533, 0.0
      %v662 = vmax.f32 %v538, 0.0
      %v663 = vmax.f32 %v543, 0.0
      %v664 = vmax.f32 %v548, 0.0
      %v665 = vmax.f32 %v553, 0.0
      %v666 = vmax.f32 %v558, 0.0
      %v667 = vmax.f32 %v563, 0.0
      %v668 = vmax.f32 %v568, 0.0
      %v669 = vmax.f32 %v573, 0.0
      %v670 = vmax.f32 %v578, 0.0
      %v671 = vmax.f32 %v583, 0.0
      %v672 = vmax.f32 %v588, 0.0
      %v673 = vmax.f32 %v593, 0.0
      %v674 = vmax.f32 %v598, 0.0
      %v675 = vmax.f32 %v603, 0.0
      %v676 = vmax.f32 %v608, 0.0
      %v677 = vmax.f32 %v613, 0.0
      %v678 = vmax.f32 %v618, 0.0
      %v679 = vmax.f32 %v623, 0.0
      %v680 = vmax.f32 %v628, 0.0
      %vm681 = vcmask 261120
      %682 = vst.msk [vmem:[%s175] sm:$0xff] %vm681, %v631
      %683 = vst.msk [vmem:[%s175 + $0x8] sm:$0xff] %vm681, %v632
      %684 = vst.msk [vmem:[%s175 + $0x10] sm:$0xff] %vm681, %v633
      %685 = vst.msk [vmem:[%s175 + $0x18] sm:$0xff] %vm681, %v634
      %686 = vst.msk [vmem:[%s175 + $0x20] sm:$0xff] %vm681, %v635
      %687 = vst.msk [vmem:[%s175 + $0x28] sm:$0xff] %vm681, %v636
      %688 = vst.msk [vmem:[%s175 + $0x30] sm:$0xff] %vm681, %v637
      %689 = vst.msk [vmem:[%s175 + $0x38] sm:$0xff] %vm681, %v638
      %690 = vst.msk [vmem:[%s175 + $0x40] sm:$0xff] %vm681, %v639
      %691 = vst.msk [vmem:[%s175 + $0x48] sm:$0xff] %vm681, %v640
      %692 = vst.msk [vmem:[%s175 + $0x50] sm:$0xff] %vm681, %v641
      %693 = vst.msk [vmem:[%s175 + $0x58] sm:$0xff] %vm681, %v642
      %694 = vst.msk [vmem:[%s175 + $0x60] sm:$0xff] %vm681, %v643
      %695 = vst.msk [vmem:[%s175 + $0x68] sm:$0xff] %vm681, %v644
      %696 = vst.msk [vmem:[%s175 + $0x70] sm:$0xff] %vm681, %v645
      %697 = vst.msk [vmem:[%s175 + $0x78] sm:$0xff] %vm681, %v646
      %698 = vst.msk [vmem:[%s175 + $0x80] sm:$0xff] %vm681, %v647
      %699 = vst.msk [vmem:[%s175 + $0x88] sm:$0xff] %vm681, %v648
      %700 = vst.msk [vmem:[%s175 + $0x90] sm:$0xff] %vm681, %v649
      %701 = vst.msk [vmem:[%s175 + $0x98] sm:$0xff] %vm681, %v650
      %702 = vst.msk [vmem:[%s175 + $0xa0] sm:$0xff] %vm681, %v651
      %703 = vst.msk [vmem:[%s175 + $0xa8] sm:$0xff] %vm681, %v652
      %704 = vst.msk [vmem:[%s175 + $0xb0] sm:$0xff] %vm681, %v653
      %705 = vst.msk [vmem:[%s175 + $0xb8] sm:$0xff] %vm681, %v654
      %706 = vst.msk [vmem:[%s175 + $0xc0] sm:$0xff] %vm681, %v655
      %707 = vst.msk [vmem:[%s175 + $0xc8] sm:$0xff] %vm681, %v656
      %708 = vst.msk [vmem:[%s175 + $0xd0] sm:$0xff] %vm681, %v657
      %709 = vst.msk [vmem:[%s175 + $0xd8] sm:$0xff] %vm681, %v658
      %710 = vst.msk [vmem:[%s175 + $0xe0] sm:$0xff] %vm681, %v659
      %711 = vst.msk [vmem:[%s175 + $0xe8] sm:$0xff] %vm681, %v660
      %712 = vst.msk [vmem:[%s175 + $0xf0] sm:$0xff] %vm681, %v661
      %713 = vst.msk [vmem:[%s175 + $0xf8] sm:$0xff] %vm681, %v662
      %714 = vst.msk [vmem:[%s175 + $0x100] sm:$0xff] %vm681, %v663
      %715 = vst.msk [vmem:[%s175 + $0x108] sm:$0xff] %vm681, %v664
      %716 = vst.msk [vmem:[%s175 + $0x110] sm:$0xff] %vm681, %v665
      %717 = vst.msk [vmem:[%s175 + $0x118] sm:$0xff] %vm681, %v666
      %718 = vst.msk [vmem:[%s175 + $0x120] sm:$0xff] %vm681, %v667
      %719 = vst.msk [vmem:[%s175 + $0x128] sm:$0xff] %vm681, %v668
      %720 = vst.msk [vmem:[%s175 + $0x130] sm:$0xff] %vm681, %v669
      %721 = vst.msk [vmem:[%s175 + $0x138] sm:$0xff] %vm681, %v670
      %722 = vst.msk [vmem:[%s175 + $0x140] sm:$0xff] %vm681, %v671
      %723 = vst.msk [vmem:[%s175 + $0x148] sm:$0xff] %vm681, %v672
      %724 = vst.msk [vmem:[%s175 + $0x150] sm:$0xff] %vm681, %v673
      %725 = vst.msk [vmem:[%s175 + $0x158] sm:$0xff] %vm681, %v674
      %726 = vst.msk [vmem:[%s175 + $0x160] sm:$0xff] %vm681, %v675
      %727 = vst.msk [vmem:[%s175 + $0x168] sm:$0xff] %vm681, %v676
      %728 = vst.msk [vmem:[%s175 + $0x170] sm:$0xff] %vm681, %v677
      %729 = vst.msk [vmem:[%s175 + $0x178] sm:$0xff] %vm681, %v678
      %730 = vst.msk [vmem:[%s175 + $0x180] sm:$0xff] %vm681, %v679
      %731 = vst.msk [vmem:[%s175 + $0x188] sm:$0xff] %vm681, %v680
      %s732 = smul.u32 50, %s14
      %p733 = scmp.lt.s32.totalorder %s732, 99
      %s734 = scalar_select %p733, %s732, 99
      %s735 = smul.addr %s734, 8
      %s736 = scalar_lea.vmem %s3, %s735
      // Predicated region
      $region33: #{critic_forward.3} parent=31 // pred_check
        %p737 = pneg %p100
      $region34: #{critic_forward.3} parent=31 // pred_check_branch
        %739 = sbr.rel (%p737) target = $region36
      $region35: #{critic_forward.3} parent=31 // pred_region
        %s740 = smul.u32 50, %s14
      $region36: #{critic_forward.3} parent=31 // pred_fallthru
        _
    $region32: #{critic_forward.3} parent=5 // pred_fallthru
      _
    %p741 = scmp.le.s32.totalorder 2, %s9
    // Predicated region
    $region37: #{critic_forward.3} parent=5 // pred_check
      %p742 = pneg %p741
    $region38: #{critic_forward.3} parent=5 // pred_check_branch
      %744 = sbr.rel (%p742) target = $region40
    $region39: #{critic_forward.3} parent=5 // pred_region
      %s745 = ssub.s32 %s9, 2
      // Predicated region
      $region41: #{critic_forward.3} parent=39 // pred_check
        %p746 = pneg %p106
      $region42: #{critic_forward.3} parent=39 // pred_check_branch
        %748 = sbr.rel (%p746) target = $region44
      $region43: #{critic_forward.3} parent=39 // pred_region
        %s749 = smul.u32 50, %s15
        %p750 = scmp.lt.s32.totalorder %s749, 99
        %s751 = scalar_select %p750, %s749, 99
        %s752 = smul.addr %s751, 8
        %s753 = scalar_lea.vmem %s3, %s752
      $region44: #{critic_forward.3} parent=39 // pred_fallthru
        _
    $region40: #{critic_forward.3} parent=5 // pred_fallthru
      _
  $region6: #{critic_forward.3} parent=0 // loop_footer
    %s13 = sadd.s32 1, %s9
  $region7: #{critic_forward.3} parent=0 // loop_footer_branch
    %8 = sbr.rel target = $region3
  $region8: #{critic_forward.3} parent=0 // loop_exit
    _

// kernel: critic_forward.4
$region0: #{critic_forward.4}
  #allocation0 [shape = 'u32[]', space=smem, size = 0x4, offset = 0x4, fixed_abs, tag = 'smem constant byte address 0x4 - core index']
  #allocation1 [shape = 'u32[144,128]{1,0:T(1,128)}', space=vmem, size = 0x12000, scoped, tag = 'internal scratch']
  %s0 = inlined_call_operand.vmem [shape: f32[656,288], index: 0, kind: input, shape index: {}]
  %s1 = inlined_call_operand.vmem [shape: f32[288,32], index: 1, kind: input, shape index: {}]
  %s2 = inlined_call_operand.vmem [shape: f32[1,32], index: 2, kind: input, shape index: {}]
  %s3 = inlined_call_operand.vmem [shape: f32[656,32], index: 3, kind: output, shape index: {}]
  %s4 = sld [smem:[#allocation0]]
  $region45: #{critic_forward.4} parent=0
    _
  %s6 = ssub.s32 1, %s4
  %s7 = scalar_select 0, %s6, %s4
  loop: start=0, step=1, limit=4
  $region2: #{critic_forward.4} parent=0 // loop_pre_header
    _
  $region3: #{critic_forward.4} parent=0 // loop_header
    %s9 = sphi 0, %s13
    %p10 = scmp.ge.s32.totalorder %s9, 4
    %s19 = sphi 0, %s21
    %s22 = sphi 0, %s19
    %s23 = sphi 0, %s22
    %s39 = sphi 0, %s23
    %s43 = sphi 0, %s43
    %s45 = sphi 0, %s43
    %s46 = sphi 0, %s45
    %s60 = sphi 0, %s46
    %s64 = sphi 0, %s64
    %s66 = sphi 0, %s64
    %s67 = sphi 0, %s66
    %s81 = sphi 0, %s67
    %s87 = sphi 0, %s89
    %s90 = sphi 0, %s87
    %s91 = sphi 0, %s90
    %s107 = sphi 0, %s91
  $region4: #{critic_forward.4} parent=0 // loop_header_branch
    %12 = sbr.rel (%p10) target = $region8
  $region5: #{critic_forward.4} parent=0 // loop_body
    %s14 = ssub.s32 %s9, 1
    %s15 = ssub.s32 %s9, 2
    %s16 = sadd.s32 %s9, 1
    %s17 = ssub.s32 %s9, %s16
    %p18 = scmp.eq.s32.totalorder %s17, 0
    %s20 = sadd.s32 %s19, 1
    %s21 = scalar_select %p18, %s19, %s20
    %p24 = pneg %p18
    %p25 = scmp.eq.s32.totalorder %s9, 1
    %p26 = por %p24, %p25
    %p27 = scmp.ne.s32.totalorder %s19, %s22
    %p28 = scmp.eq.s32.totalorder %s9, 0
    %p29 = por %p27, %p28
    %p30 = scmp.ne.s32.totalorder %s19, %s22
    %p31 = scmp.eq.s32.totalorder %s14, 1
    %p32 = por %p30, %p31
    %p33 = scmp.ne.s32.totalorder %s22, %s23
    %p34 = scmp.eq.s32.totalorder %s14, 0
    %p35 = por %p33, %p34
    %p36 = scmp.ne.s32.totalorder %s22, %s23
    %p37 = scmp.eq.s32.totalorder %s15, 1
    %p38 = por %p36, %p37
    %p40 = scmp.ne.s32.totalorder %s23, %s39
    %p41 = scmp.eq.s32.totalorder %s15, 0
    %p42 = por %p40, %p41
    %s44 = sadd.s32 %s43, 1
    %p47 = scmp.eq.s32.totalorder %s9, 1
    %p48 = scmp.ne.s32.totalorder %s43, %s45
    %p49 = scmp.eq.s32.totalorder %s9, 0
    %p50 = por %p48, %p49
    %p51 = scmp.ne.s32.totalorder %s43, %s45
    %p52 = scmp.eq.s32.totalorder %s14, 1
    %p53 = por %p51, %p52
    %p54 = scmp.ne.s32.totalorder %s45, %s46
    %p55 = scmp.eq.s32.totalorder %s14, 0
    %p56 = por %p54, %p55
    %p57 = scmp.ne.s32.totalorder %s45, %s46
    %p58 = scmp.eq.s32.totalorder %s15, 1
    %p59 = por %p57, %p58
    %p61 = scmp.ne.s32.totalorder %s46, %s60
    %p62 = scmp.eq.s32.totalorder %s15, 0
    %p63 = por %p61, %p62
    %s65 = sadd.s32 %s64, 1
    %p68 = scmp.eq.s32.totalorder %s9, 1
    %p69 = scmp.ne.s32.totalorder %s64, %s66
    %p70 = scmp.eq.s32.totalorder %s9, 0
    %p71 = por %p69, %p70
    %p72 = scmp.ne.s32.totalorder %s64, %s66
    %p73 = scmp.eq.s32.totalorder %s14, 1
    %p74 = por %p72, %p73
    %p75 = scmp.ne.s32.totalorder %s66, %s67
    %p76 = scmp.eq.s32.totalorder %s14, 0
    %p77 = por %p75, %p76
    %p78 = scmp.ne.s32.totalorder %s66, %s67
    %p79 = scmp.eq.s32.totalorder %s15, 1
    %p80 = por %p78, %p79
    %p82 = scmp.ne.s32.totalorder %s67, %s81
    %p83 = scmp.eq.s32.totalorder %s15, 0
    %p84 = por %p82, %p83
    %s85 = ssub.s32 %s9, %s16
    %p86 = scmp.eq.s32.totalorder %s85, 0
    %s88 = sadd.s32 %s87, 1
    %s89 = scalar_select %p86, %s87, %s88
    %p92 = pneg %p86
    %p93 = scmp.eq.s32.totalorder %s9, 1
    %p94 = por %p92, %p93
    %p95 = scmp.ne.s32.totalorder %s87, %s90
    %p96 = scmp.eq.s32.totalorder %s9, 0
    %p97 = por %p95, %p96
    %p98 = scmp.ne.s32.totalorder %s87, %s90
    %p99 = scmp.eq.s32.totalorder %s14, 1
    %p100 = por %p98, %p99
    %p101 = scmp.ne.s32.totalorder %s90, %s91
    %p102 = scmp.eq.s32.totalorder %s14, 0
    %p103 = por %p101, %p102
    %p104 = scmp.ne.s32.totalorder %s90, %s91
    %p105 = scmp.eq.s32.totalorder %s15, 1
    %p106 = por %p104, %p105
    %p108 = scmp.ne.s32.totalorder %s91, %s107
    %p109 = scmp.eq.s32.totalorder %s15, 0
    %p110 = por %p108, %p109
    %p111 = scmp.le.s32.totalorder 1, %s9
    %p112 = scmp.lt.s32.totalorder %s9, 3
    %p113 = pnand %p111, %p112
    %p114 = pneg %p113
    // Predicated region
    $region9: #{critic_forward.4} parent=5 // pred_check
      _
    $region10: #{critic_forward.4} parent=5 // pred_check_branch
      %116 = sbr.rel (%p113) target = $region12
    $region11: #{critic_forward.4} parent=5 // pred_region
      %s117 = ssub.s32 %s9, 1
      // Predicated region
      $region13: #{critic_forward.4} parent=11 // pred_check
        %p118 = pneg %p56
      $region14: #{critic_forward.4} parent=11 // pred_check_branch
        %120 = sbr.rel (%p118) target = $region16
      $region15: #{critic_forward.4} parent=11 // pred_region
        _
      $region16: #{critic_forward.4} parent=11 // pred_fallthru
        _
      // Predicated region
      $region17: #{critic_forward.4} parent=11 // pred_check
        %p121 = pneg %p77
      $region18: #{critic_forward.4} parent=11 // pred_check_branch
        %123 = sbr.rel (%p121) target = $region20
      $region19: #{critic_forward.4} parent=11 // pred_region
        _
      $region20: #{critic_forward.4} parent=11 // pred_fallthru
        _
    $region12: #{critic_forward.4} parent=5 // pred_fallthru
      _
    %p124 = scmp.lt.s32.totalorder %s9, 2
    // Predicated region
    $region21: #{critic_forward.4} parent=5 // pred_check
      %p125 = pneg %p124
    $region22: #{critic_forward.4} parent=5 // pred_check_branch
      %127 = sbr.rel (%p125) target = $region24
    $region23: #{critic_forward.4} parent=5 // pred_region
      // Predicated region
      $region25: #{critic_forward.4} parent=23 // pred_check
        %p128 = pneg %p29
      $region26: #{critic_forward.4} parent=23 // pred_check_branch
        %130 = sbr.rel (%p128) target = $region28
      $region27: #{critic_forward.4} parent=23 // pred_region
        %s131 = smul.u32 41, %s9
        %p132 = scmp.lt.s32.totalorder %s131, 81
        %s133 = scalar_select %p132, %s131, 81
        %s134 = smul.addr %s133, 3
        %s135 = smul.addr %s134, 8
        %s136 = scalar_lea.vmem %s0, %s135
        %s137 = smul.u32 41, %s9
      $region28: #{critic_forward.4} parent=23 // pred_fallthru
        _
    $region24: #{critic_forward.4} parent=5 // pred_fallthru
      _
    %p138 = scmp.le.s32.totalorder 1, %s9
    %p139 = scmp.lt.s32.totalorder %s9, 3
    %p140 = pnand %p138, %p139
    %p141 = pneg %p140
    // Predicated region
    $region29: #{critic_forward.4} parent=5 // pred_check
      _
    $region30: #{critic_forward.4} parent=5 // pred_check_branch
      %143 = sbr.rel (%p140) target = $region32
    $region31: #{critic_forward.4} parent=5 // pred_region
      %s144 = ssub.s32 %s9, 1
      %s145 = smul.u32 41, %s14
      %p146 = scmp.lt.s32.totalorder %s145, 81
      %s147 = scalar_select %p146, %s145, 81
      %s148 = smul.addr %s147, 3
      %s149 = smul.addr %s148, 8
      %s150 = scalar_lea.vmem %s0, %s149
      %p151 = pneg %p35
      %p152 = pneg %p32
      %p153 = pneg %p56
      %p154 = pneg %p53
      %p155 = pneg %p77
      %p156 = pneg %p74
      %p157 = pneg %p103
      %p158 = pneg %p100
      %s159 = smul.u32 41, %s14
      %p160 = scmp.lt.s32.totalorder %s159, 81
      %s161 = scalar_select %p160, %s159, 81
      %s162 = smul.addr %s161, 8
      %s163 = scalar_lea.vmem %s3, %s162
      %s164 = smul.u32 41, %s14
      %p165 = scmp.lt.s32.totalorder %s164, 81
      %s166 = scalar_select %p165, %s164, 81
      %s167 = smul.addr %s166, 3
      %s168 = smul.addr %s167, 8
      %s169 = scalar_lea.vmem %s0, %s168
      %s170 = smul.u32 41, %s14
      %s171 = smul.u32 41, %s14
      %p172 = scmp.lt.s32.totalorder %s171, 81
      %s173 = scalar_select %p172, %s171, 81
      %s174 = smul.addr %s173, 8
      %s175 = scalar_lea.vmem %s3, %s174
      %s176 = smul.u32 41, %s14
      %v177 = vld [vmem:[%s169] sm:$0xff]
      %v178 = vld [vmem:[%s169 + $0x8] sm:$0xff]
      %v179 = vld [vmem:[%s169 + $0x10] sm:$0xff]
      %v180 = vld [vmem:[%s169 + $0x18] sm:$0xff]
      %v181 = vld [vmem:[%s169 + $0x20] sm:$0xff]
      %v182 = vld [vmem:[%s169 + $0x28] sm:$0xff]
      %v183 = vld [vmem:[%s169 + $0x30] sm:$0xff]
      %v184 = vld [vmem:[%s169 + $0x38] sm:$0xff]
      %v185 = vld [vmem:[%s169 + $0x40] sm:$0xff]
      %v186 = vld [vmem:[%s169 + $0x48] sm:$0xff]
      %v187 = vld [vmem:[%s169 + $0x50] sm:$0xff]
      %v188 = vld [vmem:[%s169 + $0x58] sm:$0xff]
      %v189 = vld [vmem:[%s169 + $0x60] sm:$0xff]
      %v190 = vld [vmem:[%s169 + $0x68] sm:$0xff]
      %v191 = vld [vmem:[%s169 + $0x70] sm:$0xff]
      %v192 = vld [vmem:[%s169 + $0x78] sm:$0xff]
      %v193 = vld [vmem:[%s169 + $0x80] sm:$0xff]
      %v194 = vld [vmem:[%s169 + $0x88] sm:$0xff]
      %v195 = vld [vmem:[%s169 + $0x90] sm:$0xff]
      %v196 = vld [vmem:[%s169 + $0x98] sm:$0xff]
      %v197 = vld [vmem:[%s169 + $0xa0] sm:$0xff]
      %v198 = vld [vmem:[%s169 + $0xa8] sm:$0xff]
      %v199 = vld [vmem:[%s169 + $0xb0] sm:$0xff]
      %v200 = vld [vmem:[%s169 + $0xb8] sm:$0xff]
      %v201 = vld [vmem:[%s169 + $0xc0] sm:$0xff]
      %v202 = vld [vmem:[%s169 + $0xc8] sm:$0xff]
      %v203 = vld [vmem:[%s169 + $0xd0] sm:$0xff]
      %v204 = vld [vmem:[%s169 + $0xd8] sm:$0xff]
      %v205 = vld [vmem:[%s169 + $0xe0] sm:$0xff]
      %v206 = vld [vmem:[%s169 + $0xe8] sm:$0xff]
      %v207 = vld [vmem:[%s169 + $0xf0] sm:$0xff]
      %v208 = vld [vmem:[%s169 + $0xf8] sm:$0xff]
      %v209 = vld [vmem:[%s169 + $0x100] sm:$0xff]
      %v210 = vld [vmem:[%s169 + $0x108] sm:$0xff]
      %v211 = vld [vmem:[%s169 + $0x110] sm:$0xff]
      %v212 = vld [vmem:[%s169 + $0x118] sm:$0xff]
      %v213 = vld [vmem:[%s169 + $0x120] sm:$0xff]
      %v214 = vld [vmem:[%s169 + $0x128] sm:$0xff]
      %v215 = vld [vmem:[%s169 + $0x130] sm:$0xff]
      %v216 = vld [vmem:[%s169 + $0x138] sm:$0xff]
      %v217 = vld [vmem:[%s169 + $0x140] sm:$0xff]
      %v218 = vld [vmem:[%s169 + $0x148] sm:$0xff]
      %v219 = vld [vmem:[%s169 + $0x150] sm:$0xff]
      %v220 = vld [vmem:[%s169 + $0x158] sm:$0xff]
      %v221 = vld [vmem:[%s169 + $0x160] sm:$0xff]
      %v222 = vld [vmem:[%s169 + $0x168] sm:$0xff]
      %v223 = vld [vmem:[%s169 + $0x170] sm:$0xff]
      %v224 = vld [vmem:[%s169 + $0x178] sm:$0xff]
      %v225 = vld [vmem:[%s169 + $0x180] sm:$0xff]
      %v226 = vld [vmem:[%s169 + $0x188] sm:$0xff]
      %v227 = vld [vmem:[%s169 + $0x190] sm:$0xff]
      %v228 = vld [vmem:[%s169 + $0x198] sm:$0xff]
      %v229 = vld [vmem:[%s169 + $0x1a0] sm:$0xff]
      %v230 = vld [vmem:[%s169 + $0x1a8] sm:$0xff]
      %v231 = vld [vmem:[%s169 + $0x1b0] sm:$0xff]
      %v232 = vld [vmem:[%s169 + $0x1b8] sm:$0xff]
      %v233 = vld [vmem:[%s169 + $0x1c0] sm:$0xff]
      %v234 = vld [vmem:[%s169 + $0x1c8] sm:$0xff]
      %v235 = vld [vmem:[%s169 + $0x1d0] sm:$0xff]
      %v236 = vld [vmem:[%s169 + $0x1d8] sm:$0xff]
      %v237 = vld [vmem:[%s169 + $0x1e0] sm:$0xff]
      %v238 = vld [vmem:[%s169 + $0x1e8] sm:$0xff]
      %v239 = vld [vmem:[%s169 + $0x1f0] sm:$0xff]
      %v240 = vld [vmem:[%s169 + $0x1f8] sm:$0xff]
      %v241 = vld [vmem:[%s169 + $0x200] sm:$0xff]
      %v242 = vld [vmem:[%s169 + $0x208] sm:$0xff]
      %v243 = vld [vmem:[%s169 + $0x210] sm:$0xff]
      %v244 = vld [vmem:[%s169 + $0x218] sm:$0xff]
      %v245 = vld [vmem:[%s169 + $0x220] sm:$0xff]
      %v246 = vld [vmem:[%s169 + $0x228] sm:$0xff]
      %v247 = vld [vmem:[%s169 + $0x230] sm:$0xff]
      %v248 = vld [vmem:[%s169 + $0x238] sm:$0xff]
      %v249 = vld [vmem:[%s169 + $0x240] sm:$0xff]
      %v250 = vld [vmem:[%s169 + $0x248] sm:$0xff]
      %v251 = vld [vmem:[%s169 + $0x250] sm:$0xff]
      %v252 = vld [vmem:[%s169 + $0x258] sm:$0xff]
      %v253 = vld [vmem:[%s169 + $0x260] sm:$0xff]
      %v254 = vld [vmem:[%s169 + $0x268] sm:$0xff]
      %v255 = vld [vmem:[%s169 + $0x270] sm:$0xff]
      %v256 = vld [vmem:[%s169 + $0x278] sm:$0xff]
      %v257 = vld [vmem:[%s169 + $0x280] sm:$0xff]
      %v258 = vld [vmem:[%s169 + $0x288] sm:$0xff]
      %v259 = vld [vmem:[%s169 + $0x290] sm:$0xff]
      %v260 = vld [vmem:[%s169 + $0x298] sm:$0xff]
      %v261 = vld [vmem:[%s169 + $0x2a0] sm:$0xff]
      %v262 = vld [vmem:[%s169 + $0x2a8] sm:$0xff]
      %v263 = vld [vmem:[%s169 + $0x2b0] sm:$0xff]
      %v264 = vld [vmem:[%s169 + $0x2b8] sm:$0xff]
      %v265 = vld [vmem:[%s169 + $0x2c0] sm:$0xff]
      %v266 = vld [vmem:[%s169 + $0x2c8] sm:$0xff]
      %v267 = vld [vmem:[%s169 + $0x2d0] sm:$0xff]
      %v268 = vld [vmem:[%s169 + $0x2d8] sm:$0xff]
      %v269 = vld [vmem:[%s169 + $0x2e0] sm:$0xff]
      %v270 = vld [vmem:[%s169 + $0x2e8] sm:$0xff]
      %v271 = vld [vmem:[%s169 + $0x2f0] sm:$0xff]
      %v272 = vld [vmem:[%s169 + $0x2f8] sm:$0xff]
      %v273 = vld [vmem:[%s169 + $0x300] sm:$0xff]
      %v274 = vld [vmem:[%s169 + $0x308] sm:$0xff]
      %v275 = vld [vmem:[%s169 + $0x310] sm:$0xff]
      %v276 = vld [vmem:[%s169 + $0x318] sm:$0xff]
      %v277 = vld [vmem:[%s169 + $0x320] sm:$0xff]
      %v278 = vld [vmem:[%s169 + $0x328] sm:$0xff]
      %v279 = vld [vmem:[%s169 + $0x330] sm:$0xff]
      %v280 = vld [vmem:[%s169 + $0x338] sm:$0xff]
      %v281 = vld [vmem:[%s169 + $0x340] sm:$0xff]
      %v282 = vld [vmem:[%s169 + $0x348] sm:$0xff]
      %v283 = vld [vmem:[%s169 + $0x350] sm:$0xff]
      %v284 = vld [vmem:[%s169 + $0x358] sm:$0xff]
      %v285 = vld [vmem:[%s169 + $0x360] sm:$0xff]
      %v286 = vld [vmem:[%s169 + $0x368] sm:$0xff]
      %v287 = vld [vmem:[%s169 + $0x370] sm:$0xff]
      %v288 = vld [vmem:[%s169 + $0x378] sm:$0xff]
      %v289 = vld [vmem:[%s169 + $0x380] sm:$0xff]
      %v290 = vld [vmem:[%s169 + $0x388] sm:$0xff]
      %v291 = vld [vmem:[%s169 + $0x390] sm:$0xff]
      %v292 = vld [vmem:[%s169 + $0x398] sm:$0xff]
      %v293 = vld [vmem:[%s169 + $0x3a0] sm:$0xff]
      %v294 = vld [vmem:[%s169 + $0x3a8] sm:$0xff]
      %v295 = vld [vmem:[%s169 + $0x3b0] sm:$0xff]
      %v296 = vld [vmem:[%s169 + $0x3b8] sm:$0xff]
      %v297 = vld [vmem:[%s169 + $0x3c0] sm:$0xff]
      %v298 = vld [vmem:[%s169 + $0x3c8] sm:$0xff]
      %v299 = vld [vmem:[%s169 + $0x3d0] sm:$0xff]
      %v300 = vld [vmem:[%s1] sm:$0xff]
      %v301 = vld [vmem:[%s1 + $0x8] sm:$0xff]
      %v302 = vld [vmem:[%s1 + $0x10] sm:$0xff]
      %v303 = vld [vmem:[%s1 + $0x18] sm:$0xff]
      %v304 = vld [vmem:[%s1 + $0x20] sm:$0xff]
      %v305 = vld [vmem:[%s1 + $0x28] sm:$0xff]
      %v306 = vld [vmem:[%s1 + $0x30] sm:$0xff]
      %v307 = vld [vmem:[%s1 + $0x38] sm:$0xff]
      %v308 = vld [vmem:[%s1 + $0x40] sm:$0xff]
      %v309 = vld [vmem:[%s1 + $0x48] sm:$0xff]
      %v310 = vld [vmem:[%s1 + $0x50] sm:$0xff]
      %v311 = vld [vmem:[%s1 + $0x58] sm:$0xff]
      %v312 = vld [vmem:[%s1 + $0x60] sm:$0xff]
      %v313 = vld [vmem:[%s1 + $0x68] sm:$0xff]
      %v314 = vld [vmem:[%s1 + $0x70] sm:$0xff]
      %v315 = vld [vmem:[%s1 + $0x78] sm:$0xff]
      %v316 = vld [vmem:[%s1 + $0x80] sm:$0xff]
      %v317 = vld [vmem:[%s1 + $0x88] sm:$0xff]
      %v318 = vld [vmem:[%s1 + $0x90] sm:$0xff]
      %v319 = vld [vmem:[%s1 + $0x98] sm:$0xff]
      %v320 = vld [vmem:[%s1 + $0xa0] sm:$0xff]
      %v321 = vld [vmem:[%s1 + $0xa8] sm:$0xff]
      %v322 = vld [vmem:[%s1 + $0xb0] sm:$0xff]
      %v323 = vld [vmem:[%s1 + $0xb8] sm:$0xff]
      %v324 = vld [vmem:[%s1 + $0xc0] sm:$0xff]
      %v325 = vld [vmem:[%s1 + $0xc8] sm:$0xff]
      %v326 = vld [vmem:[%s1 + $0xd0] sm:$0xff]
      %v327 = vld [vmem:[%s1 + $0xd8] sm:$0xff]
      %v328 = vld [vmem:[%s1 + $0xe0] sm:$0xff]
      %v329 = vld [vmem:[%s1 + $0xe8] sm:$0xff]
      %v330 = vld [vmem:[%s1 + $0xf0] sm:$0xff]
      %v331 = vld [vmem:[%s1 + $0xf8] sm:$0xff]
      %v332 = vld [vmem:[%s1 + $0x100] sm:$0xff]
      %v333 = vld [vmem:[%s1 + $0x108] sm:$0xff]
      %v334 = vld [vmem:[%s1 + $0x110] sm:$0xff]
      %v335 = vld [vmem:[%s1 + $0x118] sm:$0xff]
      %v336 = vld [vmem:[%s2] sm:$0x1]
      %v338 = vlaneseq
      %v339 = vshrl.u32 %v338, 7
      %v340 = vsub.s32 0, %v339
      %v341 = vrot.slane %v336, %v340
      %vm343 = vcmask 261120
      %v345 = vsel %vm343, %v179, 0
      %v348 = vsel %vm343, %v182, 0
      %v351 = vsel %vm343, %v185, 0
      %v354 = vsel %vm343, %v188, 0
      %v357 = vsel %vm343, %v191, 0
      %v360 = vsel %vm343, %v194, 0
      %v363 = vsel %vm343, %v197, 0
      %v366 = vsel %vm343, %v200, 0
      %v369 = vsel %vm343, %v203, 0
      %v372 = vsel %vm343, %v206, 0
      %v375 = vsel %vm343, %v209, 0
      %v378 = vsel %vm343, %v212, 0
      %v381 = vsel %vm343, %v215, 0
      %v384 = vsel %vm343, %v218, 0
      %v387 = vsel %vm343, %v221, 0
      %v390 = vsel %vm343, %v224, 0
      %v393 = vsel %vm343, %v227, 0
      %v396 = vsel %vm343, %v230, 0
      %v399 = vsel %vm343, %v233, 0
      %v402 = vsel %vm343, %v236, 0
      %v405 = vsel %vm343, %v239, 0
      %v408 = vsel %vm343, %v242, 0
      %v411 = vsel %vm343, %v245, 0
      %v414 = vsel %vm343, %v248, 0
      %v417 = vsel %vm343, %v251, 0
      %v420 = vsel %vm343, %v254, 0
      %v423 = vsel %vm343, %v257, 0
      %v426 = vsel %vm343, %v260, 0
      %v429 = vsel %vm343, %v263, 0
      %v432 = vsel %vm343, %v266, 0
      %v435 = vsel %vm343, %v269, 0
      %v438 = vsel %vm343, %v272, 0
      %v441 = vsel %vm343, %v275, 0
      %v444 = vsel %vm343, %v278, 0
      %v447 = vsel %vm343, %v281, 0
      %v450 = vsel %vm343, %v284, 0
      %v453 = vsel %vm343, %v287, 0
      %v456 = vsel %vm343, %v290, 0
      %v459 = vsel %vm343, %v293, 0
      %v462 = vsel %vm343, %v296, 0
      %v465 = vsel %vm343, %v299, 0
      %467 = vmatprep.subr.mxu0 0.0
      %468 = vmatpush1.msra.mxu0 %v300
      %469 = vmatprep.subr.mxu0 0.0
      %470 = vmatpush1.msra.mxu0 %v301
      %471 = vmatprep.subr.mxu0 0.0
      %472 = vmatpush1.msra.mxu0 %v302
      %473 = vmatprep.subr.mxu0 0.0
      %474 = vmatpush1.msra.mxu0 %v303
      %475 = vmatprep.subr.mxu0 0.0
      %476 = vmatpush1.msra.mxu0 %v304
      %477 = vmatprep.subr.mxu0 0.0
      %478 = vmatpush1.msra.mxu0 %v305
      %479 = vmatprep.subr.mxu0 0.0
      %480 = vmatpush1.msra.mxu0 %v306
      %481 = vmatprep.subr.mxu0 0.0
      %482 = vmatpush1.msra.mxu0 %v307
      %483 = vmatprep.subr.mxu0 0.0
      %484 = vmatpush1.msra.mxu0 %v308
      %485 = vmatprep.subr.mxu0 0.0
      %486 = vmatpush1.msra.mxu0 %v309
      %487 = vmatprep.subr.mxu0 0.0
      %488 = vmatpush1.msra.mxu0 %v310
      %489 = vmatprep.subr.mxu0 0.0
      %490 = vmatpush1.msra.mxu0 %v311
      %491 = vmatprep.subr.mxu0 0.0
      %492 = vmatpush1.msra.mxu0 %v312
      %493 = vmatprep.subr.mxu0 0.0
      %494 = vmatpush1.msra.mxu0 %v313
      %495 = vmatprep.subr.mxu0 0.0
      %496 = vmatpush1.msra.mxu0 %v314
      %497 = vmatprep.subr.mxu0 0.0
      %498 = vmatpush1.msra.mxu0 %v315
      %499 = vmatprep.subr.mxu0 0.0
      %500 = vmatpush1.msra.mxu0 %v316
      %501 = vmatprep.subr.mxu0 0.0
      %502 = vmatpush1.msra.mxu0 %v317
      %503 = vmatprep.subr.mxu0 0.0
      %504 = vmatpush1.msra.mxu0 %v318
      %505 = vmatprep.subr.mxu0 0.0
      %506 = vmatpush1.msra.mxu0 %v319
      %507 = vmatprep.subr.mxu0 0.0
      %508 = vmatpush1.msra.mxu0 %v320
      %509 = vmatprep.subr.mxu0 0.0
      %510 = vmatpush1.msra.mxu0 %v321
      %511 = vmatprep.subr.mxu0 0.0
      %512 = vmatpush1.msra.mxu0 %v322
      %513 = vmatprep.subr.mxu0 0.0
      %514 = vmatpush1.msra.mxu0 %v323
      %515 = vmatprep.subr.mxu0 0.0
      %516 = vmatpush1.msra.mxu0 %v324
      %517 = vmatprep.subr.mxu0 0.0
      %518 = vmatpush1.msra.mxu0 %v325
      %519 = vmatprep.subr.mxu0 0.0
      %520 = vmatpush1.msra.mxu0 %v326
      %521 = vmatprep.subr.mxu0 0.0
      %522 = vmatpush1.msra.mxu0 %v327
      %523 = vmatprep.subr.mxu0 0.0
      %524 = vmatpush1.msra.mxu0 %v328
      %525 = vmatprep.subr.mxu0 0.0
      %526 = vmatpush1.msra.mxu0 %v329
      %527 = vmatprep.subr.mxu0 0.0
      %528 = vmatpush1.msra.mxu0 %v330
      %529 = vmatprep.subr.mxu0 0.0
      %530 = vmatpush1.msra.mxu0 %v331
      %531 = vmatprep.mubr.f32.mxu0 %v178
      %532 = vmatmul.mubr.f32.gmra.mrb[0].mxu0 %v177
      %v533 = vpop.f32.mrb[0].mxu0
      %v534 = vadd.f32 %v341, %v533
      %v535 = vpop.f32.mrb[0].mxu0
      %536 = vmatprep.mubr.f32.mxu0 %v181
      %537 = vmatmul.mubr.f32.gmra.mrb[0].mxu0 %v180
      %v538 = vpop.f32.mrb[0].mxu0
      %v539 = vadd.f32 %v341, %v538
      %v540 = vpop.f32.mrb[0].mxu0
      %541 = vmatprep.mubr.f32.mxu0 %v184
      %542 = vmatmul.mubr.f32.gmra.mrb[0].mxu0 %v183
      %v543 = vpop.f32.mrb[0].mxu0
      %v544 = vadd.f32 %v341, %v543
      %v545 = vpop.f32.mrb[0].mxu0
      %546 = vmatprep.mubr.f32.mxu0 %v187
      %547 = vmatmul.mubr.f32.gmra.mrb[0].mxu0 %v186
      %v548 = vpop.f32.mrb[0].mxu0
      %v549 = vadd.f32 %v341, %v548
      %v550 = vpop.f32.mrb[0].mxu0
      %551 = vmatprep.mubr.f32.mxu0 %v190
      %552 = vmatmul.mubr.f32.gmra.mrb[0].mxu0 %v189
      %v553 = vpop.f32.mrb[0].mxu0
      %v554 = vadd.f32 %v341, %v553
      %v555 = vpop.f32.mrb[0].mxu0
      %556 = vmatprep.mubr.f32.mxu0 %v193
      %557 = vmatmul.mubr.f32.gmra.mrb[0].mxu0 %v192
      %v558 = vpop.f32.mrb[0].mxu0
      %v559 = vadd.f32 %v341, %v558
      %v560 = vpop.f32.mrb[0].mxu0
      %561 = vmatprep.mubr.f32.mxu0 %v196
      %562 = vmatmul.mubr.f32.gmra.mrb[0].mxu0 %v195
      %v563 = vpop.f32.mrb[0].mxu0
      %v564 = vadd.f32 %v341, %v563
      %v565 = vpop.f32.mrb[0].mxu0
      %566 = vmatprep.mubr.f32.mxu0 %v199
      %567 = vmatmul.mubr.f32.gmra.mrb[0].mxu0 %v198
      %v568 = vpop.f32.mrb[0].mxu0
      %v569 = vadd.f32 %v341, %v568
      %v570 = vpop.f32.mrb[0].mxu0
      %571 = vmatprep.mubr.f32.mxu0 %v202
      %572 = vmatmul.mubr.f32.gmra.mrb[0].mxu0 %v201
      %v573 = vpop.f32.mrb[0].mxu0
      %v574 = vadd.f32 %v341, %v573
      %v575 = vpop.f32.mrb[0].mxu0
      %576 = vmatprep.mubr.f32.mxu0 %v205
      %577 = vmatmul.mubr.f32.gmra.mrb[0].mxu0 %v204
      %v578 = vpop.f32.mrb[0].mxu0
      %v579 = vadd.f32 %v341, %v578
      %v580 = vpop.f32.mrb[0].mxu0
      %581 = vmatprep.mubr.f32.mxu0 %v208
      %582 = vmatmul.mubr.f32.gmra.mrb[0].mxu0 %v207
      %v583 = vpop.f32.mrb[0].mxu0
      %v584 = vadd.f32 %v341, %v583
      %v585 = vpop.f32.mrb[0].mxu0
      %586 = vmatprep.mubr.f32.mxu0 %v211
      %587 = vmatmul.mubr.f32.gmra.mrb[0].mxu0 %v210
      %v588 = vpop.f32.mrb[0].mxu0
      %v589 = vadd.f32 %v341, %v588
      %v590 = vpop.f32.mrb[0].mxu0
      %591 = vmatprep.mubr.f32.mxu0 %v214
      %592 = vmatmul.mubr.f32.gmra.mrb[0].mxu0 %v213
      %v593 = vpop.f32.mrb[0].mxu0
      %v594 = vadd.f32 %v341, %v593
      %v595 = vpop.f32.mrb[0].mxu0
      %596 = vmatprep.mubr.f32.mxu0 %v217
      %597 = vmatmul.mubr.f32.gmra.mrb[0].mxu0 %v216
      %v598 = vpop.f32.mrb[0].mxu0
      %v599 = vadd.f32 %v341, %v598
      %v600 = vpop.f32.mrb[0].mxu0
      %601 = vmatprep.mubr.f32.mxu0 %v220
      %602 = vmatmul.mubr.f32.gmra.mrb[0].mxu0 %v219
      %v603 = vpop.f32.mrb[0].mxu0
      %v604 = vadd.f32 %v341, %v603
      %v605 = vpop.f32.mrb[0].mxu0
      %606 = vmatprep.mubr.f32.mxu0 %v223
      %607 = vmatmul.mubr.f32.gmra.mrb[0].mxu0 %v222
      %v608 = vpop.f32.mrb[0].mxu0
      %v609 = vadd.f32 %v341, %v608
      %v610 = vpop.f32.mrb[0].mxu0
      %611 = vmatprep.mubr.f32.mxu0 %v226
      %612 = vmatmul.mubr.f32.gmra.mrb[0].mxu0 %v225
      %v613 = vpop.f32.mrb[0].mxu0
      %v614 = vadd.f32 %v341, %v613
      %v615 = vpop.f32.mrb[0].mxu0
      %616 = vmatprep.mubr.f32.mxu0 %v229
      %617 = vmatmul.mubr.f32.gmra.mrb[0].mxu0 %v228
      %v618 = vpop.f32.mrb[0].mxu0
      %v619 = vadd.f32 %v341, %v618
      %v620 = vpop.f32.mrb[0].mxu0
      %621 = vmatprep.mubr.f32.mxu0 %v232
      %622 = vmatmul.mubr.f32.gmra.mrb[0].mxu0 %v231
      %v623 = vpop.f32.mrb[0].mxu0
      %v624 = vadd.f32 %v341, %v623
      %v625 = vpop.f32.mrb[0].mxu0
      %626 = vmatprep.mubr.f32.mxu0 %v235
      %627 = vmatmul.mubr.f32.gmra.mrb[0].mxu0 %v234
      %v628 = vpop.f32.mrb[0].mxu0
      %v629 = vadd.f32 %v341, %v628
      %v630 = vpop.f32.mrb[0].mxu0
      %631 = vmatprep.mubr.f32.mxu0 %v238
      %632 = vmatmul.mubr.f32.gmra.mrb[0].mxu0 %v237
      %v633 = vpop.f32.mrb[0].mxu0
      %v634 = vadd.f32 %v341, %v633
      %v635 = vpop.f32.mrb[0].mxu0
      %636 = vmatprep.mubr.f32.mxu0 %v241
      %637 = vmatmul.mubr.f32.gmra.mrb[0].mxu0 %v240
      %v638 = vpop.f32.mrb[0].mxu0
      %v639 = vadd.f32 %v341, %v638
      %v640 = vpop.f32.mrb[0].mxu0
      %641 = vmatprep.mubr.f32.mxu0 %v244
      %642 = vmatmul.mubr.f32.gmra.mrb[0].mxu0 %v243
      %v643 = vpop.f32.mrb[0].mxu0
      %v644 = vadd.f32 %v341, %v643
      %v645 = vpop.f32.mrb[0].mxu0
      %646 = vmatprep.mubr.f32.mxu0 %v247
      %647 = vmatmul.mubr.f32.gmra.mrb[0].mxu0 %v246
      %v648 = vpop.f32.mrb[0].mxu0
      %v649 = vadd.f32 %v341, %v648
      %v650 = vpop.f32.mrb[0].mxu0
      %651 = vmatprep.mubr.f32.mxu0 %v250
      %652 = vmatmul.mubr.f32.gmra.mrb[0].mxu0 %v249
      %v653 = vpop.f32.mrb[0].mxu0
      %v654 = vadd.f32 %v341, %v653
      %v655 = vpop.f32.mrb[0].mxu0
      %656 = vmatprep.mubr.f32.mxu0 %v253
      %657 = vmatmul.mubr.f32.gmra.mrb[0].mxu0 %v252
      %v658 = vpop.f32.mrb[0].mxu0
      %v659 = vadd.f32 %v341, %v658
      %v660 = vpop.f32.mrb[0].mxu0
      %661 = vmatprep.mubr.f32.mxu0 %v256
      %662 = vmatmul.mubr.f32.gmra.mrb[0].mxu0 %v255
      %v663 = vpop.f32.mrb[0].mxu0
      %v664 = vadd.f32 %v341, %v663
      %v665 = vpop.f32.mrb[0].mxu0
      %666 = vmatprep.mubr.f32.mxu0 %v259
      %667 = vmatmul.mubr.f32.gmra.mrb[0].mxu0 %v258
      %v668 = vpop.f32.mrb[0].mxu0
      %v669 = vadd.f32 %v341, %v668
      %v670 = vpop.f32.mrb[0].mxu0
      %671 = vmatprep.mubr.f32.mxu0 %v262
      %672 = vmatmul.mubr.f32.gmra.mrb[0].mxu0 %v261
      %v673 = vpop.f32.mrb[0].mxu0
      %v674 = vadd.f32 %v341, %v673
      %v675 = vpop.f32.mrb[0].mxu0
      %676 = vmatprep.mubr.f32.mxu0 %v265
      %677 = vmatmul.mubr.f32.gmra.mrb[0].mxu0 %v264
      %v678 = vpop.f32.mrb[0].mxu0
      %v679 = vadd.f32 %v341, %v678
      %v680 = vpop.f32.mrb[0].mxu0
      %681 = vmatprep.mubr.f32.mxu0 %v268
      %682 = vmatmul.mubr.f32.gmra.mrb[0].mxu0 %v267
      %v683 = vpop.f32.mrb[0].mxu0
      %v684 = vadd.f32 %v341, %v683
      %v685 = vpop.f32.mrb[0].mxu0
      %686 = vmatprep.mubr.f32.mxu0 %v271
      %687 = vmatmul.mubr.f32.gmra.mrb[0].mxu0 %v270
      %v688 = vpop.f32.mrb[0].mxu0
      %v689 = vadd.f32 %v341, %v688
      %v690 = vpop.f32.mrb[0].mxu0
      %691 = vmatprep.mubr.f32.mxu0 %v274
      %692 = vmatmul.mubr.f32.gmra.mrb[0].mxu0 %v273
      %v693 = vpop.f32.mrb[0].mxu0
      %v694 = vadd.f32 %v341, %v693
      %v695 = vpop.f32.mrb[0].mxu0
      %696 = vmatprep.mubr.f32.mxu0 %v277
      %697 = vmatmul.mubr.f32.gmra.mrb[0].mxu0 %v276
      %v698 = vpop.f32.mrb[0].mxu0
      %v699 = vadd.f32 %v341, %v698
      %v700 = vpop.f32.mrb[0].mxu0
      %701 = vmatprep.mubr.f32.mxu0 %v280
      %702 = vmatmul.mubr.f32.gmra.mrb[0].mxu0 %v279
      %v703 = vpop.f32.mrb[0].mxu0
      %v704 = vadd.f32 %v341, %v703
      %v705 = vpop.f32.mrb[0].mxu0
      %706 = vmatprep.mubr.f32.mxu0 %v283
      %707 = vmatmul.mubr.f32.gmra.mrb[0].mxu0 %v282
      %v708 = vpop.f32.mrb[0].mxu0
      %v709 = vadd.f32 %v341, %v708
      %v710 = vpop.f32.mrb[0].mxu0
      %711 = vmatprep.mubr.f32.mxu0 %v286
      %712 = vmatmul.mubr.f32.gmra.mrb[0].mxu0 %v285
      %v713 = vpop.f32.mrb[0].mxu0
      %v714 = vadd.f32 %v341, %v713
      %v715 = vpop.f32.mrb[0].mxu0
      %716 = vmatprep.mubr.f32.mxu0 %v289
      %717 = vmatmul.mubr.f32.gmra.mrb[0].mxu0 %v288
      %v718 = vpop.f32.mrb[0].mxu0
      %v719 = vadd.f32 %v341, %v718
      %v720 = vpop.f32.mrb[0].mxu0
      %721 = vmatprep.mubr.f32.mxu0 %v292
      %722 = vmatmul.mubr.f32.gmra.mrb[0].mxu0 %v291
      %v723 = vpop.f32.mrb[0].mxu0
      %v724 = vadd.f32 %v341, %v723
      %v725 = vpop.f32.mrb[0].mxu0
      %726 = vmatprep.mubr.f32.mxu0 %v295
      %727 = vmatmul.mubr.f32.gmra.mrb[0].mxu0 %v294
      %v728 = vpop.f32.mrb[0].mxu0
      %v729 = vadd.f32 %v341, %v728
      %v730 = vpop.f32.mrb[0].mxu0
      %731 = vmatprep.mubr.f32.mxu0 %v298
      %732 = vmatmul.mubr.f32.gmra.mrb[0].mxu0 %v297
      %v733 = vpop.f32.mrb[0].mxu0
      %v734 = vadd.f32 %v341, %v733
      %v735 = vpop.f32.mrb[0].mxu0
      %736 = vdwg.mxu0
      %737 = vmatprep.subr.mxu0 0.0
      %738 = vmatpush1.msra.mxu0 %v332
      %739 = vmatprep.subr.mxu0 0.0
      %740 = vmatpush1.msra.mxu0 %v333
      %741 = vmatprep.subr.mxu0 0.0
      %742 = vmatpush1.msra.mxu0 %v334
      %743 = vmatprep.subr.mxu0 0.0
      %744 = vmatpush1.msra.mxu0 %v335
      %745 = vmatprep.subr.mxu0 0.0
      %746 = vmatpush1.msra.mxu0 0.0
      %747 = vmatprep.subr.mxu0 0.0
      %748 = vmatpush1.msra.mxu0 0.0
      %749 = vmatprep.subr.mxu0 0.0
      %750 = vmatpush1.msra.mxu0 0.0
      %751 = vmatprep.subr.mxu0 0.0
      %752 = vmatpush1.msra.mxu0 0.0
      %753 = vmatprep.subr.mxu0 0.0
      %754 = vmatpush1.msra.mxu0 0.0
      %755 = vmatprep.subr.mxu0 0.0
      %756 = vmatpush1.msra.mxu0 0.0
      %757 = vmatprep.subr.mxu0 0.0
      %758 = vmatpush1.msra.mxu0 0.0
      %759 = vmatprep.subr.mxu0 0.0
      %760 = vmatpush1.msra.mxu0 0.0
      %761 = vmatprep.subr.mxu0 0.0
      %762 = vmatpush1.msra.mxu0 0.0
      %763 = vmatprep.subr.mxu0 0.0
      %764 = vmatpush1.msra.mxu0 0.0
      %765 = vmatprep.subr.mxu0 0.0
      %766 = vmatpush1.msra.mxu0 0.0
      %767 = vmatprep.subr.mxu0 0.0
      %768 = vmatpush1.msra.mxu0 0.0
      %769 = vmatprep.subr.mxu0 0.0
      %770 = vmatpush1.msra.mxu0 0.0
      %771 = vmatprep.subr.mxu0 0.0
      %772 = vmatpush1.msra.mxu0 0.0
      %773 = vmatprep.subr.mxu0 0.0
      %774 = vmatpush1.msra.mxu0 0.0
      %775 = vmatprep.subr.mxu0 0.0
      %776 = vmatpush1.msra.mxu0 0.0
      %777 = vmatprep.subr.mxu0 0.0
      %778 = vmatpush1.msra.mxu0 0.0
      %779 = vmatprep.subr.mxu0 0.0
      %780 = vmatpush1.msra.mxu0 0.0
      %781 = vmatprep.subr.mxu0 0.0
      %782 = vmatpush1.msra.mxu0 0.0
      %783 = vmatprep.subr.mxu0 0.0
      %784 = vmatpush1.msra.mxu0 0.0
      %785 = vmatprep.subr.mxu0 0.0
      %786 = vmatpush1.msra.mxu0 0.0
      %787 = vmatprep.subr.mxu0 0.0
      %788 = vmatpush1.msra.mxu0 0.0
      %789 = vmatprep.subr.mxu0 0.0
      %790 = vmatpush1.msra.mxu0 0.0
      %791 = vmatprep.subr.mxu0 0.0
      %792 = vmatpush1.msra.mxu0 0.0
      %793 = vmatprep.subr.mxu0 0.0
      %794 = vmatpush1.msra.mxu0 0.0
      %795 = vmatprep.subr.mxu0 0.0
      %796 = vmatpush1.msra.mxu0 0.0
      %797 = vmatprep.subr.mxu0 0.0
      %798 = vmatpush1.msra.mxu0 0.0
      %799 = vmatprep.subr.mxu0 0.0
      %800 = vmatpush1.msra.mxu0 0.0
      %801 = vmatprep.mubr.f32.mxu0 0.0
      %802 = vmatmul.mubr.f32.gmra.mrb[0].mxu0 %v345
      %v803 = vpop.f32.mrb[0].mxu0
      %v804 = vadd.f32 %v534, %v803
      %v805 = vpop.f32.mrb[0].mxu0
      %806 = vmatprep.mubr.f32.mxu0 0.0
      %807 = vmatmul.mubr.f32.gmra.mrb[0].mxu0 %v348
      %v808 = vpop.f32.mrb[0].mxu0
      %v809 = vadd.f32 %v539, %v808
      %v810 = vpop.f32.mrb[0].mxu0
      %811 = vmatprep.mubr.f32.mxu0 0.0
      %812 = vmatmul.mubr.f32.gmra.mrb[0].mxu0 %v351
      %v813 = vpop.f32.mrb[0].mxu0
      %v814 = vadd.f32 %v544, %v813
      %v815 = vpop.f32.mrb[0].mxu0
      %816 = vmatprep.mubr.f32.mxu0 0.0
      %817 = vmatmul.mubr.f32.gmra.mrb[0].mxu0 %v354
      %v818 = vpop.f32.mrb[0].mxu0
      %v819 = vadd.f32 %v549, %v818
      %v820 = vpop.f32.mrb[0].mxu0
      %821 = vmatprep.mubr.f32.mxu0 0.0
      %822 = vmatmul.mubr.f32.gmra.mrb[0].mxu0 %v357
      %v823 = vpop.f32.mrb[0].mxu0
      %v824 = vadd.f32 %v554, %v823
      %v825 = vpop.f32.mrb[0].mxu0
      %826 = vmatprep.mubr.f32.mxu0 0.0
      %827 = vmatmul.mubr.f32.gmra.mrb[0].mxu0 %v360
      %v828 = vpop.f32.mrb[0].mxu0
      %v829 = vadd.f32 %v559, %v828
      %v830 = vpop.f32.mrb[0].mxu0
      %831 = vmatprep.mubr.f32.mxu0 0.0
      %832 = vmatmul.mubr.f32.gmra.mrb[0].mxu0 %v363
      %v833 = vpop.f32.mrb[0].mxu0
      %v834 = vadd.f32 %v564, %v833
      %v835 = vpop.f32.mrb[0].mxu0
      %836 = vmatprep.mubr.f32.mxu0 0.0
      %837 = vmatmul.mubr.f32.gmra.mrb[0].mxu0 %v366
      %v838 = vpop.f32.mrb[0].mxu0
      %v839 = vadd.f32 %v569, %v838
      %v840 = vpop.f32.mrb[0].mxu0
      %841 = vmatprep.mubr.f32.mxu0 0.0
      %842 = vmatmul.mubr.f32.gmra.mrb[0].mxu0 %v369
      %v843 = vpop.f32.mrb[0].mxu0
      %v844 = vadd.f32 %v574, %v843
      %v845 = vpop.f32.mrb[0].mxu0
      %846 = vmatprep.mubr.f32.mxu0 0.0
      %847 = vmatmul.mubr.f32.gmra.mrb[0].mxu0 %v372
      %v848 = vpop.f32.mrb[0].mxu0
      %v849 = vadd.f32 %v579, %v848
      %v850 = vpop.f32.mrb[0].mxu0
      %851 = vmatprep.mubr.f32.mxu0 0.0
      %852 = vmatmul.mubr.f32.gmra.mrb[0].mxu0 %v375
      %v853 = vpop.f32.mrb[0].mxu0
      %v854 = vadd.f32 %v584, %v853
      %v855 = vpop.f32.mrb[0].mxu0
      %856 = vmatprep.mubr.f32.mxu0 0.0
      %857 = vmatmul.mubr.f32.gmra.mrb[0].mxu0 %v378
      %v858 = vpop.f32.mrb[0].mxu0
      %v859 = vadd.f32 %v589, %v858
      %v860 = vpop.f32.mrb[0].mxu0
      %861 = vmatprep.mubr.f32.mxu0 0.0
      %862 = vmatmul.mubr.f32.gmra.mrb[0].mxu0 %v381
      %v863 = vpop.f32.mrb[0].mxu0
      %v864 = vadd.f32 %v594, %v863
      %v865 = vpop.f32.mrb[0].mxu0
      %866 = vmatprep.mubr.f32.mxu0 0.0
      %867 = vmatmul.mubr.f32.gmra.mrb[0].mxu0 %v384
      %v868 = vpop.f32.mrb[0].mxu0
      %v869 = vadd.f32 %v599, %v868
      %v870 = vpop.f32.mrb[0].mxu0
      %871 = vmatprep.mubr.f32.mxu0 0.0
      %872 = vmatmul.mubr.f32.gmra.mrb[0].mxu0 %v387
      %v873 = vpop.f32.mrb[0].mxu0
      %v874 = vadd.f32 %v604, %v873
      %v875 = vpop.f32.mrb[0].mxu0
      %876 = vmatprep.mubr.f32.mxu0 0.0
      %877 = vmatmul.mubr.f32.gmra.mrb[0].mxu0 %v390
      %v878 = vpop.f32.mrb[0].mxu0
      %v879 = vadd.f32 %v609, %v878
      %v880 = vpop.f32.mrb[0].mxu0
      %881 = vmatprep.mubr.f32.mxu0 0.0
      %882 = vmatmul.mubr.f32.gmra.mrb[0].mxu0 %v393
      %v883 = vpop.f32.mrb[0].mxu0
      %v884 = vadd.f32 %v614, %v883
      %v885 = vpop.f32.mrb[0].mxu0
      %886 = vmatprep.mubr.f32.mxu0 0.0
      %887 = vmatmul.mubr.f32.gmra.mrb[0].mxu0 %v396
      %v888 = vpop.f32.mrb[0].mxu0
      %v889 = vadd.f32 %v619, %v888
      %v890 = vpop.f32.mrb[0].mxu0
      %891 = vmatprep.mubr.f32.mxu0 0.0
      %892 = vmatmul.mubr.f32.gmra.mrb[0].mxu0 %v399
      %v893 = vpop.f32.mrb[0].mxu0
      %v894 = vadd.f32 %v624, %v893
      %v895 = vpop.f32.mrb[0].mxu0
      %896 = vmatprep.mubr.f32.mxu0 0.0
      %897 = vmatmul.mubr.f32.gmra.mrb[0].mxu0 %v402
      %v898 = vpop.f32.mrb[0].mxu0
      %v899 = vadd.f32 %v629, %v898
      %v900 = vpop.f32.mrb[0].mxu0
      %901 = vmatprep.mubr.f32.mxu0 0.0
      %902 = vmatmul.mubr.f32.gmra.mrb[0].mxu0 %v405
      %v903 = vpop.f32.mrb[0].mxu0
      %v904 = vadd.f32 %v634, %v903
      %v905 = vpop.f32.mrb[0].mxu0
      %906 = vmatprep.mubr.f32.mxu0 0.0
      %907 = vmatmul.mubr.f32.gmra.mrb[0].mxu0 %v408
      %v908 = vpop.f32.mrb[0].mxu0
      %v909 = vadd.f32 %v639, %v908
      %v910 = vpop.f32.mrb[0].mxu0
      %911 = vmatprep.mubr.f32.mxu0 0.0
      %912 = vmatmul.mubr.f32.gmra.mrb[0].mxu0 %v411
      %v913 = vpop.f32.mrb[0].mxu0
      %v914 = vadd.f32 %v644, %v913
      %v915 = vpop.f32.mrb[0].mxu0
      %916 = vmatprep.mubr.f32.mxu0 0.0
      %917 = vmatmul.mubr.f32.gmra.mrb[0].mxu0 %v414
      %v918 = vpop.f32.mrb[0].mxu0
      %v919 = vadd.f32 %v649, %v918
      %v920 = vpop.f32.mrb[0].mxu0
      %921 = vmatprep.mubr.f32.mxu0 0.0
      %922 = vmatmul.mubr.f32.gmra.mrb[0].mxu0 %v417
      %v923 = vpop.f32.mrb[0].mxu0
      %v924 = vadd.f32 %v654, %v923
      %v925 = vpop.f32.mrb[0].mxu0
      %926 = vmatprep.mubr.f32.mxu0 0.0
      %927 = vmatmul.mubr.f32.gmra.mrb[0].mxu0 %v420
      %v928 = vpop.f32.mrb[0].mxu0
      %v929 = vadd.f32 %v659, %v928
      %v930 = vpop.f32.mrb[0].mxu0
      %931 = vmatprep.mubr.f32.mxu0 0.0
      %932 = vmatmul.mubr.f32.gmra.mrb[0].mxu0 %v423
      %v933 = vpop.f32.mrb[0].mxu0
      %v934 = vadd.f32 %v664, %v933
      %v935 = vpop.f32.mrb[0].mxu0
      %936 = vmatprep.mubr.f32.mxu0 0.0
      %937 = vmatmul.mubr.f32.gmra.mrb[0].mxu0 %v426
      %v938 = vpop.f32.mrb[0].mxu0
      %v939 = vadd.f32 %v669, %v938
      %v940 = vpop.f32.mrb[0].mxu0
      %941 = vmatprep.mubr.f32.mxu0 0.0
      %942 = vmatmul.mubr.f32.gmra.mrb[0].mxu0 %v429
      %v943 = vpop.f32.mrb[0].mxu0
      %v944 = vadd.f32 %v674, %v943
      %v945 = vpop.f32.mrb[0].mxu0
      %946 = vmatprep.mubr.f32.mxu0 0.0
      %947 = vmatmul.mubr.f32.gmra.mrb[0].mxu0 %v432
      %v948 = vpop.f32.mrb[0].mxu0
      %v949 = vadd.f32 %v679, %v948
      %v950 = vpop.f32.mrb[0].mxu0
      %951 = vmatprep.mubr.f32.mxu0 0.0
      %952 = vmatmul.mubr.f32.gmra.mrb[0].mxu0 %v435
      %v953 = vpop.f32.mrb[0].mxu0
      %v954 = vadd.f32 %v684, %v953
      %v955 = vpop.f32.mrb[0].mxu0
      %956 = vmatprep.mubr.f32.mxu0 0.0
      %957 = vmatmul.mubr.f32.gmra.mrb[0].mxu0 %v438
      %v958 = vpop.f32.mrb[0].mxu0
      %v959 = vadd.f32 %v689, %v958
      %v960 = vpop.f32.mrb[0].mxu0
      %961 = vmatprep.mubr.f32.mxu0 0.0
      %962 = vmatmul.mubr.f32.gmra.mrb[0].mxu0 %v441
      %v963 = vpop.f32.mrb[0].mxu0
      %v964 = vadd.f32 %v694, %v963
      %v965 = vpop.f32.mrb[0].mxu0
      %966 = vmatprep.mubr.f32.mxu0 0.0
      %967 = vmatmul.mubr.f32.gmra.mrb[0].mxu0 %v444
      %v968 = vpop.f32.mrb[0].mxu0
      %v969 = vadd.f32 %v699, %v968
      %v970 = vpop.f32.mrb[0].mxu0
      %971 = vmatprep.mubr.f32.mxu0 0.0
      %972 = vmatmul.mubr.f32.gmra.mrb[0].mxu0 %v447
      %v973 = vpop.f32.mrb[0].mxu0
      %v974 = vadd.f32 %v704, %v973
      %v975 = vpop.f32.mrb[0].mxu0
      %976 = vmatprep.mubr.f32.mxu0 0.0
      %977 = vmatmul.mubr.f32.gmra.mrb[0].mxu0 %v450
      %v978 = vpop.f32.mrb[0].mxu0
      %v979 = vadd.f32 %v709, %v978
      %v980 = vpop.f32.mrb[0].mxu0
      %981 = vmatprep.mubr.f32.mxu0 0.0
      %982 = vmatmul.mubr.f32.gmra.mrb[0].mxu0 %v453
      %v983 = vpop.f32.mrb[0].mxu0
      %v984 = vadd.f32 %v714, %v983
      %v985 = vpop.f32.mrb[0].mxu0
      %986 = vmatprep.mubr.f32.mxu0 0.0
      %987 = vmatmul.mubr.f32.gmra.mrb[0].mxu0 %v456
      %v988 = vpop.f32.mrb[0].mxu0
      %v989 = vadd.f32 %v719, %v988
      %v990 = vpop.f32.mrb[0].mxu0
      %991 = vmatprep.mubr.f32.mxu0 0.0
      %992 = vmatmul.mubr.f32.gmra.mrb[0].mxu0 %v459
      %v993 = vpop.f32.mrb[0].mxu0
      %v994 = vadd.f32 %v724, %v993
      %v995 = vpop.f32.mrb[0].mxu0
      %996 = vmatprep.mubr.f32.mxu0 0.0
      %997 = vmatmul.mubr.f32.gmra.mrb[0].mxu0 %v462
      %v998 = vpop.f32.mrb[0].mxu0
      %v999 = vadd.f32 %v729, %v998
      %v1000 = vpop.f32.mrb[0].mxu0
      %1001 = vmatprep.mubr.f32.mxu0 0.0
      %1002 = vmatmul.mubr.f32.gmra.mrb[0].mxu0 %v465
      %v1003 = vpop.f32.mrb[0].mxu0
      %v1004 = vadd.f32 %v734, %v1003
      %v1005 = vpop.f32.mrb[0].mxu0
      %1006 = vdwg.mxu0
      %v1007 = vmax.f32 %v804, 0.0
      %v1008 = vmax.f32 %v809, 0.0
      %v1009 = vmax.f32 %v814, 0.0
      %v1010 = vmax.f32 %v819, 0.0
      %v1011 = vmax.f32 %v824, 0.0
      %v1012 = vmax.f32 %v829, 0.0
      %v1013 = vmax.f32 %v834, 0.0
      %v1014 = vmax.f32 %v839, 0.0
      %v1015 = vmax.f32 %v844, 0.0
      %v1016 = vmax.f32 %v849, 0.0
      %v1017 = vmax.f32 %v854, 0.0
      %v1018 = vmax.f32 %v859, 0.0
      %v1019 = vmax.f32 %v864, 0.0
      %v1020 = vmax.f32 %v869, 0.0
      %v1021 = vmax.f32 %v874, 0.0
      %v1022 = vmax.f32 %v879, 0.0
      %v1023 = vmax.f32 %v884, 0.0
      %v1024 = vmax.f32 %v889, 0.0
      %v1025 = vmax.f32 %v894, 0.0
      %v1026 = vmax.f32 %v899, 0.0
      %v1027 = vmax.f32 %v904, 0.0
      %v1028 = vmax.f32 %v909, 0.0
      %v1029 = vmax.f32 %v914, 0.0
      %v1030 = vmax.f32 %v919, 0.0
      %v1031 = vmax.f32 %v924, 0.0
      %v1032 = vmax.f32 %v929, 0.0
      %v1033 = vmax.f32 %v934, 0.0
      %v1034 = vmax.f32 %v939, 0.0
      %v1035 = vmax.f32 %v944, 0.0
      %v1036 = vmax.f32 %v949, 0.0
      %v1037 = vmax.f32 %v954, 0.0
      %v1038 = vmax.f32 %v959, 0.0
      %v1039 = vmax.f32 %v964, 0.0
      %v1040 = vmax.f32 %v969, 0.0
      %v1041 = vmax.f32 %v974, 0.0
      %v1042 = vmax.f32 %v979, 0.0
      %v1043 = vmax.f32 %v984, 0.0
      %v1044 = vmax.f32 %v989, 0.0
      %v1045 = vmax.f32 %v994, 0.0
      %v1046 = vmax.f32 %v999, 0.0
      %v1047 = vmax.f32 %v1004, 0.0
      %1048 = vst.msk [vmem:[%s175] sm:$0xff] %vm343, %v1007
      %1049 = vst.msk [vmem:[%s175 + $0x8] sm:$0xff] %vm343, %v1008
      %1050 = vst.msk [vmem:[%s175 + $0x10] sm:$0xff] %vm343, %v1009
      %1051 = vst.msk [vmem:[%s175 + $0x18] sm:$0xff] %vm343, %v1010
      %1052 = vst.msk [vmem:[%s175 + $0x20] sm:$0xff] %vm343, %v1011
      %1053 = vst.msk [vmem:[%s175 + $0x28] sm:$0xff] %vm343, %v1012
      %1054 = vst.msk [vmem:[%s175 + $0x30] sm:$0xff] %vm343, %v1013
      %1055 = vst.msk [vmem:[%s175 + $0x38] sm:$0xff] %vm343, %v1014
      %1056 = vst.msk [vmem:[%s175 + $0x40] sm:$0xff] %vm343, %v1015
      %1057 = vst.msk [vmem:[%s175 + $0x48] sm:$0xff] %vm343, %v1016
      %1058 = vst.msk [vmem:[%s175 + $0x50] sm:$0xff] %vm343, %v1017
      %1059 = vst.msk [vmem:[%s175 + $0x58] sm:$0xff] %vm343, %v1018
      %1060 = vst.msk [vmem:[%s175 + $0x60] sm:$0xff] %vm343, %v1019
      %1061 = vst.msk [vmem:[%s175 + $0x68] sm:$0xff] %vm343, %v1020
      %1062 = vst.msk [vmem:[%s175 + $0x70] sm:$0xff] %vm343, %v1021
      %1063 = vst.msk [vmem:[%s175 + $0x78] sm:$0xff] %vm343, %v1022
      %1064 = vst.msk [vmem:[%s175 + $0x80] sm:$0xff] %vm343, %v1023
      %1065 = vst.msk [vmem:[%s175 + $0x88] sm:$0xff] %vm343, %v1024
      %1066 = vst.msk [vmem:[%s175 + $0x90] sm:$0xff] %vm343, %v1025
      %1067 = vst.msk [vmem:[%s175 + $0x98] sm:$0xff] %vm343, %v1026
      %1068 = vst.msk [vmem:[%s175 + $0xa0] sm:$0xff] %vm343, %v1027
      %1069 = vst.msk [vmem:[%s175 + $0xa8] sm:$0xff] %vm343, %v1028
      %1070 = vst.msk [vmem:[%s175 + $0xb0] sm:$0xff] %vm343, %v1029
      %1071 = vst.msk [vmem:[%s175 + $0xb8] sm:$0xff] %vm343, %v1030
      %1072 = vst.msk [vmem:[%s175 + $0xc0] sm:$0xff] %vm343, %v1031
      %1073 = vst.msk [vmem:[%s175 + $0xc8] sm:$0xff] %vm343, %v1032
      %1074 = vst.msk [vmem:[%s175 + $0xd0] sm:$0xff] %vm343, %v1033
      %1075 = vst.msk [vmem:[%s175 + $0xd8] sm:$0xff] %vm343, %v1034
      %1076 = vst.msk [vmem:[%s175 + $0xe0] sm:$0xff] %vm343, %v1035
      %1077 = vst.msk [vmem:[%s175 + $0xe8] sm:$0xff] %vm343, %v1036
      %1078 = vst.msk [vmem:[%s175 + $0xf0] sm:$0xff] %vm343, %v1037
      %1079 = vst.msk [vmem:[%s175 + $0xf8] sm:$0xff] %vm343, %v1038
      %1080 = vst.msk [vmem:[%s175 + $0x100] sm:$0xff] %vm343, %v1039
      %1081 = vst.msk [vmem:[%s175 + $0x108] sm:$0xff] %vm343, %v1040
      %1082 = vst.msk [vmem:[%s175 + $0x110] sm:$0xff] %vm343, %v1041
      %1083 = vst.msk [vmem:[%s175 + $0x118] sm:$0xff] %vm343, %v1042
      %1084 = vst.msk [vmem:[%s175 + $0x120] sm:$0xff] %vm343, %v1043
      %1085 = vst.msk [vmem:[%s175 + $0x128] sm:$0xff] %vm343, %v1044
      %1086 = vst.msk [vmem:[%s175 + $0x130] sm:$0xff] %vm343, %v1045
      %1087 = vst.msk [vmem:[%s175 + $0x138] sm:$0xff] %vm343, %v1046
      %1088 = vst.msk [vmem:[%s175 + $0x140] sm:$0xff] %vm343, %v1047
      %s1089 = smul.u32 41, %s14
      %p1090 = scmp.lt.s32.totalorder %s1089, 81
      %s1091 = scalar_select %p1090, %s1089, 81
      %s1092 = smul.addr %s1091, 8
      %s1093 = scalar_lea.vmem %s3, %s1092
      // Predicated region
      $region33: #{critic_forward.4} parent=31 // pred_check
        %p1094 = pneg %p100
      $region34: #{critic_forward.4} parent=31 // pred_check_branch
        %1096 = sbr.rel (%p1094) target = $region36
      $region35: #{critic_forward.4} parent=31 // pred_region
        %s1097 = smul.u32 41, %s14
      $region36: #{critic_forward.4} parent=31 // pred_fallthru
        _
    $region32: #{critic_forward.4} parent=5 // pred_fallthru
      _
    %p1098 = scmp.le.s32.totalorder 2, %s9
    // Predicated region
    $region37: #{critic_forward.4} parent=5 // pred_check
      %p1099 = pneg %p1098
    $region38: #{critic_forward.4} parent=5 // pred_check_branch
      %1101 = sbr.rel (%p1099) target = $region40
    $region39: #{critic_forward.4} parent=5 // pred_region
      %s1102 = ssub.s32 %s9, 2
      // Predicated region
      $region41: #{critic_forward.4} parent=39 // pred_check
        %p1103 = pneg %p106
      $region42: #{critic_forward.4} parent=39 // pred_check_branch
        %1105 = sbr.rel (%p1103) target = $region44
      $region43: #{critic_forward.4} parent=39 // pred_region
        %s1106 = smul.u32 41, %s15
        %p1107 = scmp.lt.s32.totalorder %s1106, 81
        %s1108 = scalar_select %p1107, %s1106, 81
        %s1109 = smul.addr %s1108, 8
        %s1110 = scalar_lea.vmem %s3, %s1109
      $region44: #{critic_forward.4} parent=39 // pred_fallthru
        _
    $region40: #{critic_forward.4} parent=5 // pred_fallthru
      _
  $region6: #{critic_forward.4} parent=0 // loop_footer
    %s13 = sadd.s32 1, %s9
  $region7: #{critic_forward.4} parent=0 // loop_footer_branch
    %8 = sbr.rel target = $region3
  $region8: #{critic_forward.4} parent=0 // loop_exit
    _

// kernel: critic_forward.5
$region0: #{critic_forward.5}
  #allocation0 [shape = 'u32[]', space=smem, size = 0x4, offset = 0x4, fixed_abs, tag = 'smem constant byte address 0x4 - core index']
  #allocation1 [shape = 'u32[144,128]{1,0:T(1,128)}', space=vmem, size = 0x12000, scoped, tag = 'internal scratch']
  #allocation2 [shape = 'f32[8,400]{1,0:T(8,128)}', space=vmem, size = 0x4000, scoped, tag = 'scratch operand']
  %s0 = inlined_call_operand.vmem [shape: f32[8,10752], index: 0, kind: input, shape index: {}]
  %s1 = inlined_call_operand.vmem [shape: f32[10752,400], index: 1, kind: input, shape index: {}]
  %s2 = inlined_call_operand.vmem [shape: f32[1,400], index: 2, kind: input, shape index: {}]
  %s3 = inlined_call_operand.vmem [shape: f32[400,300], index: 3, kind: input, shape index: {}]
  %s4 = inlined_call_operand.vmem [shape: f32[1,300], index: 4, kind: input, shape index: {}]
  %s5 = inlined_call_operand.vmem [shape: f32[300,128], index: 5, kind: input, shape index: {}]
  %s6 = inlined_call_operand.vmem [shape: f32[1,128], index: 6, kind: input, shape index: {}]
  %s7 = inlined_call_operand.vmem [shape: f32[8,128], index: 7, kind: output, shape index: {}]
  %s8 = sld [smem:[#allocation0]]
  $region69: #{critic_forward.5} parent=0
    _
  %s10 = ssub.s32 1, %s8
  %s11 = scalar_select 0, %s10, %s8
  loop: start=0, step=1, limit=9
  $region2: #{critic_forward.5} parent=0 // loop_pre_header
    _
  $region3: #{critic_forward.5} parent=0 // loop_header
    %s13 = sphi 0, %s17
    %p14 = scmp.ge.s32.totalorder %s13, 9
    %s23 = sphi 0, %s25
    %s26 = sphi 0, %s23
    %s27 = sphi 0, %s26
    %s43 = sphi 0, %s27
    %s49 = sphi 0, %s51
    %s52 = sphi 0, %s49
    %s53 = sphi 0, %s52
    %s69 = sphi 0, %s53
    %s73 = sphi 0, %s73
    %s75 = sphi 0, %s73
    %s76 = sphi 0, %s75
    %s90 = sphi 0, %s76
    %s94 = sphi 0, %s94
    %s96 = sphi 0, %s94
    %s97 = sphi 0, %s96
    %s111 = sphi 0, %s97
    %s115 = sphi 0, %s115
    %s117 = sphi 0, %s115
    %s118 = sphi 0, %s117
    %s132 = sphi 0, %s118
    %s136 = sphi 0, %s136
    %s138 = sphi 0, %s136
    %s139 = sphi 0, %s138
    %s153 = sphi 0, %s139
    %s157 = sphi 0, %s157
    %s159 = sphi 0, %s157
    %s160 = sphi 0, %s159
    %s174 = sphi 0, %s160
    %s178 = sphi 0, %s178
    %s180 = sphi 0, %s178
    %s181 = sphi 0, %s180
    %s195 = sphi 0, %s181
  $region4: #{critic_forward.5} parent=0 // loop_header_branch
    %16 = sbr.rel (%p14) target = $region8
  $region5: #{critic_forward.5} parent=0 // loop_body
    %s18 = ssub.s32 %s13, 1
    %s19 = ssub.s32 %s13, 2
    %s20 = sadd.s32 %s13, 1
    %s21 = ssub.s32 %s13, %s20
    %p22 = scmp.eq.s32.totalorder %s21, 0
    %s24 = sadd.s32 %s23, 1
    %s25 = scalar_select %p22, %s23, %s24
    %p28 = pneg %p22
    %p29 = scmp.eq.s32.totalorder %s13, 6
    %p30 = por %p28, %p29
    %p31 = scmp.ne.s32.totalorder %s23, %s26
    %p32 = scmp.eq.s32.totalorder %s13, 0
    %p33 = por %p31, %p32
    %p34 = scmp.ne.s32.totalorder %s23, %s26
    %p35 = scmp.eq.s32.totalorder %s18, 6
    %p36 = por %p34, %p35
    %p37 = scmp.ne.s32.totalorder %s26, %s27
    %p38 = scmp.eq.s32.totalorder %s18, 0
    %p39 = por %p37, %p38
    %p40 = scmp.ne.s32.totalorder %s26, %s27
    %p41 = scmp.eq.s32.totalorder %s19, 6
    %p42 = por %p40, %p41
    %p44 = scmp.ne.s32.totalorder %s27, %s43
    %p45 = scmp.eq.s32.totalorder %s19, 0
    %p46 = por %p44, %p45
    %s47 = ssub.s32 %s13, %s20
    %p48 = scmp.eq.s32.totalorder %s47, 0
    %s50 = sadd.s32 %s49, 1
    %s51 = scalar_select %p48, %s49, %s50
    %p54 = pneg %p48
    %p55 = scmp.eq.s32.totalorder %s13, 6
    %p56 = por %p54, %p55
    %p57 = scmp.ne.s32.totalorder %s49, %s52
    %p58 = scmp.eq.s32.totalorder %s13, 0
    %p59 = por %p57, %p58
    %p60 = scmp.ne.s32.totalorder %s49, %s52
    %p61 = scmp.eq.s32.totalorder %s18, 6
    %p62 = por %p60, %p61
    %p63 = scmp.ne.s32.totalorder %s52, %s53
    %p64 = scmp.eq.s32.totalorder %s18, 0
    %p65 = por %p63, %p64
    %p66 = scmp.ne.s32.totalorder %s52, %s53
    %p67 = scmp.eq.s32.totalorder %s19, 6
    %p68 = por %p66, %p67
    %p70 = scmp.ne.s32.totalorder %s53, %s69
    %p71 = scmp.eq.s32.totalorder %s19, 0
    %p72 = por %p70, %p71
    %s74 = sadd.s32 %s73, 1
    %p77 = scmp.eq.s32.totalorder %s13, 6
    %p78 = scmp.ne.s32.totalorder %s73, %s75
    %p79 = scmp.eq.s32.totalorder %s13, 0
    %p80 = por %p78, %p79
    %p81 = scmp.ne.s32.totalorder %s73, %s75
    %p82 = scmp.eq.s32.totalorder %s18, 6
    %p83 = por %p81, %p82
    %p84 = scmp.ne.s32.totalorder %s75, %s76
    %p85 = scmp.eq.s32.totalorder %s18, 0
    %p86 = por %p84, %p85
    %p87 = scmp.ne.s32.totalorder %s75, %s76
    %p88 = scmp.eq.s32.totalorder %s19, 6
    %p89 = por %p87, %p88
    %p91 = scmp.ne.s32.totalorder %s76, %s90
    %p92 = scmp.eq.s32.totalorder %s19, 0
    %p93 = por %p91, %p92
    %s95 = sadd.s32 %s94, 1
    %p98 = scmp.eq.s32.totalorder %s13, 6
    %p99 = scmp.ne.s32.totalorder %s94, %s96
    %p100 = scmp.eq.s32.totalorder %s13, 0
    %p101 = por %p99, %p100
    %p102 = scmp.ne.s32.totalorder %s94, %s96
    %p103 = scmp.eq.s32.totalorder %s18, 6
    %p104 = por %p102, %p103
    %p105 = scmp.ne.s32.totalorder %s96, %s97
    %p106 = scmp.eq.s32.totalorder %s18, 0
    %p107 = por %p105, %p106
    %p108 = scmp.ne.s32.totalorder %s96, %s97
    %p109 = scmp.eq.s32.totalorder %s19, 6
    %p110 = por %p108, %p109
    %p112 = scmp.ne.s32.totalorder %s97, %s111
    %p113 = scmp.eq.s32.totalorder %s19, 0
    %p114 = por %p112, %p113
    %s116 = sadd.s32 %s115, 1
    %p119 = scmp.eq.s32.totalorder %s13, 6
    %p120 = scmp.ne.s32.totalorder %s115, %s117
    %p121 = scmp.eq.s32.totalorder %s13, 0
    %p122 = por %p120, %p121
    %p123 = scmp.ne.s32.totalorder %s115, %s117
    %p124 = scmp.eq.s32.totalorder %s18, 6
    %p125 = por %p123, %p124
    %p126 = scmp.ne.s32.totalorder %s117, %s118
    %p127 = scmp.eq.s32.totalorder %s18, 0
    %p128 = por %p126, %p127
    %p129 = scmp.ne.s32.totalorder %s117, %s118
    %p130 = scmp.eq.s32.totalorder %s19, 6
    %p131 = por %p129, %p130
    %p133 = scmp.ne.s32.totalorder %s118, %s132
    %p134 = scmp.eq.s32.totalorder %s19, 0
    %p135 = por %p133, %p134
    %s137 = sadd.s32 %s136, 1
    %p140 = scmp.eq.s32.totalorder %s13, 6
    %p141 = scmp.ne.s32.totalorder %s136, %s138
    %p142 = scmp.eq.s32.totalorder %s13, 0
    %p143 = por %p141, %p142
    %p144 = scmp.ne.s32.totalorder %s136, %s138
    %p145 = scmp.eq.s32.totalorder %s18, 6
    %p146 = por %p144, %p145
    %p147 = scmp.ne.s32.totalorder %s138, %s139
    %p148 = scmp.eq.s32.totalorder %s18, 0
    %p149 = por %p147, %p148
    %p150 = scmp.ne.s32.totalorder %s138, %s139
    %p151 = scmp.eq.s32.totalorder %s19, 6
    %p152 = por %p150, %p151
    %p154 = scmp.ne.s32.totalorder %s139, %s153
    %p155 = scmp.eq.s32.totalorder %s19, 0
    %p156 = por %p154, %p155
    %s158 = sadd.s32 %s157, 1
    %p161 = scmp.eq.s32.totalorder %s13, 6
    %p162 = scmp.ne.s32.totalorder %s157, %s159
    %p163 = scmp.eq.s32.totalorder %s13, 0
    %p164 = por %p162, %p163
    %p165 = scmp.ne.s32.totalorder %s157, %s159
    %p166 = scmp.eq.s32.totalorder %s18, 6
    %p167 = por %p165, %p166
    %p168 = scmp.ne.s32.totalorder %s159, %s160
    %p169 = scmp.eq.s32.totalorder %s18, 0
    %p170 = por %p168, %p169
    %p171 = scmp.ne.s32.totalorder %s159, %s160
    %p172 = scmp.eq.s32.totalorder %s19, 6
    %p173 = por %p171, %p172
    %p175 = scmp.ne.s32.totalorder %s160, %s174
    %p176 = scmp.eq.s32.totalorder %s19, 0
    %p177 = por %p175, %p176
    %s179 = sadd.s32 %s178, 1
    %p182 = scmp.eq.s32.totalorder %s13, 6
    %p183 = scmp.ne.s32.totalorder %s178, %s180
    %p184 = scmp.eq.s32.totalorder %s13, 0
    %p185 = por %p183, %p184
    %p186 = scmp.ne.s32.totalorder %s178, %s180
    %p187 = scmp.eq.s32.totalorder %s18, 6
    %p188 = por %p186, %p187
    %p189 = scmp.ne.s32.totalorder %s180, %s181
    %p190 = scmp.eq.s32.totalorder %s18, 0
    %p191 = por %p189, %p190
    %p192 = scmp.ne.s32.totalorder %s180, %s181
    %p193 = scmp.eq.s32.totalorder %s19, 6
    %p194 = por %p192, %p193
    %p196 = scmp.ne.s32.totalorder %s181, %s195
    %p197 = scmp.eq.s32.totalorder %s19, 0
    %p198 = por %p196, %p197
    %p199 = scmp.le.s32.totalorder 1, %s13
    %p200 = scmp.lt.s32.totalorder %s13, 8
    %p201 = pnand %p199, %p200
    %p202 = pneg %p201
    // Predicated region
    $region9: #{critic_forward.5} parent=5 // pred_check
      _
    $region10: #{critic_forward.5} parent=5 // pred_check_branch
      %204 = sbr.rel (%p201) target = $region12
    $region11: #{critic_forward.5} parent=5 // pred_region
      %s205 = ssub.s32 %s13, 1
      // Predicated region
      $region13: #{critic_forward.5} parent=11 // pred_check
        %p206 = pneg %p86
      $region14: #{critic_forward.5} parent=11 // pred_check_branch
        %208 = sbr.rel (%p206) target = $region16
      $region15: #{critic_forward.5} parent=11 // pred_region
        _
      $region16: #{critic_forward.5} parent=11 // pred_fallthru
        _
      // Predicated region
      $region17: #{critic_forward.5} parent=11 // pred_check
        %p209 = pneg %p107
      $region18: #{critic_forward.5} parent=11 // pred_check_branch
        %211 = sbr.rel (%p209) target = $region20
      $region19: #{critic_forward.5} parent=11 // pred_region
        _
      $region20: #{critic_forward.5} parent=11 // pred_fallthru
        _
      // Predicated region
      $region21: #{critic_forward.5} parent=11 // pred_check
        %p212 = pneg %p128
      $region22: #{critic_forward.5} parent=11 // pred_check_branch
        %214 = sbr.rel (%p212) target = $region24
      $region23: #{critic_forward.5} parent=11 // pred_region
        _
      $region24: #{critic_forward.5} parent=11 // pred_fallthru
        _
      // Predicated region
      $region25: #{critic_forward.5} parent=11 // pred_check
        %p215 = pneg %p149
      $region26: #{critic_forward.5} parent=11 // pred_check_branch
        %217 = sbr.rel (%p215) target = $region28
      $region27: #{critic_forward.5} parent=11 // pred_region
        _
      $region28: #{critic_forward.5} parent=11 // pred_fallthru
        _
      // Predicated region
      $region29: #{critic_forward.5} parent=11 // pred_check
        %p218 = pneg %p170
      $region30: #{critic_forward.5} parent=11 // pred_check_branch
        %220 = sbr.rel (%p218) target = $region32
      $region31: #{critic_forward.5} parent=11 // pred_region
        _
      $region32: #{critic_forward.5} parent=11 // pred_fallthru
        _
    $region12: #{critic_forward.5} parent=5 // pred_fallthru
      _
    %p221 = scmp.lt.s32.totalorder %s13, 7
    // Predicated region
    $region33: #{critic_forward.5} parent=5 // pred_check
      %p222 = pneg %p221
    $region34: #{critic_forward.5} parent=5 // pred_check_branch
      %224 = sbr.rel (%p222) target = $region36
    $region35: #{critic_forward.5} parent=5 // pred_region
      // Predicated region
      $region37: #{critic_forward.5} parent=35 // pred_check
        %p225 = pneg %p33
      $region38: #{critic_forward.5} parent=35 // pred_check_branch
        %227 = sbr.rel (%p225) target = $region40
      $region39: #{critic_forward.5} parent=35 // pred_region
        %s228 = smul.u32 12, %s13
        %p229 = scmp.lt.s32.totalorder %s228, 83
        %s230 = scalar_select %p229, %s228, 83
        %s231 = smul.addr %s230, 8
        %s232 = scalar_lea.vmem %s0, %s231
        %s233 = smul.u32 12, %s13
      $region40: #{critic_forward.5} parent=35 // pred_fallthru
        _
      // Predicated region
      $region41: #{critic_forward.5} parent=35 // pred_check
        %p234 = pneg %p59
      $region42: #{critic_forward.5} parent=35 // pred_check_branch
        %236 = sbr.rel (%p234) target = $region44
      $region43: #{critic_forward.5} parent=35 // pred_region
        %s237 = smul.u32 192, %s13
        %p238 = scmp.lt.s32.totalorder %s237, 1343
        %s239 = scalar_select %p238, %s237, 1343
        %s240 = smul.addr %s239, 4
        %s241 = smul.addr %s240, 8
        %s242 = scalar_lea.vmem %s1, %s241
        %s243 = smul.u32 192, %s13
      $region44: #{critic_forward.5} parent=35 // pred_fallthru
        _
    $region36: #{critic_forward.5} parent=5 // pred_fallthru
      _
    %p244 = scmp.le.s32.totalorder 1, %s13
    %p245 = scmp.lt.s32.totalorder %s13, 8
    %p246 = pnand %p244, %p245
    %p247 = pneg %p246
    // Predicated region
    $region45: #{critic_forward.5} parent=5 // pred_check
      _
    $region46: #{critic_forward.5} parent=5 // pred_check_branch
      %249 = sbr.rel (%p246) target = $region48
    $region47: #{critic_forward.5} parent=5 // pred_region
      %s250 = ssub.s32 %s13, 1
      %s251 = smul.u32 12, %s18
      %p252 = scmp.lt.s32.totalorder %s251, 83
      %s253 = scalar_select %p252, %s251, 83
      %s254 = smul.addr %s253, 8
      %s255 = scalar_lea.vmem %s0, %s254
      %p256 = pneg %p39
      %p257 = pneg %p36
      %s258 = smul.u32 192, %s18
      %p259 = scmp.lt.s32.totalorder %s258, 1343
      %s260 = scalar_select %p259, %s258, 1343
      %s261 = smul.addr %s260, 4
      %s262 = smul.addr %s261, 8
      %s263 = scalar_lea.vmem %s1, %s262
      %p264 = pneg %p65
      %p265 = pneg %p62
      %p266 = pneg %p86
      %p267 = pneg %p83
      %p268 = pneg %p107
      %p269 = pneg %p104
      %p270 = pneg %p128
      %p271 = pneg %p125
      %p272 = pneg %p149
      %p273 = pneg %p146
      %p274 = pneg %p170
      %p275 = pneg %p167
      %p276 = pneg %p191
      %p277 = pneg %p188
      %s278 = smul.u32 12, %s18
      %p279 = scmp.lt.s32.totalorder %s278, 83
      %s280 = scalar_select %p279, %s278, 83
      %s281 = smul.addr %s280, 8
      %s282 = scalar_lea.vmem %s0, %s281
      %s283 = smul.u32 12, %s18
      %s284 = smul.u32 192, %s18
      %p285 = scmp.lt.s32.totalorder %s284, 1343
      %s286 = scalar_select %p285, %s284, 1343
      %s287 = smul.addr %s286, 4
      %s288 = smul.addr %s287, 8
      %s289 = scalar_lea.vmem %s1, %s288
      %s290 = smul.u32 192, %s18
      %p291 = scmp.eq.s32.totalorder %s18, 0
      // Predicated region
      $region49: #{critic_forward.5} parent=47 // pred_check
        %p292 = pneg %p291
      $region50: #{critic_forward.5} parent=47 // pred_check_branch
        %294 = sbr.rel (%p292) target = $region52
      $region51: #{critic_forward.5} parent=47 // pred_region
        %295 = vst [vmem:[#allocation2] sm:$0xff] 0.0
        %296 = vst [vmem:[#allocation2 + $0x8] sm:$0xff] 0.0
        %297 = vst [vmem:[#allocation2 + $0x10] sm:$0xff] 0.0
        %vm298 = vcmask 130048
        %299 = vst.msk [vmem:[#allocation2 + $0x18] sm:$0xff] %vm298, 0.0
      $region52: #{critic_forward.5} parent=47 // pred_fallthru
        _
      %v300 = vld [vmem:[#allocation2] sm:$0xff]
      %v301 = vld [vmem:[#allocation2 + $0x8] sm:$0xff]
      %v302 = vld [vmem:[#allocation2 + $0x10] sm:$0xff]
      %v303 = vld [vmem:[#allocation2 + $0x18] sm:$0xff]
      %v304 = vld [vmem:[%s282] sm:$0xff]
      %v305 = vld [vmem:[%s282 + $0x8] sm:$0xff]
      %v306 = vld [vmem:[%s282 + $0x10] sm:$0xff]
      %v307 = vld [vmem:[%s282 + $0x18] sm:$0xff]
      %v308 = vld [vmem:[%s282 + $0x20] sm:$0xff]
      %v309 = vld [vmem:[%s282 + $0x28] sm:$0xff]
      %v310 = vld [vmem:[%s282 + $0x30] sm:$0xff]
      %v311 = vld [vmem:[%s282 + $0x38] sm:$0xff]
      %v312 = vld [vmem:[%s282 + $0x40] sm:$0xff]
      %v313 = vld [vmem:[%s282 + $0x48] sm:$0xff]
      %v314 = vld [vmem:[%s282 + $0x50] sm:$0xff]
      %v315 = vld [vmem:[%s282 + $0x58] sm:$0xff]
      %v316 = vld [vmem:[%s289] sm:$0xff]
      %v317 = vld [vmem:[%s289 + $0x8] sm:$0xff]
      %v318 = vld [vmem:[%s289 + $0x10] sm:$0xff]
      %v319 = vld [vmem:[%s289 + $0x18] sm:$0xff]
      %v320 = vld [vmem:[%s289 + $0x20] sm:$0xff]
      %v321 = vld [vmem:[%s289 + $0x28] sm:$0xff]
      %v322 = vld [vmem:[%s289 + $0x30] sm:$0xff]
      %v323 = vld [vmem:[%s289 + $0x38] sm:$0xff]
      %v324 = vld [vmem:[%s289 + $0x40] sm:$0xff]
      %v325 = vld [vmem:[%s289 + $0x48] sm:$0xff]
      %v326 = vld [vmem:[%s289 + $0x50] sm:$0xff]
      %v327 = vld [vmem:[%s289 + $0x58] sm:$0xff]
      %v328 = vld [vmem:[%s289 + $0x60] sm:$0xff]
      %v329 = vld [vmem:[%s289 + $0x68] sm:$0xff]
      %v330 = vld [vmem:[%s289 + $0x70] sm:$0xff]
      %v331 = vld [vmem:[%s289 + $0x78] sm:$0xff]
      %v332 = vld [vmem:[%s289 + $0x80] sm:$0xff]
      %v333 = vld [vmem:[%s289 + $0x88] sm:$0xff]
      %v334 = vld [vmem:[%s289 + $0x90] sm:$0xff]
      %v335 = vld [vmem:[%s289 + $0x98] sm:$0xff]
      %v336 = vld [vmem:[%s289 + $0xa0] sm:$0xff]
      %v337 = vld [vmem:[%s289 + $0xa8] sm:$0xff]
      %v338 = vld [vmem:[%s289 + $0xb0] sm:$0xff]
      %v339 = vld [vmem:[%s289 + $0xb8] sm:$0xff]
      %v340 = vld [vmem:[%s289 + $0xc0] sm:$0xff]
      %v341 = vld [vmem:[%s289 + $0xc8] sm:$0xff]
      %v342 = vld [vmem:[%s289 + $0xd0] sm:$0xff]
      %v343 = vld [vmem:[%s289 + $0xd8] sm:$0xff]
      %v344 = vld [vmem:[%s289 + $0xe0] sm:$0xff]
      %v345 = vld [vmem:[%s289 + $0xe8] sm:$0xff]
      %v346 = vld [vmem:[%s289 + $0xf0] sm:$0xff]
      %v347 = vld [vmem:[%s289 + $0xf8] sm:$0xff]
      %v348 = vld [vmem:[%s289 + $0x100] sm:$0xff]
      %v349 = vld [vmem:[%s289 + $0x108] sm:$0xff]
      %v350 = vld [vmem:[%s289 + $0x110] sm:$0xff]
      %v351 = vld [vmem:[%s289 + $0x118] sm:$0xff]
      %v352 = vld [vmem:[%s289 + $0x120] sm:$0xff]
      %v353 = vld [vmem:[%s289 + $0x128] sm:$0xff]
      %v354 = vld [vmem:[%s289 + $0x130] sm:$0xff]
      %v355 = vld [vmem:[%s289 + $0x138] sm:$0xff]
      %v356 = vld [vmem:[%s289 + $0x140] sm:$0xff]
      %v357 = vld [vmem:[%s289 + $0x148] sm:$0xff]
      %v358 = vld [vmem:[%s289 + $0x150] sm:$0xff]
      %v359 = vld [vmem:[%s289 + $0x158] sm:$0xff]
      %v360 = vld [vmem:[%s289 + $0x160] sm:$0xff]
      %v361 = vld [vmem:[%s289 + $0x168] sm:$0xff]
      %v362 = vld [vmem:[%s289 + $0x170] sm:$0xff]
      %v363 = vld [vmem:[%s289 + $0x178] sm:$0xff]
      %v364 = vld [vmem:[%s289 + $0x180] sm:$0xff]
      %v365 = vld [vmem:[%s289 + $0x188] sm:$0xff]
      %v366 = vld [vmem:[%s289 + $0x190] sm:$0xff]
      %v367 = vld [vmem:[%s289 + $0x198] sm:$0xff]
      %v368 = vld [vmem:[%s289 + $0x1a0] sm:$0xff]
      %v369 = vld [vmem:[%s289 + $0x1a8] sm:$0xff]
      %v370 = vld [vmem:[%s289 + $0x1b0] sm:$0xff]
      %v371 = vld [vmem:[%s289 + $0x1b8] sm:$0xff]
      %v372 = vld [vmem:[%s289 + $0x1c0] sm:$0xff]
      %v373 = vld [vmem:[%s289 + $0x1c8] sm:$0xff]
      %v374 = vld [vmem:[%s289 + $0x1d0] sm:$0xff]
      %v375 = vld [vmem:[%s289 + $0x1d8] sm:$0xff]
      %v376 = vld [vmem:[%s289 + $0x1e0] sm:$0xff]
      %v377 = vld [vmem:[%s289 + $0x1e8] sm:$0xff]
      %v378 = vld [vmem:[%s289 + $0x1f0] sm:$0xff]
      %v379 = vld [vmem:[%s289 + $0x1f8] sm:$0xff]
      %v380 = vld [vmem:[%s289 + $0x200] sm:$0xff]
      %v381 = vld [vmem:[%s289 + $0x208] sm:$0xff]
      %v382 = vld [vmem:[%s289 + $0x210] sm:$0xff]
      %v383 = vld [vmem:[%s289 + $0x218] sm:$0xff]
      %v384 = vld [vmem:[%s289 + $0x220] sm:$0xff]
      %v385 = vld [vmem:[%s289 + $0x228] sm:$0xff]
      %v386 = vld [vmem:[%s289 + $0x230] sm:$0xff]
      %v387 = vld [vmem:[%s289 + $0x238] sm:$0xff]
      %v388 = vld [vmem:[%s289 + $0x240] sm:$0xff]
      %v389 = vld [vmem:[%s289 + $0x248] sm:$0xff]
      %v390 = vld [vmem:[%s289 + $0x250] sm:$0xff]
      %v391 = vld [vmem:[%s289 + $0x258] sm:$0xff]
      %v392 = vld [vmem:[%s289 + $0x260] sm:$0xff]
      %v393 = vld [vmem:[%s289 + $0x268] sm:$0xff]
      %v394 = vld [vmem:[%s289 + $0x270] sm:$0xff]
      %v395 = vld [vmem:[%s289 + $0x278] sm:$0xff]
      %v396 = vld [vmem:[%s289 + $0x280] sm:$0xff]
      %v397 = vld [vmem:[%s289 + $0x288] sm:$0xff]
      %v398 = vld [vmem:[%s289 + $0x290] sm:$0xff]
      %v399 = vld [vmem:[%s289 + $0x298] sm:$0xff]
      %v400 = vld [vmem:[%s289 + $0x2a0] sm:$0xff]
      %v401 = vld [vmem:[%s289 + $0x2a8] sm:$0xff]
      %v402 = vld [vmem:[%s289 + $0x2b0] sm:$0xff]
      %v403 = vld [vmem:[%s289 + $0x2b8] sm:$0xff]
      %v404 = vld [vmem:[%s289 + $0x2c0] sm:$0xff]
      %v405 = vld [vmem:[%s289 + $0x2c8] sm:$0xff]
      %v406 = vld [vmem:[%s289 + $0x2d0] sm:$0xff]
      %v407 = vld [vmem:[%s289 + $0x2d8] sm:$0xff]
      %v408 = vld [vmem:[%s289 + $0x2e0] sm:$0xff]
      %v409 = vld [vmem:[%s289 + $0x2e8] sm:$0xff]
      %v410 = vld [vmem:[%s289 + $0x2f0] sm:$0xff]
      %v411 = vld [vmem:[%s289 + $0x2f8] sm:$0xff]
      %v412 = vld [vmem:[%s289 + $0x300] sm:$0xff]
      %v413 = vld [vmem:[%s289 + $0x308] sm:$0xff]
      %v414 = vld [vmem:[%s289 + $0x310] sm:$0xff]
      %v415 = vld [vmem:[%s289 + $0x318] sm:$0xff]
      %v416 = vld [vmem:[%s289 + $0x320] sm:$0xff]
      %v417 = vld [vmem:[%s289 + $0x328] sm:$0xff]
      %v418 = vld [vmem:[%s289 + $0x330] sm:$0xff]
      %v419 = vld [vmem:[%s289 + $0x338] sm:$0xff]
      %v420 = vld [vmem:[%s289 + $0x340] sm:$0xff]
      %v421 = vld [vmem:[%s289 + $0x348] sm:$0xff]
      %v422 = vld [vmem:[%s289 + $0x350] sm:$0xff]
      %v423 = vld [vmem:[%s289 + $0x358] sm:$0xff]
      %v424 = vld [vmem:[%s289 + $0x360] sm:$0xff]
      %v425 = vld [vmem:[%s289 + $0x368] sm:$0xff]
      %v426 = vld [vmem:[%s289 + $0x370] sm:$0xff]
      %v427 = vld [vmem:[%s289 + $0x378] sm:$0xff]
      %v428 = vld [vmem:[%s289 + $0x380] sm:$0xff]
      %v429 = vld [vmem:[%s289 + $0x388] sm:$0xff]
      %v430 = vld [vmem:[%s289 + $0x390] sm:$0xff]
      %v431 = vld [vmem:[%s289 + $0x398] sm:$0xff]
      %v432 = vld [vmem:[%s289 + $0x3a0] sm:$0xff]
      %v433 = vld [vmem:[%s289 + $0x3a8] sm:$0xff]
      %v434 = vld [vmem:[%s289 + $0x3b0] sm:$0xff]
      %v435 = vld [vmem:[%s289 + $0x3b8] sm:$0xff]
      %v436 = vld [vmem:[%s289 + $0x3c0] sm:$0xff]
      %v437 = vld [vmem:[%s289 + $0x3c8] sm:$0xff]
      %v438 = vld [vmem:[%s289 + $0x3d0] sm:$0xff]
      %v439 = vld [vmem:[%s289 + $0x3d8] sm:$0xff]
      %v440 = vld [vmem:[%s289 + $0x3e0] sm:$0xff]
      %v441 = vld [vmem:[%s289 + $0x3e8] sm:$0xff]
      %v442 = vld [vmem:[%s289 + $0x3f0] sm:$0xff]
      %v443 = vld [vmem:[%s289 + $0x3f8] sm:$0xff]
      %v444 = vld [vmem:[%s289 + $0x400] sm:$0xff]
      %v445 = vld [vmem:[%s289 + $0x408] sm:$0xff]
      %v446 = vld [vmem:[%s289 + $0x410] sm:$0xff]
      %v447 = vld [vmem:[%s289 + $0x418] sm:$0xff]
      %v448 = vld [vmem:[%s289 + $0x420] sm:$0xff]
      %v449 = vld [vmem:[%s289 + $0x428] sm:$0xff]
      %v450 = vld [vmem:[%s289 + $0x430] sm:$0xff]
      %v451 = vld [vmem:[%s289 + $0x438] sm:$0xff]
      %v452 = vld [vmem:[%s289 + $0x440] sm:$0xff]
      %v453 = vld [vmem:[%s289 + $0x448] sm:$0xff]
      %v454 = vld [vmem:[%s289 + $0x450] sm:$0xff]
      %v455 = vld [vmem:[%s289 + $0x458] sm:$0xff]
      %v456 = vld [vmem:[%s289 + $0x460] sm:$0xff]
      %v457 = vld [vmem:[%s289 + $0x468] sm:$0xff]
      %v458 = vld [vmem:[%s289 + $0x470] sm:$0xff]
      %v459 = vld [vmem:[%s289 + $0x478] sm:$0xff]
      %v460 = vld [vmem:[%s289 + $0x480] sm:$0xff]
      %v461 = vld [vmem:[%s289 + $0x488] sm:$0xff]
      %v462 = vld [vmem:[%s289 + $0x490] sm:$0xff]
      %v463 = vld [vmem:[%s289 + $0x498] sm:$0xff]
      %v464 = vld [vmem:[%s289 + $0x4a0] sm:$0xff]
      %v465 = vld [vmem:[%s289 + $0x4a8] sm:$0xff]
      %v466 = vld [vmem:[%s289 + $0x4b0] sm:$0xff]
      %v467 = vld [vmem:[%s289 + $0x4b8] sm:$0xff]
      %v468 = vld [vmem:[%s289 + $0x4c0] sm:$0xff]
      %v469 = vld [vmem:[%s289 + $0x4c8] sm:$0xff]
      %v470 = vld [vmem:[%s289 + $0x4d0] sm:$0xff]
      %v471 = vld [vmem:[%s289 + $0x4d8] sm:$0xff]
      %v472 = vld [vmem:[%s289 + $0x4e0] sm:$0xff]
      %v473 = vld [vmem:[%s289 + $0x4e8] sm:$0xff]
      %v474 = vld [vmem:[%s289 + $0x4f0] sm:$0xff]
      %v475 = vld [vmem:[%s289 + $0x4f8] sm:$0xff]
      %v476 = vld [vmem:[%s289 + $0x500] sm:$0xff]
      %v477 = vld [vmem:[%s289 + $0x508] sm:$0xff]
      %v478 = vld [vmem:[%s289 + $0x510] sm:$0xff]
      %v479 = vld [vmem:[%s289 + $0x518] sm:$0xff]
      %v480 = vld [vmem:[%s289 + $0x520] sm:$0xff]
      %v481 = vld [vmem:[%s289 + $0x528] sm:$0xff]
      %v482 = vld [vmem:[%s289 + $0x530] sm:$0xff]
      %v483 = vld [vmem:[%s289 + $0x538] sm:$0xff]
      %v484 = vld [vmem:[%s289 + $0x540] sm:$0xff]
      %v485 = vld [vmem:[%s289 + $0x548] sm:$0xff]
      %v486 = vld [vmem:[%s289 + $0x550] sm:$0xff]
      %v487 = vld [vmem:[%s289 + $0x558] sm:$0xff]
      %v488 = vld [vmem:[%s289 + $0x560] sm:$0xff]
      %v489 = vld [vmem:[%s289 + $0x568] sm:$0xff]
      %v490 = vld [vmem:[%s289 + $0x570] sm:$0xff]
      %v491 = vld [vmem:[%s289 + $0x578] sm:$0xff]
      %v492 = vld [vmem:[%s289 + $0x580] sm:$0xff]
      %v493 = vld [vmem:[%s289 + $0x588] sm:$0xff]
      %v494 = vld [vmem:[%s289 + $0x590] sm:$0xff]
      %v495 = vld [vmem:[%s289 + $0x598] sm:$0xff]
      %v496 = vld [vmem:[%s289 + $0x5a0] sm:$0xff]
      %v497 = vld [vmem:[%s289 + $0x5a8] sm:$0xff]
      %v498 = vld [vmem:[%s289 + $0x5b0] sm:$0xff]
      %v499 = vld [vmem:[%s289 + $0x5b8] sm:$0xff]
      %v500 = vld [vmem:[%s289 + $0x5c0] sm:$0xff]
      %v501 = vld [vmem:[%s289 + $0x5c8] sm:$0xff]
      %v502 = vld [vmem:[%s289 + $0x5d0] sm:$0xff]
      %v503 = vld [vmem:[%s289 + $0x5d8] sm:$0xff]
      %v504 = vld [vmem:[%s289 + $0x5e0] sm:$0xff]
      %v505 = vld [vmem:[%s289 + $0x5e8] sm:$0xff]
      %v506 = vld [vmem:[%s289 + $0x5f0] sm:$0xff]
      %v507 = vld [vmem:[%s289 + $0x5f8] sm:$0xff]
      %v508 = vld [vmem:[%s289 + $0x600] sm:$0xff]
      %v509 = vld [vmem:[%s289 + $0x608] sm:$0xff]
      %v510 = vld [vmem:[%s289 + $0x610] sm:$0xff]
      %v511 = vld [vmem:[%s289 + $0x618] sm:$0xff]
      %v512 = vld [vmem:[%s289 + $0x620] sm:$0xff]
      %v513 = vld [vmem:[%s289 + $0x628] sm:$0xff]
      %v514 = vld [vmem:[%s289 + $0x630] sm:$0xff]
      %v515 = vld [vmem:[%s289 + $0x638] sm:$0xff]
      %v516 = vld [vmem:[%s289 + $0x640] sm:$0xff]
      %v517 = vld [vmem:[%s289 + $0x648] sm:$0xff]
      %v518 = vld [vmem:[%s289 + $0x650] sm:$0xff]
      %v519 = vld [vmem:[%s289 + $0x658] sm:$0xff]
      %v520 = vld [vmem:[%s289 + $0x660] sm:$0xff]
      %v521 = vld [vmem:[%s289 + $0x668] sm:$0xff]
      %v522 = vld [vmem:[%s289 + $0x670] sm:$0xff]
      %v523 = vld [vmem:[%s289 + $0x678] sm:$0xff]
      %v524 = vld [vmem:[%s289 + $0x680] sm:$0xff]
      %v525 = vld [vmem:[%s289 + $0x688] sm:$0xff]
      %v526 = vld [vmem:[%s289 + $0x690] sm:$0xff]
      %v527 = vld [vmem:[%s289 + $0x698] sm:$0xff]
      %v528 = vld [vmem:[%s289 + $0x6a0] sm:$0xff]
      %v529 = vld [vmem:[%s289 + $0x6a8] sm:$0xff]
      %v530 = vld [vmem:[%s289 + $0x6b0] sm:$0xff]
      %v531 = vld [vmem:[%s289 + $0x6b8] sm:$0xff]
      %v532 = vld [vmem:[%s289 + $0x6c0] sm:$0xff]
      %v533 = vld [vmem:[%s289 + $0x6c8] sm:$0xff]
      %v534 = vld [vmem:[%s289 + $0x6d0] sm:$0xff]
      %v535 = vld [vmem:[%s289 + $0x6d8] sm:$0xff]
      %v536 = vld [vmem:[%s289 + $0x6e0] sm:$0xff]
      %v537 = vld [vmem:[%s289 + $0x6e8] sm:$0xff]
      %v538 = vld [vmem:[%s289 + $0x6f0] sm:$0xff]
      %v539 = vld [vmem:[%s289 + $0x6f8] sm:$0xff]
      %v540 = vld [vmem:[%s289 + $0x700] sm:$0xff]
      %v541 = vld [vmem:[%s289 + $0x708] sm:$0xff]
      %v542 = vld [vmem:[%s289 + $0x710] sm:$0xff]
      %v543 = vld [vmem:[%s289 + $0x718] sm:$0xff]
      %v544 = vld [vmem:[%s289 + $0x720] sm:$0xff]
      %v545 = vld [vmem:[%s289 + $0x728] sm:$0xff]
      %v546 = vld [vmem:[%s289 + $0x730] sm:$0xff]
      %v547 = vld [vmem:[%s289 + $0x738] sm:$0xff]
      %v548 = vld [vmem:[%s289 + $0x740] sm:$0xff]
      %v549 = vld [vmem:[%s289 + $0x748] sm:$0xff]
      %v550 = vld [vmem:[%s289 + $0x750] sm:$0xff]
      %v551 = vld [vmem:[%s289 + $0x758] sm:$0xff]
      %v552 = vld [vmem:[%s289 + $0x760] sm:$0xff]
      %v553 = vld [vmem:[%s289 + $0x768] sm:$0xff]
      %v554 = vld [vmem:[%s289 + $0x770] sm:$0xff]
      %v555 = vld [vmem:[%s289 + $0x778] sm:$0xff]
      %v556 = vld [vmem:[%s289 + $0x780] sm:$0xff]
      %v557 = vld [vmem:[%s289 + $0x788] sm:$0xff]
      %v558 = vld [vmem:[%s289 + $0x790] sm:$0xff]
      %v559 = vld [vmem:[%s289 + $0x798] sm:$0xff]
      %v560 = vld [vmem:[%s289 + $0x7a0] sm:$0xff]
      %v561 = vld [vmem:[%s289 + $0x7a8] sm:$0xff]
      %v562 = vld [vmem:[%s289 + $0x7b0] sm:$0xff]
      %v563 = vld [vmem:[%s289 + $0x7b8] sm:$0xff]
      %v564 = vld [vmem:[%s289 + $0x7c0] sm:$0xff]
      %v565 = vld [vmem:[%s289 + $0x7c8] sm:$0xff]
      %v566 = vld [vmem:[%s289 + $0x7d0] sm:$0xff]
      %v567 = vld [vmem:[%s289 + $0x7d8] sm:$0xff]
      %v568 = vld [vmem:[%s289 + $0x7e0] sm:$0xff]
      %v569 = vld [vmem:[%s289 + $0x7e8] sm:$0xff]
      %v570 = vld [vmem:[%s289 + $0x7f0] sm:$0xff]
      %v571 = vld [vmem:[%s289 + $0x7f8] sm:$0xff]
      %v572 = vld [vmem:[%s289 + $0x800] sm:$0xff]
      %v573 = vld [vmem:[%s289 + $0x808] sm:$0xff]
      %v574 = vld [vmem:[%s289 + $0x810] sm:$0xff]
      %v575 = vld [vmem:[%s289 + $0x818] sm:$0xff]
      %v576 = vld [vmem:[%s289 + $0x820] sm:$0xff]
      %v577 = vld [vmem:[%s289 + $0x828] sm:$0xff]
      %v578 = vld [vmem:[%s289 + $0x830] sm:$0xff]
      %v579 = vld [vmem:[%s289 + $0x838] sm:$0xff]
      %v580 = vld [vmem:[%s289 + $0x840] sm:$0xff]
      %v581 = vld [vmem:[%s289 + $0x848] sm:$0xff]
      %v582 = vld [vmem:[%s289 + $0x850] sm:$0xff]
      %v583 = vld [vmem:[%s289 + $0x858] sm:$0xff]
      %v584 = vld [vmem:[%s289 + $0x860] sm:$0xff]
      %v585 = vld [vmem:[%s289 + $0x868] sm:$0xff]
      %v586 = vld [vmem:[%s289 + $0x870] sm:$0xff]
      %v587 = vld [vmem:[%s289 + $0x878] sm:$0xff]
      %v588 = vld [vmem:[%s289 + $0x880] sm:$0xff]
      %v589 = vld [vmem:[%s289 + $0x888] sm:$0xff]
      %v590 = vld [vmem:[%s289 + $0x890] sm:$0xff]
      %v591 = vld [vmem:[%s289 + $0x898] sm:$0xff]
      %v592 = vld [vmem:[%s289 + $0x8a0] sm:$0xff]
      %v593 = vld [vmem:[%s289 + $0x8a8] sm:$0xff]
      %v594 = vld [vmem:[%s289 + $0x8b0] sm:$0xff]
      %v595 = vld [vmem:[%s289 + $0x8b8] sm:$0xff]
      %v596 = vld [vmem:[%s289 + $0x8c0] sm:$0xff]
      %v597 = vld [vmem:[%s289 + $0x8c8] sm:$0xff]
      %v598 = vld [vmem:[%s289 + $0x8d0] sm:$0xff]
      %v599 = vld [vmem:[%s289 + $0x8d8] sm:$0xff]
      %v600 = vld [vmem:[%s289 + $0x8e0] sm:$0xff]
      %v601 = vld [vmem:[%s289 + $0x8e8] sm:$0xff]
      %v602 = vld [vmem:[%s289 + $0x8f0] sm:$0xff]
      %v603 = vld [vmem:[%s289 + $0x8f8] sm:$0xff]
      %v604 = vld [vmem:[%s289 + $0x900] sm:$0xff]
      %v605 = vld [vmem:[%s289 + $0x908] sm:$0xff]
      %v606 = vld [vmem:[%s289 + $0x910] sm:$0xff]
      %v607 = vld [vmem:[%s289 + $0x918] sm:$0xff]
      %v608 = vld [vmem:[%s289 + $0x920] sm:$0xff]
      %v609 = vld [vmem:[%s289 + $0x928] sm:$0xff]
      %v610 = vld [vmem:[%s289 + $0x930] sm:$0xff]
      %v611 = vld [vmem:[%s289 + $0x938] sm:$0xff]
      %v612 = vld [vmem:[%s289 + $0x940] sm:$0xff]
      %v613 = vld [vmem:[%s289 + $0x948] sm:$0xff]
      %v614 = vld [vmem:[%s289 + $0x950] sm:$0xff]
      %v615 = vld [vmem:[%s289 + $0x958] sm:$0xff]
      %v616 = vld [vmem:[%s289 + $0x960] sm:$0xff]
      %v617 = vld [vmem:[%s289 + $0x968] sm:$0xff]
      %v618 = vld [vmem:[%s289 + $0x970] sm:$0xff]
      %v619 = vld [vmem:[%s289 + $0x978] sm:$0xff]
      %v620 = vld [vmem:[%s289 + $0x980] sm:$0xff]
      %v621 = vld [vmem:[%s289 + $0x988] sm:$0xff]
      %v622 = vld [vmem:[%s289 + $0x990] sm:$0xff]
      %v623 = vld [vmem:[%s289 + $0x998] sm:$0xff]
      %v624 = vld [vmem:[%s289 + $0x9a0] sm:$0xff]
      %v625 = vld [vmem:[%s289 + $0x9a8] sm:$0xff]
      %v626 = vld [vmem:[%s289 + $0x9b0] sm:$0xff]
      %v627 = vld [vmem:[%s289 + $0x9b8] sm:$0xff]
      %v628 = vld [vmem:[%s289 + $0x9c0] sm:$0xff]
      %v629 = vld [vmem:[%s289 + $0x9c8] sm:$0xff]
      %v630 = vld [vmem:[%s289 + $0x9d0] sm:$0xff]
      %v631 = vld [vmem:[%s289 + $0x9d8] sm:$0xff]
      %v632 = vld [vmem:[%s289 + $0x9e0] sm:$0xff]
      %v633 = vld [vmem:[%s289 + $0x9e8] sm:$0xff]
      %v634 = vld [vmem:[%s289 + $0x9f0] sm:$0xff]
      %v635 = vld [vmem:[%s289 + $0x9f8] sm:$0xff]
      %v636 = vld [vmem:[%s289 + $0xa00] sm:$0xff]
      %v637 = vld [vmem:[%s289 + $0xa08] sm:$0xff]
      %v638 = vld [vmem:[%s289 + $0xa10] sm:$0xff]
      %v639 = vld [vmem:[%s289 + $0xa18] sm:$0xff]
      %v640 = vld [vmem:[%s289 + $0xa20] sm:$0xff]
      %v641 = vld [vmem:[%s289 + $0xa28] sm:$0xff]
      %v642 = vld [vmem:[%s289 + $0xa30] sm:$0xff]
      %v643 = vld [vmem:[%s289 + $0xa38] sm:$0xff]
      %v644 = vld [vmem:[%s289 + $0xa40] sm:$0xff]
      %v645 = vld [vmem:[%s289 + $0xa48] sm:$0xff]
      %v646 = vld [vmem:[%s289 + $0xa50] sm:$0xff]
      %v647 = vld [vmem:[%s289 + $0xa58] sm:$0xff]
      %v648 = vld [vmem:[%s289 + $0xa60] sm:$0xff]
      %v649 = vld [vmem:[%s289 + $0xa68] sm:$0xff]
      %v650 = vld [vmem:[%s289 + $0xa70] sm:$0xff]
      %v651 = vld [vmem:[%s289 + $0xa78] sm:$0xff]
      %v652 = vld [vmem:[%s289 + $0xa80] sm:$0xff]
      %v653 = vld [vmem:[%s289 + $0xa88] sm:$0xff]
      %v654 = vld [vmem:[%s289 + $0xa90] sm:$0xff]
      %v655 = vld [vmem:[%s289 + $0xa98] sm:$0xff]
      %v656 = vld [vmem:[%s289 + $0xaa0] sm:$0xff]
      %v657 = vld [vmem:[%s289 + $0xaa8] sm:$0xff]
      %v658 = vld [vmem:[%s289 + $0xab0] sm:$0xff]
      %v659 = vld [vmem:[%s289 + $0xab8] sm:$0xff]
      %v660 = vld [vmem:[%s289 + $0xac0] sm:$0xff]
      %v661 = vld [vmem:[%s289 + $0xac8] sm:$0xff]
      %v662 = vld [vmem:[%s289 + $0xad0] sm:$0xff]
      %v663 = vld [vmem:[%s289 + $0xad8] sm:$0xff]
      %v664 = vld [vmem:[%s289 + $0xae0] sm:$0xff]
      %v665 = vld [vmem:[%s289 + $0xae8] sm:$0xff]
      %v666 = vld [vmem:[%s289 + $0xaf0] sm:$0xff]
      %v667 = vld [vmem:[%s289 + $0xaf8] sm:$0xff]
      %v668 = vld [vmem:[%s289 + $0xb00] sm:$0xff]
      %v669 = vld [vmem:[%s289 + $0xb08] sm:$0xff]
      %v670 = vld [vmem:[%s289 + $0xb10] sm:$0xff]
      %v671 = vld [vmem:[%s289 + $0xb18] sm:$0xff]
      %v672 = vld [vmem:[%s289 + $0xb20] sm:$0xff]
      %v673 = vld [vmem:[%s289 + $0xb28] sm:$0xff]
      %v674 = vld [vmem:[%s289 + $0xb30] sm:$0xff]
      %v675 = vld [vmem:[%s289 + $0xb38] sm:$0xff]
      %v676 = vld [vmem:[%s289 + $0xb40] sm:$0xff]
      %v677 = vld [vmem:[%s289 + $0xb48] sm:$0xff]
      %v678 = vld [vmem:[%s289 + $0xb50] sm:$0xff]
      %v679 = vld [vmem:[%s289 + $0xb58] sm:$0xff]
      %v680 = vld [vmem:[%s289 + $0xb60] sm:$0xff]
      %v681 = vld [vmem:[%s289 + $0xb68] sm:$0xff]
      %v682 = vld [vmem:[%s289 + $0xb70] sm:$0xff]
      %v683 = vld [vmem:[%s289 + $0xb78] sm:$0xff]
      %v684 = vld [vmem:[%s289 + $0xb80] sm:$0xff]
      %v685 = vld [vmem:[%s289 + $0xb88] sm:$0xff]
      %v686 = vld [vmem:[%s289 + $0xb90] sm:$0xff]
      %v687 = vld [vmem:[%s289 + $0xb98] sm:$0xff]
      %v688 = vld [vmem:[%s289 + $0xba0] sm:$0xff]
      %v689 = vld [vmem:[%s289 + $0xba8] sm:$0xff]
      %v690 = vld [vmem:[%s289 + $0xbb0] sm:$0xff]
      %v691 = vld [vmem:[%s289 + $0xbb8] sm:$0xff]
      %v692 = vld [vmem:[%s289 + $0xbc0] sm:$0xff]
      %v693 = vld [vmem:[%s289 + $0xbc8] sm:$0xff]
      %v694 = vld [vmem:[%s289 + $0xbd0] sm:$0xff]
      %v695 = vld [vmem:[%s289 + $0xbd8] sm:$0xff]
      %v696 = vld [vmem:[%s289 + $0xbe0] sm:$0xff]
      %v697 = vld [vmem:[%s289 + $0xbe8] sm:$0xff]
      %v698 = vld [vmem:[%s289 + $0xbf0] sm:$0xff]
      %v699 = vld [vmem:[%s289 + $0xbf8] sm:$0xff]
      %v700 = vld [vmem:[%s289 + $0xc00] sm:$0xff]
      %v701 = vld [vmem:[%s289 + $0xc08] sm:$0xff]
      %v702 = vld [vmem:[%s289 + $0xc10] sm:$0xff]
      %v703 = vld [vmem:[%s289 + $0xc18] sm:$0xff]
      %v704 = vld [vmem:[%s289 + $0xc20] sm:$0xff]
      %v705 = vld [vmem:[%s289 + $0xc28] sm:$0xff]
      %v706 = vld [vmem:[%s289 + $0xc30] sm:$0xff]
      %v707 = vld [vmem:[%s289 + $0xc38] sm:$0xff]
      %v708 = vld [vmem:[%s289 + $0xc40] sm:$0xff]
      %v709 = vld [vmem:[%s289 + $0xc48] sm:$0xff]
      %v710 = vld [vmem:[%s289 + $0xc50] sm:$0xff]
      %v711 = vld [vmem:[%s289 + $0xc58] sm:$0xff]
      %v712 = vld [vmem:[%s289 + $0xc60] sm:$0xff]
      %v713 = vld [vmem:[%s289 + $0xc68] sm:$0xff]
      %v714 = vld [vmem:[%s289 + $0xc70] sm:$0xff]
      %v715 = vld [vmem:[%s289 + $0xc78] sm:$0xff]
      %v716 = vld [vmem:[%s289 + $0xc80] sm:$0xff]
      %v717 = vld [vmem:[%s289 + $0xc88] sm:$0xff]
      %v718 = vld [vmem:[%s289 + $0xc90] sm:$0xff]
      %v719 = vld [vmem:[%s289 + $0xc98] sm:$0xff]
      %v720 = vld [vmem:[%s289 + $0xca0] sm:$0xff]
      %v721 = vld [vmem:[%s289 + $0xca8] sm:$0xff]
      %v722 = vld [vmem:[%s289 + $0xcb0] sm:$0xff]
      %v723 = vld [vmem:[%s289 + $0xcb8] sm:$0xff]
      %v724 = vld [vmem:[%s289 + $0xcc0] sm:$0xff]
      %v725 = vld [vmem:[%s289 + $0xcc8] sm:$0xff]
      %v726 = vld [vmem:[%s289 + $0xcd0] sm:$0xff]
      %v727 = vld [vmem:[%s289 + $0xcd8] sm:$0xff]
      %v728 = vld [vmem:[%s289 + $0xce0] sm:$0xff]
      %v729 = vld [vmem:[%s289 + $0xce8] sm:$0xff]
      %v730 = vld [vmem:[%s289 + $0xcf0] sm:$0xff]
      %v731 = vld [vmem:[%s289 + $0xcf8] sm:$0xff]
      %v732 = vld [vmem:[%s289 + $0xd00] sm:$0xff]
      %v733 = vld [vmem:[%s289 + $0xd08] sm:$0xff]
      %v734 = vld [vmem:[%s289 + $0xd10] sm:$0xff]
      %v735 = vld [vmem:[%s289 + $0xd18] sm:$0xff]
      %v736 = vld [vmem:[%s289 + $0xd20] sm:$0xff]
      %v737 = vld [vmem:[%s289 + $0xd28] sm:$0xff]
      %v738 = vld [vmem:[%s289 + $0xd30] sm:$0xff]
      %v739 = vld [vmem:[%s289 + $0xd38] sm:$0xff]
      %v740 = vld [vmem:[%s289 + $0xd40] sm:$0xff]
      %v741 = vld [vmem:[%s289 + $0xd48] sm:$0xff]
      %v742 = vld [vmem:[%s289 + $0xd50] sm:$0xff]
      %v743 = vld [vmem:[%s289 + $0xd58] sm:$0xff]
      %v744 = vld [vmem:[%s289 + $0xd60] sm:$0xff]
      %v745 = vld [vmem:[%s289 + $0xd68] sm:$0xff]
      %v746 = vld [vmem:[%s289 + $0xd70] sm:$0xff]
      %v747 = vld [vmem:[%s289 + $0xd78] sm:$0xff]
      %v748 = vld [vmem:[%s289 + $0xd80] sm:$0xff]
      %v749 = vld [vmem:[%s289 + $0xd88] sm:$0xff]
      %v750 = vld [vmem:[%s289 + $0xd90] sm:$0xff]
      %v751 = vld [vmem:[%s289 + $0xd98] sm:$0xff]
      %v752 = vld [vmem:[%s289 + $0xda0] sm:$0xff]
      %v753 = vld [vmem:[%s289 + $0xda8] sm:$0xff]
      %v754 = vld [vmem:[%s289 + $0xdb0] sm:$0xff]
      %v755 = vld [vmem:[%s289 + $0xdb8] sm:$0xff]
      %v756 = vld [vmem:[%s289 + $0xdc0] sm:$0xff]
      %v757 = vld [vmem:[%s289 + $0xdc8] sm:$0xff]
      %v758 = vld [vmem:[%s289 + $0xdd0] sm:$0xff]
      %v759 = vld [vmem:[%s289 + $0xdd8] sm:$0xff]
      %v760 = vld [vmem:[%s289 + $0xde0] sm:$0xff]
      %v761 = vld [vmem:[%s289 + $0xde8] sm:$0xff]
      %v762 = vld [vmem:[%s289 + $0xdf0] sm:$0xff]
      %v763 = vld [vmem:[%s289 + $0xdf8] sm:$0xff]
      %v764 = vld [vmem:[%s289 + $0xe00] sm:$0xff]
      %v765 = vld [vmem:[%s289 + $0xe08] sm:$0xff]
      %v766 = vld [vmem:[%s289 + $0xe10] sm:$0xff]
      %v767 = vld [vmem:[%s289 + $0xe18] sm:$0xff]
      %v768 = vld [vmem:[%s289 + $0xe20] sm:$0xff]
      %v769 = vld [vmem:[%s289 + $0xe28] sm:$0xff]
      %v770 = vld [vmem:[%s289 + $0xe30] sm:$0xff]
      %v771 = vld [vmem:[%s289 + $0xe38] sm:$0xff]
      %v772 = vld [vmem:[%s289 + $0xe40] sm:$0xff]
      %v773 = vld [vmem:[%s289 + $0xe48] sm:$0xff]
      %v774 = vld [vmem:[%s289 + $0xe50] sm:$0xff]
      %v775 = vld [vmem:[%s289 + $0xe58] sm:$0xff]
      %v776 = vld [vmem:[%s289 + $0xe60] sm:$0xff]
      %v777 = vld [vmem:[%s289 + $0xe68] sm:$0xff]
      %v778 = vld [vmem:[%s289 + $0xe70] sm:$0xff]
      %v779 = vld [vmem:[%s289 + $0xe78] sm:$0xff]
      %v780 = vld [vmem:[%s289 + $0xe80] sm:$0xff]
      %v781 = vld [vmem:[%s289 + $0xe88] sm:$0xff]
      %v782 = vld [vmem:[%s289 + $0xe90] sm:$0xff]
      %v783 = vld [vmem:[%s289 + $0xe98] sm:$0xff]
      %v784 = vld [vmem:[%s289 + $0xea0] sm:$0xff]
      %v785 = vld [vmem:[%s289 + $0xea8] sm:$0xff]
      %v786 = vld [vmem:[%s289 + $0xeb0] sm:$0xff]
      %v787 = vld [vmem:[%s289 + $0xeb8] sm:$0xff]
      %v788 = vld [vmem:[%s289 + $0xec0] sm:$0xff]
      %v789 = vld [vmem:[%s289 + $0xec8] sm:$0xff]
      %v790 = vld [vmem:[%s289 + $0xed0] sm:$0xff]
      %v791 = vld [vmem:[%s289 + $0xed8] sm:$0xff]
      %v792 = vld [vmem:[%s289 + $0xee0] sm:$0xff]
      %v793 = vld [vmem:[%s289 + $0xee8] sm:$0xff]
      %v794 = vld [vmem:[%s289 + $0xef0] sm:$0xff]
      %v795 = vld [vmem:[%s289 + $0xef8] sm:$0xff]
      %v796 = vld [vmem:[%s289 + $0xf00] sm:$0xff]
      %v797 = vld [vmem:[%s289 + $0xf08] sm:$0xff]
      %v798 = vld [vmem:[%s289 + $0xf10] sm:$0xff]
      %v799 = vld [vmem:[%s289 + $0xf18] sm:$0xff]
      %v800 = vld [vmem:[%s289 + $0xf20] sm:$0xff]
      %v801 = vld [vmem:[%s289 + $0xf28] sm:$0xff]
      %v802 = vld [vmem:[%s289 + $0xf30] sm:$0xff]
      %v803 = vld [vmem:[%s289 + $0xf38] sm:$0xff]
      %v804 = vld [vmem:[%s289 + $0xf40] sm:$0xff]
      %v805 = vld [vmem:[%s289 + $0xf48] sm:$0xff]
      %v806 = vld [vmem:[%s289 + $0xf50] sm:$0xff]
      %v807 = vld [vmem:[%s289 + $0xf58] sm:$0xff]
      %v808 = vld [vmem:[%s289 + $0xf60] sm:$0xff]
      %v809 = vld [vmem:[%s289 + $0xf68] sm:$0xff]
      %v810 = vld [vmem:[%s289 + $0xf70] sm:$0xff]
      %v811 = vld [vmem:[%s289 + $0xf78] sm:$0xff]
      %v812 = vld [vmem:[%s289 + $0xf80] sm:$0xff]
      %v813 = vld [vmem:[%s289 + $0xf88] sm:$0xff]
      %v814 = vld [vmem:[%s289 + $0xf90] sm:$0xff]
      %v815 = vld [vmem:[%s289 + $0xf98] sm:$0xff]
      %v816 = vld [vmem:[%s289 + $0xfa0] sm:$0xff]
      %v817 = vld [vmem:[%s289 + $0xfa8] sm:$0xff]
      %v818 = vld [vmem:[%s289 + $0xfb0] sm:$0xff]
      %v819 = vld [vmem:[%s289 + $0xfb8] sm:$0xff]
      %v820 = vld [vmem:[%s289 + $0xfc0] sm:$0xff]
      %v821 = vld [vmem:[%s289 + $0xfc8] sm:$0xff]
      %v822 = vld [vmem:[%s289 + $0xfd0] sm:$0xff]
      %v823 = vld [vmem:[%s289 + $0xfd8] sm:$0xff]
      %v824 = vld [vmem:[%s289 + $0xfe0] sm:$0xff]
      %v825 = vld [vmem:[%s289 + $0xfe8] sm:$0xff]
      %v826 = vld [vmem:[%s289 + $0xff0] sm:$0xff]
      %v827 = vld [vmem:[%s289 + $0xff8] sm:$0xff]
      %v828 = vld [vmem:[%s289 + $0x1000] sm:$0xff]
      %v829 = vld [vmem:[%s289 + $0x1008] sm:$0xff]
      %v830 = vld [vmem:[%s289 + $0x1010] sm:$0xff]
      %v831 = vld [vmem:[%s289 + $0x1018] sm:$0xff]
      %v832 = vld [vmem:[%s289 + $0x1020] sm:$0xff]
      %v833 = vld [vmem:[%s289 + $0x1028] sm:$0xff]
      %v834 = vld [vmem:[%s289 + $0x1030] sm:$0xff]
      %v835 = vld [vmem:[%s289 + $0x1038] sm:$0xff]
      %v836 = vld [vmem:[%s289 + $0x1040] sm:$0xff]
      %v837 = vld [vmem:[%s289 + $0x1048] sm:$0xff]
      %v838 = vld [vmem:[%s289 + $0x1050] sm:$0xff]
      %v839 = vld [vmem:[%s289 + $0x1058] sm:$0xff]
      %v840 = vld [vmem:[%s289 + $0x1060] sm:$0xff]
      %v841 = vld [vmem:[%s289 + $0x1068] sm:$0xff]
      %v842 = vld [vmem:[%s289 + $0x1070] sm:$0xff]
      %v843 = vld [vmem:[%s289 + $0x1078] sm:$0xff]
      %v844 = vld [vmem:[%s289 + $0x1080] sm:$0xff]
      %v845 = vld [vmem:[%s289 + $0x1088] sm:$0xff]
      %v846 = vld [vmem:[%s289 + $0x1090] sm:$0xff]
      %v847 = vld [vmem:[%s289 + $0x1098] sm:$0xff]
      %v848 = vld [vmem:[%s289 + $0x10a0] sm:$0xff]
      %v849 = vld [vmem:[%s289 + $0x10a8] sm:$0xff]
      %v850 = vld [vmem:[%s289 + $0x10b0] sm:$0xff]
      %v851 = vld [vmem:[%s289 + $0x10b8] sm:$0xff]
      %v852 = vld [vmem:[%s289 + $0x10c0] sm:$0xff]
      %v853 = vld [vmem:[%s289 + $0x10c8] sm:$0xff]
      %v854 = vld [vmem:[%s289 + $0x10d0] sm:$0xff]
      %v855 = vld [vmem:[%s289 + $0x10d8] sm:$0xff]
      %v856 = vld [vmem:[%s289 + $0x10e0] sm:$0xff]
      %v857 = vld [vmem:[%s289 + $0x10e8] sm:$0xff]
      %v858 = vld [vmem:[%s289 + $0x10f0] sm:$0xff]
      %v859 = vld [vmem:[%s289 + $0x10f8] sm:$0xff]
      %v860 = vld [vmem:[%s289 + $0x1100] sm:$0xff]
      %v861 = vld [vmem:[%s289 + $0x1108] sm:$0xff]
      %v862 = vld [vmem:[%s289 + $0x1110] sm:$0xff]
      %v863 = vld [vmem:[%s289 + $0x1118] sm:$0xff]
      %v864 = vld [vmem:[%s289 + $0x1120] sm:$0xff]
      %v865 = vld [vmem:[%s289 + $0x1128] sm:$0xff]
      %v866 = vld [vmem:[%s289 + $0x1130] sm:$0xff]
      %v867 = vld [vmem:[%s289 + $0x1138] sm:$0xff]
      %v868 = vld [vmem:[%s289 + $0x1140] sm:$0xff]
      %v869 = vld [vmem:[%s289 + $0x1148] sm:$0xff]
      %v870 = vld [vmem:[%s289 + $0x1150] sm:$0xff]
      %v871 = vld [vmem:[%s289 + $0x1158] sm:$0xff]
      %v872 = vld [vmem:[%s289 + $0x1160] sm:$0xff]
      %v873 = vld [vmem:[%s289 + $0x1168] sm:$0xff]
      %v874 = vld [vmem:[%s289 + $0x1170] sm:$0xff]
      %v875 = vld [vmem:[%s289 + $0x1178] sm:$0xff]
      %v876 = vld [vmem:[%s289 + $0x1180] sm:$0xff]
      %v877 = vld [vmem:[%s289 + $0x1188] sm:$0xff]
      %v878 = vld [vmem:[%s289 + $0x1190] sm:$0xff]
      %v879 = vld [vmem:[%s289 + $0x1198] sm:$0xff]
      %v880 = vld [vmem:[%s289 + $0x11a0] sm:$0xff]
      %v881 = vld [vmem:[%s289 + $0x11a8] sm:$0xff]
      %v882 = vld [vmem:[%s289 + $0x11b0] sm:$0xff]
      %v883 = vld [vmem:[%s289 + $0x11b8] sm:$0xff]
      %v884 = vld [vmem:[%s289 + $0x11c0] sm:$0xff]
      %v885 = vld [vmem:[%s289 + $0x11c8] sm:$0xff]
      %v886 = vld [vmem:[%s289 + $0x11d0] sm:$0xff]
      %v887 = vld [vmem:[%s289 + $0x11d8] sm:$0xff]
      %v888 = vld [vmem:[%s289 + $0x11e0] sm:$0xff]
      %v889 = vld [vmem:[%s289 + $0x11e8] sm:$0xff]
      %v890 = vld [vmem:[%s289 + $0x11f0] sm:$0xff]
      %v891 = vld [vmem:[%s289 + $0x11f8] sm:$0xff]
      %v892 = vld [vmem:[%s289 + $0x1200] sm:$0xff]
      %v893 = vld [vmem:[%s289 + $0x1208] sm:$0xff]
      %v894 = vld [vmem:[%s289 + $0x1210] sm:$0xff]
      %v895 = vld [vmem:[%s289 + $0x1218] sm:$0xff]
      %v896 = vld [vmem:[%s289 + $0x1220] sm:$0xff]
      %v897 = vld [vmem:[%s289 + $0x1228] sm:$0xff]
      %v898 = vld [vmem:[%s289 + $0x1230] sm:$0xff]
      %v899 = vld [vmem:[%s289 + $0x1238] sm:$0xff]
      %v900 = vld [vmem:[%s289 + $0x1240] sm:$0xff]
      %v901 = vld [vmem:[%s289 + $0x1248] sm:$0xff]
      %v902 = vld [vmem:[%s289 + $0x1250] sm:$0xff]
      %v903 = vld [vmem:[%s289 + $0x1258] sm:$0xff]
      %v904 = vld [vmem:[%s289 + $0x1260] sm:$0xff]
      %v905 = vld [vmem:[%s289 + $0x1268] sm:$0xff]
      %v906 = vld [vmem:[%s289 + $0x1270] sm:$0xff]
      %v907 = vld [vmem:[%s289 + $0x1278] sm:$0xff]
      %v908 = vld [vmem:[%s289 + $0x1280] sm:$0xff]
      %v909 = vld [vmem:[%s289 + $0x1288] sm:$0xff]
      %v910 = vld [vmem:[%s289 + $0x1290] sm:$0xff]
      %v911 = vld [vmem:[%s289 + $0x1298] sm:$0xff]
      %v912 = vld [vmem:[%s289 + $0x12a0] sm:$0xff]
      %v913 = vld [vmem:[%s289 + $0x12a8] sm:$0xff]
      %v914 = vld [vmem:[%s289 + $0x12b0] sm:$0xff]
      %v915 = vld [vmem:[%s289 + $0x12b8] sm:$0xff]
      %v916 = vld [vmem:[%s289 + $0x12c0] sm:$0xff]
      %v917 = vld [vmem:[%s289 + $0x12c8] sm:$0xff]
      %v918 = vld [vmem:[%s289 + $0x12d0] sm:$0xff]
      %v919 = vld [vmem:[%s289 + $0x12d8] sm:$0xff]
      %v920 = vld [vmem:[%s289 + $0x12e0] sm:$0xff]
      %v921 = vld [vmem:[%s289 + $0x12e8] sm:$0xff]
      %v922 = vld [vmem:[%s289 + $0x12f0] sm:$0xff]
      %v923 = vld [vmem:[%s289 + $0x12f8] sm:$0xff]
      %v924 = vld [vmem:[%s289 + $0x1300] sm:$0xff]
      %v925 = vld [vmem:[%s289 + $0x1308] sm:$0xff]
      %v926 = vld [vmem:[%s289 + $0x1310] sm:$0xff]
      %v927 = vld [vmem:[%s289 + $0x1318] sm:$0xff]
      %v928 = vld [vmem:[%s289 + $0x1320] sm:$0xff]
      %v929 = vld [vmem:[%s289 + $0x1328] sm:$0xff]
      %v930 = vld [vmem:[%s289 + $0x1330] sm:$0xff]
      %v931 = vld [vmem:[%s289 + $0x1338] sm:$0xff]
      %v932 = vld [vmem:[%s289 + $0x1340] sm:$0xff]
      %v933 = vld [vmem:[%s289 + $0x1348] sm:$0xff]
      %v934 = vld [vmem:[%s289 + $0x1350] sm:$0xff]
      %v935 = vld [vmem:[%s289 + $0x1358] sm:$0xff]
      %v936 = vld [vmem:[%s289 + $0x1360] sm:$0xff]
      %v937 = vld [vmem:[%s289 + $0x1368] sm:$0xff]
      %v938 = vld [vmem:[%s289 + $0x1370] sm:$0xff]
      %v939 = vld [vmem:[%s289 + $0x1378] sm:$0xff]
      %v940 = vld [vmem:[%s289 + $0x1380] sm:$0xff]
      %v941 = vld [vmem:[%s289 + $0x1388] sm:$0xff]
      %v942 = vld [vmem:[%s289 + $0x1390] sm:$0xff]
      %v943 = vld [vmem:[%s289 + $0x1398] sm:$0xff]
      %v944 = vld [vmem:[%s289 + $0x13a0] sm:$0xff]
      %v945 = vld [vmem:[%s289 + $0x13a8] sm:$0xff]
      %v946 = vld [vmem:[%s289 + $0x13b0] sm:$0xff]
      %v947 = vld [vmem:[%s289 + $0x13b8] sm:$0xff]
      %v948 = vld [vmem:[%s289 + $0x13c0] sm:$0xff]
      %v949 = vld [vmem:[%s289 + $0x13c8] sm:$0xff]
      %v950 = vld [vmem:[%s289 + $0x13d0] sm:$0xff]
      %v951 = vld [vmem:[%s289 + $0x13d8] sm:$0xff]
      %v952 = vld [vmem:[%s289 + $0x13e0] sm:$0xff]
      %v953 = vld [vmem:[%s289 + $0x13e8] sm:$0xff]
      %v954 = vld [vmem:[%s289 + $0x13f0] sm:$0xff]
      %v955 = vld [vmem:[%s289 + $0x13f8] sm:$0xff]
      %v956 = vld [vmem:[%s289 + $0x1400] sm:$0xff]
      %v957 = vld [vmem:[%s289 + $0x1408] sm:$0xff]
      %v958 = vld [vmem:[%s289 + $0x1410] sm:$0xff]
      %v959 = vld [vmem:[%s289 + $0x1418] sm:$0xff]
      %v960 = vld [vmem:[%s289 + $0x1420] sm:$0xff]
      %v961 = vld [vmem:[%s289 + $0x1428] sm:$0xff]
      %v962 = vld [vmem:[%s289 + $0x1430] sm:$0xff]
      %v963 = vld [vmem:[%s289 + $0x1438] sm:$0xff]
      %v964 = vld [vmem:[%s289 + $0x1440] sm:$0xff]
      %v965 = vld [vmem:[%s289 + $0x1448] sm:$0xff]
      %v966 = vld [vmem:[%s289 + $0x1450] sm:$0xff]
      %v967 = vld [vmem:[%s289 + $0x1458] sm:$0xff]
      %v968 = vld [vmem:[%s289 + $0x1460] sm:$0xff]
      %v969 = vld [vmem:[%s289 + $0x1468] sm:$0xff]
      %v970 = vld [vmem:[%s289 + $0x1470] sm:$0xff]
      %v971 = vld [vmem:[%s289 + $0x1478] sm:$0xff]
      %v972 = vld [vmem:[%s289 + $0x1480] sm:$0xff]
      %v973 = vld [vmem:[%s289 + $0x1488] sm:$0xff]
      %v974 = vld [vmem:[%s289 + $0x1490] sm:$0xff]
      %v975 = vld [vmem:[%s289 + $0x1498] sm:$0xff]
      %v976 = vld [vmem:[%s289 + $0x14a0] sm:$0xff]
      %v977 = vld [vmem:[%s289 + $0x14a8] sm:$0xff]
      %v978 = vld [vmem:[%s289 + $0x14b0] sm:$0xff]
      %v979 = vld [vmem:[%s289 + $0x14b8] sm:$0xff]
      %v980 = vld [vmem:[%s289 + $0x14c0] sm:$0xff]
      %v981 = vld [vmem:[%s289 + $0x14c8] sm:$0xff]
      %v982 = vld [vmem:[%s289 + $0x14d0] sm:$0xff]
      %v983 = vld [vmem:[%s289 + $0x14d8] sm:$0xff]
      %v984 = vld [vmem:[%s289 + $0x14e0] sm:$0xff]
      %v985 = vld [vmem:[%s289 + $0x14e8] sm:$0xff]
      %v986 = vld [vmem:[%s289 + $0x14f0] sm:$0xff]
      %v987 = vld [vmem:[%s289 + $0x14f8] sm:$0xff]
      %v988 = vld [vmem:[%s289 + $0x1500] sm:$0xff]
      %v989 = vld [vmem:[%s289 + $0x1508] sm:$0xff]
      %v990 = vld [vmem:[%s289 + $0x1510] sm:$0xff]
      %v991 = vld [vmem:[%s289 + $0x1518] sm:$0xff]
      %v992 = vld [vmem:[%s289 + $0x1520] sm:$0xff]
      %v993 = vld [vmem:[%s289 + $0x1528] sm:$0xff]
      %v994 = vld [vmem:[%s289 + $0x1530] sm:$0xff]
      %v995 = vld [vmem:[%s289 + $0x1538] sm:$0xff]
      %v996 = vld [vmem:[%s289 + $0x1540] sm:$0xff]
      %v997 = vld [vmem:[%s289 + $0x1548] sm:$0xff]
      %v998 = vld [vmem:[%s289 + $0x1550] sm:$0xff]
      %v999 = vld [vmem:[%s289 + $0x1558] sm:$0xff]
      %v1000 = vld [vmem:[%s289 + $0x1560] sm:$0xff]
      %v1001 = vld [vmem:[%s289 + $0x1568] sm:$0xff]
      %v1002 = vld [vmem:[%s289 + $0x1570] sm:$0xff]
      %v1003 = vld [vmem:[%s289 + $0x1578] sm:$0xff]
      %v1004 = vld [vmem:[%s289 + $0x1580] sm:$0xff]
      %v1005 = vld [vmem:[%s289 + $0x1588] sm:$0xff]
      %v1006 = vld [vmem:[%s289 + $0x1590] sm:$0xff]
      %v1007 = vld [vmem:[%s289 + $0x1598] sm:$0xff]
      %v1008 = vld [vmem:[%s289 + $0x15a0] sm:$0xff]
      %v1009 = vld [vmem:[%s289 + $0x15a8] sm:$0xff]
      %v1010 = vld [vmem:[%s289 + $0x15b0] sm:$0xff]
      %v1011 = vld [vmem:[%s289 + $0x15b8] sm:$0xff]
      %v1012 = vld [vmem:[%s289 + $0x15c0] sm:$0xff]
      %v1013 = vld [vmem:[%s289 + $0x15c8] sm:$0xff]
      %v1014 = vld [vmem:[%s289 + $0x15d0] sm:$0xff]
      %v1015 = vld [vmem:[%s289 + $0x15d8] sm:$0xff]
      %v1016 = vld [vmem:[%s289 + $0x15e0] sm:$0xff]
      %v1017 = vld [vmem:[%s289 + $0x15e8] sm:$0xff]
      %v1018 = vld [vmem:[%s289 + $0x15f0] sm:$0xff]
      %v1019 = vld [vmem:[%s289 + $0x15f8] sm:$0xff]
      %v1020 = vld [vmem:[%s289 + $0x1600] sm:$0xff]
      %v1021 = vld [vmem:[%s289 + $0x1608] sm:$0xff]
      %v1022 = vld [vmem:[%s289 + $0x1610] sm:$0xff]
      %v1023 = vld [vmem:[%s289 + $0x1618] sm:$0xff]
      %v1024 = vld [vmem:[%s289 + $0x1620] sm:$0xff]
      %v1025 = vld [vmem:[%s289 + $0x1628] sm:$0xff]
      %v1026 = vld [vmem:[%s289 + $0x1630] sm:$0xff]
      %v1027 = vld [vmem:[%s289 + $0x1638] sm:$0xff]
      %v1028 = vld [vmem:[%s289 + $0x1640] sm:$0xff]
      %v1029 = vld [vmem:[%s289 + $0x1648] sm:$0xff]
      %v1030 = vld [vmem:[%s289 + $0x1650] sm:$0xff]
      %v1031 = vld [vmem:[%s289 + $0x1658] sm:$0xff]
      %v1032 = vld [vmem:[%s289 + $0x1660] sm:$0xff]
      %v1033 = vld [vmem:[%s289 + $0x1668] sm:$0xff]
      %v1034 = vld [vmem:[%s289 + $0x1670] sm:$0xff]
      %v1035 = vld [vmem:[%s289 + $0x1678] sm:$0xff]
      %v1036 = vld [vmem:[%s289 + $0x1680] sm:$0xff]
      %v1037 = vld [vmem:[%s289 + $0x1688] sm:$0xff]
      %v1038 = vld [vmem:[%s289 + $0x1690] sm:$0xff]
      %v1039 = vld [vmem:[%s289 + $0x1698] sm:$0xff]
      %v1040 = vld [vmem:[%s289 + $0x16a0] sm:$0xff]
      %v1041 = vld [vmem:[%s289 + $0x16a8] sm:$0xff]
      %v1042 = vld [vmem:[%s289 + $0x16b0] sm:$0xff]
      %v1043 = vld [vmem:[%s289 + $0x16b8] sm:$0xff]
      %v1044 = vld [vmem:[%s289 + $0x16c0] sm:$0xff]
      %v1045 = vld [vmem:[%s289 + $0x16c8] sm:$0xff]
      %v1046 = vld [vmem:[%s289 + $0x16d0] sm:$0xff]
      %v1047 = vld [vmem:[%s289 + $0x16d8] sm:$0xff]
      %v1048 = vld [vmem:[%s289 + $0x16e0] sm:$0xff]
      %v1049 = vld [vmem:[%s289 + $0x16e8] sm:$0xff]
      %v1050 = vld [vmem:[%s289 + $0x16f0] sm:$0xff]
      %v1051 = vld [vmem:[%s289 + $0x16f8] sm:$0xff]
      %v1052 = vld [vmem:[%s289 + $0x1700] sm:$0xff]
      %v1053 = vld [vmem:[%s289 + $0x1708] sm:$0xff]
      %v1054 = vld [vmem:[%s289 + $0x1710] sm:$0xff]
      %v1055 = vld [vmem:[%s289 + $0x1718] sm:$0xff]
      %v1056 = vld [vmem:[%s289 + $0x1720] sm:$0xff]
      %v1057 = vld [vmem:[%s289 + $0x1728] sm:$0xff]
      %v1058 = vld [vmem:[%s289 + $0x1730] sm:$0xff]
      %v1059 = vld [vmem:[%s289 + $0x1738] sm:$0xff]
      %v1060 = vld [vmem:[%s289 + $0x1740] sm:$0xff]
      %v1061 = vld [vmem:[%s289 + $0x1748] sm:$0xff]
      %v1062 = vld [vmem:[%s289 + $0x1750] sm:$0xff]
      %v1063 = vld [vmem:[%s289 + $0x1758] sm:$0xff]
      %v1064 = vld [vmem:[%s289 + $0x1760] sm:$0xff]
      %v1065 = vld [vmem:[%s289 + $0x1768] sm:$0xff]
      %v1066 = vld [vmem:[%s289 + $0x1770] sm:$0xff]
      %v1067 = vld [vmem:[%s289 + $0x1778] sm:$0xff]
      %v1068 = vld [vmem:[%s289 + $0x1780] sm:$0xff]
      %v1069 = vld [vmem:[%s289 + $0x1788] sm:$0xff]
      %v1070 = vld [vmem:[%s289 + $0x1790] sm:$0xff]
      %v1071 = vld [vmem:[%s289 + $0x1798] sm:$0xff]
      %v1072 = vld [vmem:[%s289 + $0x17a0] sm:$0xff]
      %v1073 = vld [vmem:[%s289 + $0x17a8] sm:$0xff]
      %v1074 = vld [vmem:[%s289 + $0x17b0] sm:$0xff]
      %v1075 = vld [vmem:[%s289 + $0x17b8] sm:$0xff]
      %v1076 = vld [vmem:[%s289 + $0x17c0] sm:$0xff]
      %v1077 = vld [vmem:[%s289 + $0x17c8] sm:$0xff]
      %v1078 = vld [vmem:[%s289 + $0x17d0] sm:$0xff]
      %v1079 = vld [vmem:[%s289 + $0x17d8] sm:$0xff]
      %v1080 = vld [vmem:[%s289 + $0x17e0] sm:$0xff]
      %v1081 = vld [vmem:[%s289 + $0x17e8] sm:$0xff]
      %v1082 = vld [vmem:[%s289 + $0x17f0] sm:$0xff]
      %v1083 = vld [vmem:[%s289 + $0x17f8] sm:$0xff]
      %1084 = vmatprep.subr.mxu0 %v317
      %1085 = vmatpush1.msra.mxu0 %v316
      %1086 = vmatprep.subr.mxu0 %v321
      %1087 = vmatpush1.msra.mxu0 %v320
      %1088 = vmatprep.subr.mxu0 %v325
      %1089 = vmatpush1.msra.mxu0 %v324
      %1090 = vmatprep.subr.mxu0 %v329
      %1091 = vmatpush1.msra.mxu0 %v328
      %1092 = vmatprep.subr.mxu0 %v333
      %1093 = vmatpush1.msra.mxu0 %v332
      %1094 = vmatprep.subr.mxu0 %v337
      %1095 = vmatpush1.msra.mxu0 %v336
      %1096 = vmatprep.subr.mxu0 %v341
      %1097 = vmatpush1.msra.mxu0 %v340
      %1098 = vmatprep.subr.mxu0 %v345
      %1099 = vmatpush1.msra.mxu0 %v344
      %1100 = vmatprep.subr.mxu0 %v349
      %1101 = vmatpush1.msra.mxu0 %v348
      %1102 = vmatprep.subr.mxu0 %v353
      %1103 = vmatpush1.msra.mxu0 %v352
      %1104 = vmatprep.subr.mxu0 %v357
      %1105 = vmatpush1.msra.mxu0 %v356
      %1106 = vmatprep.subr.mxu0 %v361
      %1107 = vmatpush1.msra.mxu0 %v360
      %1108 = vmatprep.subr.mxu0 %v365
      %1109 = vmatpush1.msra.mxu0 %v364
      %1110 = vmatprep.subr.mxu0 %v369
      %1111 = vmatpush1.msra.mxu0 %v368
      %1112 = vmatprep.subr.mxu0 %v373
      %1113 = vmatpush1.msra.mxu0 %v372
      %1114 = vmatprep.subr.mxu0 %v377
      %1115 = vmatpush1.msra.mxu0 %v376
      %1116 = vmatprep.subr.mxu0 %v381
      %1117 = vmatpush1.msra.mxu0 %v380
      %1118 = vmatprep.subr.mxu0 %v385
      %1119 = vmatpush1.msra.mxu0 %v384
      %1120 = vmatprep.subr.mxu0 %v389
      %1121 = vmatpush1.msra.mxu0 %v388
      %1122 = vmatprep.subr.mxu0 %v393
      %1123 = vmatpush1.msra.mxu0 %v392
      %1124 = vmatprep.subr.mxu0 %v397
      %1125 = vmatpush1.msra.mxu0 %v396
      %1126 = vmatprep.subr.mxu0 %v401
      %1127 = vmatpush1.msra.mxu0 %v400
      %1128 = vmatprep.subr.mxu0 %v405
      %1129 = vmatpush1.msra.mxu0 %v404
      %1130 = vmatprep.subr.mxu0 %v409
      %1131 = vmatpush1.msra.mxu0 %v408
      %1132 = vmatprep.subr.mxu0 %v413
      %1133 = vmatpush1.msra.mxu0 %v412
      %1134 = vmatprep.subr.mxu0 %v417
      %1135 = vmatpush1.msra.mxu0 %v416
      %1136 = vmatprep.subr.mxu0 %v421
      %1137 = vmatpush1.msra.mxu0 %v420
      %1138 = vmatprep.subr.mxu0 %v425
      %1139 = vmatpush1.msra.mxu0 %v424
      %1140 = vmatprep.subr.mxu0 %v429
      %1141 = vmatpush1.msra.mxu0 %v428
      %1142 = vmatprep.subr.mxu0 %v433
      %1143 = vmatpush1.msra.mxu0 %v432
      %1144 = vmatprep.subr.mxu0 %v437
      %1145 = vmatpush1.msra.mxu0 %v436
      %1146 = vmatprep.subr.mxu0 %v441
      %1147 = vmatpush1.msra.mxu0 %v440
      %1148 = vmatprep.mubr.f32.mxu0 %v305
      %1149 = vmatmul.mubr.f32.gmra.mrb[0].mxu0 %v304
      %v1150 = vpop.f32.mrb[0].mxu0
      %v1151 = vadd.f32 0.0, %v1150
      %v1152 = vpop.f32.mrb[0].mxu0
      %v1153 = vadd.f32 0.0, %v1152
      %1154 = vdwg.mxu0
      %1155 = vmatprep.subr.mxu0 %v445
      %1156 = vmatpush1.msra.mxu0 %v444
      %1157 = vmatprep.subr.mxu0 %v449
      %1158 = vmatpush1.msra.mxu0 %v448
      %1159 = vmatprep.subr.mxu0 %v453
      %1160 = vmatpush1.msra.mxu0 %v452
      %1161 = vmatprep.subr.mxu0 %v457
      %1162 = vmatpush1.msra.mxu0 %v456
      %1163 = vmatprep.subr.mxu0 %v461
      %1164 = vmatpush1.msra.mxu0 %v460
      %1165 = vmatprep.subr.mxu0 %v465
      %1166 = vmatpush1.msra.mxu0 %v464
      %1167 = vmatprep.subr.mxu0 %v469
      %1168 = vmatpush1.msra.mxu0 %v468
      %1169 = vmatprep.subr.mxu0 %v473
      %1170 = vmatpush1.msra.mxu0 %v472
      %1171 = vmatprep.subr.mxu0 %v477
      %1172 = vmatpush1.msra.mxu0 %v476
      %1173 = vmatprep.subr.mxu0 %v481
      %1174 = vmatpush1.msra.mxu0 %v480
      %1175 = vmatprep.subr.mxu0 %v485
      %1176 = vmatpush1.msra.mxu0 %v484
      %1177 = vmatprep.subr.mxu0 %v489
      %1178 = vmatpush1.msra.mxu0 %v488
      %1179 = vmatprep.subr.mxu0 %v493
      %1180 = vmatpush1.msra.mxu0 %v492
      %1181 = vmatprep.subr.mxu0 %v497
      %1182 = vmatpush1.msra.mxu0 %v496
      %1183 = vmatprep.subr.mxu0 %v501
      %1184 = vmatpush1.msra.mxu0 %v500
      %1185 = vmatprep.subr.mxu0 %v505
      %1186 = vmatpush1.msra.mxu0 %v504
      %1187 = vmatprep.subr.mxu0 %v509
      %1188 = vmatpush1.msra.mxu0 %v508
      %1189 = vmatprep.subr.mxu0 %v513
      %1190 = vmatpush1.msra.mxu0 %v512
      %1191 = vmatprep.subr.mxu0 %v517
      %1192 = vmatpush1.msra.mxu0 %v516
      %1193 = vmatprep.subr.mxu0 %v521
      %1194 = vmatpush1.msra.mxu0 %v520
      %1195 = vmatprep.subr.mxu0 %v525
      %1196 = vmatpush1.msra.mxu0 %v524
      %1197 = vmatprep.subr.mxu0 %v529
      %1198 = vmatpush1.msra.mxu0 %v528
      %1199 = vmatprep.subr.mxu0 %v533
      %1200 = vmatpush1.msra.mxu0 %v532
      %1201 = vmatprep.subr.mxu0 %v537
      %1202 = vmatpush1.msra.mxu0 %v536
      %1203 = vmatprep.subr.mxu0 %v541
      %1204 = vmatpush1.msra.mxu0 %v540
      %1205 = vmatprep.subr.mxu0 %v545
      %1206 = vmatpush1.msra.mxu0 %v544
      %1207 = vmatprep.subr.mxu0 %v549
      %1208 = vmatpush1.msra.mxu0 %v548
      %1209 = vmatprep.subr.mxu0 %v553
      %1210 = vmatpush1.msra.mxu0 %v552
      %1211 = vmatprep.subr.mxu0 %v557
      %1212 = vmatpush1.msra.mxu0 %v556
      %1213 = vmatprep.subr.mxu0 %v561
      %1214 = vmatpush1.msra.mxu0 %v560
      %1215 = vmatprep.subr.mxu0 %v565
      %1216 = vmatpush1.msra.mxu0 %v564
      %1217 = vmatprep.subr.mxu0 %v569
      %1218 = vmatpush1.msra.mxu0 %v568
      %1219 = vmatprep.mubr.f32.mxu0 %v307
      %1220 = vmatmul.mubr.f32.gmra.mrb[0].mxu0 %v306
      %v1221 = vpop.f32.mrb[0].mxu0
      %v1222 = vadd.f32 %v1151, %v1221
      %v1223 = vpop.f32.mrb[0].mxu0
      %v1224 = vadd.f32 %v1153, %v1223
      %1225 = vdwg.mxu0
      %1226 = vmatprep.subr.mxu0 %v573
      %1227 = vmatpush1.msra.mxu0 %v572
      %1228 = vmatprep.subr.mxu0 %v577
      %1229 = vmatpush1.msra.mxu0 %v576
      %1230 = vmatprep.subr.mxu0 %v581
      %1231 = vmatpush1.msra.mxu0 %v580
      %1232 = vmatprep.subr.mxu0 %v585
      %1233 = vmatpush1.msra.mxu0 %v584
      %1234 = vmatprep.subr.mxu0 %v589
      %1235 = vmatpush1.msra.mxu0 %v588
      %1236 = vmatprep.subr.mxu0 %v593
      %1237 = vmatpush1.msra.mxu0 %v592
      %1238 = vmatprep.subr.mxu0 %v597
      %1239 = vmatpush1.msra.mxu0 %v596
      %1240 = vmatprep.subr.mxu0 %v601
      %1241 = vmatpush1.msra.mxu0 %v600
      %1242 = vmatprep.subr.mxu0 %v605
      %1243 = vmatpush1.msra.mxu0 %v604
      %1244 = vmatprep.subr.mxu0 %v609
      %1245 = vmatpush1.msra.mxu0 %v608
      %1246 = vmatprep.subr.mxu0 %v613
      %1247 = vmatpush1.msra.mxu0 %v612
      %1248 = vmatprep.subr.mxu0 %v617
      %1249 = vmatpush1.msra.mxu0 %v616
      %1250 = vmatprep.subr.mxu0 %v621
      %1251 = vmatpush1.msra.mxu0 %v620
      %1252 = vmatprep.subr.mxu0 %v625
      %1253 = vmatpush1.msra.mxu0 %v624
      %1254 = vmatprep.subr.mxu0 %v629
      %1255 = vmatpush1.msra.mxu0 %v628
      %1256 = vmatprep.subr.mxu0 %v633
      %1257 = vmatpush1.msra.mxu0 %v632
      %1258 = vmatprep.subr.mxu0 %v637
      %1259 = vmatpush1.msra.mxu0 %v636
      %1260 = vmatprep.subr.mxu0 %v641
      %1261 = vmatpush1.msra.mxu0 %v640
      %1262 = vmatprep.subr.mxu0 %v645
      %1263 = vmatpush1.msra.mxu0 %v644
      %1264 = vmatprep.subr.mxu0 %v649
      %1265 = vmatpush1.msra.mxu0 %v648
      %1266 = vmatprep.subr.mxu0 %v653
      %1267 = vmatpush1.msra.mxu0 %v652
      %1268 = vmatprep.subr.mxu0 %v657
      %1269 = vmatpush1.msra.mxu0 %v656
      %1270 = vmatprep.subr.mxu0 %v661
      %1271 = vmatpush1.msra.mxu0 %v660
      %1272 = vmatprep.subr.mxu0 %v665
      %1273 = vmatpush1.msra.mxu0 %v664
      %1274 = vmatprep.subr.mxu0 %v669
      %1275 = vmatpush1.msra.mxu0 %v668
      %1276 = vmatprep.subr.mxu0 %v673
      %1277 = vmatpush1.msra.mxu0 %v672
      %1278 = vmatprep.subr.mxu0 %v677
      %1279 = vmatpush1.msra.mxu0 %v676
      %1280 = vmatprep.subr.mxu0 %v681
      %1281 = vmatpush1.msra.mxu0 %v680
      %1282 = vmatprep.subr.mxu0 %v685
      %1283 = vmatpush1.msra.mxu0 %v684
      %1284 = vmatprep.subr.mxu0 %v689
      %1285 = vmatpush1.msra.mxu0 %v688
      %1286 = vmatprep.subr.mxu0 %v693
      %1287 = vmatpush1.msra.mxu0 %v692
      %1288 = vmatprep.subr.mxu0 %v697
      %1289 = vmatpush1.msra.mxu0 %v696
      %1290 = vmatprep.mubr.f32.mxu0 %v309
      %1291 = vmatmul.mubr.f32.gmra.mrb[0].mxu0 %v308
      %v1292 = vpop.f32.mrb[0].mxu0
      %v1293 = vadd.f32 %v1222, %v1292
      %v1294 = vpop.f32.mrb[0].mxu0
      %v1295 = vadd.f32 %v1224, %v1294
      %1296 = vdwg.mxu0
      %1297 = vmatprep.subr.mxu0 %v701
      %1298 = vmatpush1.msra.mxu0 %v700
      %1299 = vmatprep.subr.mxu0 %v705
      %1300 = vmatpush1.msra.mxu0 %v704
      %1301 = vmatprep.subr.mxu0 %v709
      %1302 = vmatpush1.msra.mxu0 %v708
      %1303 = vmatprep.subr.mxu0 %v713
      %1304 = vmatpush1.msra.mxu0 %v712
      %1305 = vmatprep.subr.mxu0 %v717
      %1306 = vmatpush1.msra.mxu0 %v716
      %1307 = vmatprep.subr.mxu0 %v721
      %1308 = vmatpush1.msra.mxu0 %v720
      %1309 = vmatprep.subr.mxu0 %v725
      %1310 = vmatpush1.msra.mxu0 %v724
      %1311 = vmatprep.subr.mxu0 %v729
      %1312 = vmatpush1.msra.mxu0 %v728
      %1313 = vmatprep.subr.mxu0 %v733
      %1314 = vmatpush1.msra.mxu0 %v732
      %1315 = vmatprep.subr.mxu0 %v737
      %1316 = vmatpush1.msra.mxu0 %v736
      %1317 = vmatprep.subr.mxu0 %v741
      %1318 = vmatpush1.msra.mxu0 %v740
      %1319 = vmatprep.subr.mxu0 %v745
      %1320 = vmatpush1.msra.mxu0 %v744
      %1321 = vmatprep.subr.mxu0 %v749
      %1322 = vmatpush1.msra.mxu0 %v748
      %1323 = vmatprep.subr.mxu0 %v753
      %1324 = vmatpush1.msra.mxu0 %v752
      %1325 = vmatprep.subr.mxu0 %v757
      %1326 = vmatpush1.msra.mxu0 %v756
      %1327 = vmatprep.subr.mxu0 %v761
      %1328 = vmatpush1.msra.mxu0 %v760
      %1329 = vmatprep.subr.mxu0 %v765
      %1330 = vmatpush1.msra.mxu0 %v764
      %1331 = vmatprep.subr.mxu0 %v769
      %1332 = vmatpush1.msra.mxu0 %v768
      %1333 = vmatprep.subr.mxu0 %v773
      %1334 = vmatpush1.msra.mxu0 %v772
      %1335 = vmatprep.subr.mxu0 %v777
      %1336 = vmatpush1.msra.mxu0 %v776
      %1337 = vmatprep.subr.mxu0 %v781
      %1338 = vmatpush1.msra.mxu0 %v780
      %1339 = vmatprep.subr.mxu0 %v785
      %1340 = vmatpush1.msra.mxu0 %v784
      %1341 = vmatprep.subr.mxu0 %v789
      %1342 = vmatpush1.msra.mxu0 %v788
      %1343 = vmatprep.subr.mxu0 %v793
      %1344 = vmatpush1.msra.mxu0 %v792
      %1345 = vmatprep.subr.mxu0 %v797
      %1346 = vmatpush1.msra.mxu0 %v796
      %1347 = vmatprep.subr.mxu0 %v801
      %1348 = vmatpush1.msra.mxu0 %v800
      %1349 = vmatprep.subr.mxu0 %v805
      %1350 = vmatpush1.msra.mxu0 %v804
      %1351 = vmatprep.subr.mxu0 %v809
      %1352 = vmatpush1.msra.mxu0 %v808
      %1353 = vmatprep.subr.mxu0 %v813
      %1354 = vmatpush1.msra.mxu0 %v812
      %1355 = vmatprep.subr.mxu0 %v817
      %1356 = vmatpush1.msra.mxu0 %v816
      %1357 = vmatprep.subr.mxu0 %v821
      %1358 = vmatpush1.msra.mxu0 %v820
      %1359 = vmatprep.subr.mxu0 %v825
      %1360 = vmatpush1.msra.mxu0 %v824
      %1361 = vmatprep.mubr.f32.mxu0 %v311
      %1362 = vmatmul.mubr.f32.gmra.mrb[0].mxu0 %v310
      %v1363 = vpop.f32.mrb[0].mxu0
      %v1364 = vadd.f32 %v1293, %v1363
      %v1365 = vpop.f32.mrb[0].mxu0
      %v1366 = vadd.f32 %v1295, %v1365
      %1367 = vdwg.mxu0
      %1368 = vmatprep.subr.mxu0 %v829
      %1369 = vmatpush1.msra.mxu0 %v828
      %1370 = vmatprep.subr.mxu0 %v833
      %1371 = vmatpush1.msra.mxu0 %v832
      %1372 = vmatprep.subr.mxu0 %v837
      %1373 = vmatpush1.msra.mxu0 %v836
      %1374 = vmatprep.subr.mxu0 %v841
      %1375 = vmatpush1.msra.mxu0 %v840
      %1376 = vmatprep.subr.mxu0 %v845
      %1377 = vmatpush1.msra.mxu0 %v844
      %1378 = vmatprep.subr.mxu0 %v849
      %1379 = vmatpush1.msra.mxu0 %v848
      %1380 = vmatprep.subr.mxu0 %v853
      %1381 = vmatpush1.msra.mxu0 %v852
      %1382 = vmatprep.subr.mxu0 %v857
      %1383 = vmatpush1.msra.mxu0 %v856
      %1384 = vmatprep.subr.mxu0 %v861
      %1385 = vmatpush1.msra.mxu0 %v860
      %1386 = vmatprep.subr.mxu0 %v865
      %1387 = vmatpush1.msra.mxu0 %v864
      %1388 = vmatprep.subr.mxu0 %v869
      %1389 = vmatpush1.msra.mxu0 %v868
      %1390 = vmatprep.subr.mxu0 %v873
      %1391 = vmatpush1.msra.mxu0 %v872
      %1392 = vmatprep.subr.mxu0 %v877
      %1393 = vmatpush1.msra.mxu0 %v876
      %1394 = vmatprep.subr.mxu0 %v881
      %1395 = vmatpush1.msra.mxu0 %v880
      %1396 = vmatprep.subr.mxu0 %v885
      %1397 = vmatpush1.msra.mxu0 %v884
      %1398 = vmatprep.subr.mxu0 %v889
      %1399 = vmatpush1.msra.mxu0 %v888
      %1400 = vmatprep.subr.mxu0 %v893
      %1401 = vmatpush1.msra.mxu0 %v892
      %1402 = vmatprep.subr.mxu0 %v897
      %1403 = vmatpush1.msra.mxu0 %v896
      %1404 = vmatprep.subr.mxu0 %v901
      %1405 = vmatpush1.msra.mxu0 %v900
      %1406 = vmatprep.subr.mxu0 %v905
      %1407 = vmatpush1.msra.mxu0 %v904
      %1408 = vmatprep.subr.mxu0 %v909
      %1409 = vmatpush1.msra.mxu0 %v908
      %1410 = vmatprep.subr.mxu0 %v913
      %1411 = vmatpush1.msra.mxu0 %v912
      %1412 = vmatprep.subr.mxu0 %v917
      %1413 = vmatpush1.msra.mxu0 %v916
      %1414 = vmatprep.subr.mxu0 %v921
      %1415 = vmatpush1.msra.mxu0 %v920
      %1416 = vmatprep.subr.mxu0 %v925
      %1417 = vmatpush1.msra.mxu0 %v924
      %1418 = vmatprep.subr.mxu0 %v929
      %1419 = vmatpush1.msra.mxu0 %v928
      %1420 = vmatprep.subr.mxu0 %v933
      %1421 = vmatpush1.msra.mxu0 %v932
      %1422 = vmatprep.subr.mxu0 %v937
      %1423 = vmatpush1.msra.mxu0 %v936
      %1424 = vmatprep.subr.mxu0 %v941
      %1425 = vmatpush1.msra.mxu0 %v940
      %1426 = vmatprep.subr.mxu0 %v945
      %1427 = vmatpush1.msra.mxu0 %v944
      %1428 = vmatprep.subr.mxu0 %v949
      %1429 = vmatpush1.msra.mxu0 %v948
      %1430 = vmatprep.subr.mxu0 %v953
      %1431 = vmatpush1.msra.mxu0 %v952
      %1432 = vmatprep.mubr.f32.mxu0 %v313
      %1433 = vmatmul.mubr.f32.gmra.mrb[0].mxu0 %v312
      %v1434 = vpop.f32.mrb[0].mxu0
      %v1435 = vadd.f32 %v1364, %v1434
      %v1436 = vpop.f32.mrb[0].mxu0
      %v1437 = vadd.f32 %v1366, %v1436
      %1438 = vdwg.mxu0
      %1439 = vmatprep.subr.mxu0 %v957
      %1440 = vmatpush1.msra.mxu0 %v956
      %1441 = vmatprep.subr.mxu0 %v961
      %1442 = vmatpush1.msra.mxu0 %v960
      %1443 = vmatprep.subr.mxu0 %v965
      %1444 = vmatpush1.msra.mxu0 %v964
      %1445 = vmatprep.subr.mxu0 %v969
      %1446 = vmatpush1.msra.mxu0 %v968
      %1447 = vmatprep.subr.mxu0 %v973
      %1448 = vmatpush1.msra.mxu0 %v972
      %1449 = vmatprep.subr.mxu0 %v977
      %1450 = vmatpush1.msra.mxu0 %v976
      %1451 = vmatprep.subr.mxu0 %v981
      %1452 = vmatpush1.msra.mxu0 %v980
      %1453 = vmatprep.subr.mxu0 %v985
      %1454 = vmatpush1.msra.mxu0 %v984
      %1455 = vmatprep.subr.mxu0 %v989
      %1456 = vmatpush1.msra.mxu0 %v988
      %1457 = vmatprep.subr.mxu0 %v993
      %1458 = vmatpush1.msra.mxu0 %v992
      %1459 = vmatprep.subr.mxu0 %v997
      %1460 = vmatpush1.msra.mxu0 %v996
      %1461 = vmatprep.subr.mxu0 %v1001
      %1462 = vmatpush1.msra.mxu0 %v1000
      %1463 = vmatprep.subr.mxu0 %v1005
      %1464 = vmatpush1.msra.mxu0 %v1004
      %1465 = vmatprep.subr.mxu0 %v1009
      %1466 = vmatpush1.msra.mxu0 %v1008
      %1467 = vmatprep.subr.mxu0 %v1013
      %1468 = vmatpush1.msra.mxu0 %v1012
      %1469 = vmatprep.subr.mxu0 %v1017
      %1470 = vmatpush1.msra.mxu0 %v1016
      %1471 = vmatprep.subr.mxu0 %v1021
      %1472 = vmatpush1.msra.mxu0 %v1020
      %1473 = vmatprep.subr.mxu0 %v1025
      %1474 = vmatpush1.msra.mxu0 %v1024
      %1475 = vmatprep.subr.mxu0 %v1029
      %1476 = vmatpush1.msra.mxu0 %v1028
      %1477 = vmatprep.subr.mxu0 %v1033
      %1478 = vmatpush1.msra.mxu0 %v1032
      %1479 = vmatprep.subr.mxu0 %v1037
      %1480 = vmatpush1.msra.mxu0 %v1036
      %1481 = vmatprep.subr.mxu0 %v1041
      %1482 = vmatpush1.msra.mxu0 %v1040
      %1483 = vmatprep.subr.mxu0 %v1045
      %1484 = vmatpush1.msra.mxu0 %v1044
      %1485 = vmatprep.subr.mxu0 %v1049
      %1486 = vmatpush1.msra.mxu0 %v1048
      %1487 = vmatprep.subr.mxu0 %v1053
      %1488 = vmatpush1.msra.mxu0 %v1052
      %1489 = vmatprep.subr.mxu0 %v1057
      %1490 = vmatpush1.msra.mxu0 %v1056
      %1491 = vmatprep.subr.mxu0 %v1061
      %1492 = vmatpush1.msra.mxu0 %v1060
      %1493 = vmatprep.subr.mxu0 %v1065
      %1494 = vmatpush1.msra.mxu0 %v1064
      %1495 = vmatprep.subr.mxu0 %v1069
      %1496 = vmatpush1.msra.mxu0 %v1068
      %1497 = vmatprep.subr.mxu0 %v1073
      %1498 = vmatpush1.msra.mxu0 %v1072
      %1499 = vmatprep.subr.mxu0 %v1077
      %1500 = vmatpush1.msra.mxu0 %v1076
      %1501 = vmatprep.subr.mxu0 %v1081
      %1502 = vmatpush1.msra.mxu0 %v1080
      %1503 = vmatprep.mubr.f32.mxu0 %v315
      %1504 = vmatmul.mubr.f32.gmra.mrb[0].mxu0 %v314
      %v1505 = vpop.f32.mrb[0].mxu0
      %v1506 = vadd.f32 %v1435, %v1505
      %v1507 = vpop.f32.mrb[0].mxu0
      %v1508 = vadd.f32 %v1437, %v1507
      %1509 = vdwg.mxu0
      %1510 = vmatprep.subr.mxu0 %v319
      %1511 = vmatpush1.msra.mxu0 %v318
      %1512 = vmatprep.subr.mxu0 %v323
      %1513 = vmatpush1.msra.mxu0 %v322
      %1514 = vmatprep.subr.mxu0 %v327
      %1515 = vmatpush1.msra.mxu0 %v326
      %1516 = vmatprep.subr.mxu0 %v331
      %1517 = vmatpush1.msra.mxu0 %v330
      %1518 = vmatprep.subr.mxu0 %v335
      %1519 = vmatpush1.msra.mxu0 %v334
      %1520 = vmatprep.subr.mxu0 %v339
      %1521 = vmatpush1.msra.mxu0 %v338
      %1522 = vmatprep.subr.mxu0 %v343
      %1523 = vmatpush1.msra.mxu0 %v342
      %1524 = vmatprep.subr.mxu0 %v347
      %1525 = vmatpush1.msra.mxu0 %v346
      %1526 = vmatprep.subr.mxu0 %v351
      %1527 = vmatpush1.msra.mxu0 %v350
      %1528 = vmatprep.subr.mxu0 %v355
      %1529 = vmatpush1.msra.mxu0 %v354
      %1530 = vmatprep.subr.mxu0 %v359
      %1531 = vmatpush1.msra.mxu0 %v358
      %1532 = vmatprep.subr.mxu0 %v363
      %1533 = vmatpush1.msra.mxu0 %v362
      %1534 = vmatprep.subr.mxu0 %v367
      %1535 = vmatpush1.msra.mxu0 %v366
      %1536 = vmatprep.subr.mxu0 %v371
      %1537 = vmatpush1.msra.mxu0 %v370
      %1538 = vmatprep.subr.mxu0 %v375
      %1539 = vmatpush1.msra.mxu0 %v374
      %1540 = vmatprep.subr.mxu0 %v379
      %1541 = vmatpush1.msra.mxu0 %v378
      %1542 = vmatprep.subr.mxu0 %v383
      %1543 = vmatpush1.msra.mxu0 %v382
      %1544 = vmatprep.subr.mxu0 %v387
      %1545 = vmatpush1.msra.mxu0 %v386
      %1546 = vmatprep.subr.mxu0 %v391
      %1547 = vmatpush1.msra.mxu0 %v390
      %1548 = vmatprep.subr.mxu0 %v395
      %1549 = vmatpush1.msra.mxu0 %v394
      %1550 = vmatprep.subr.mxu0 %v399
      %1551 = vmatpush1.msra.mxu0 %v398
      %1552 = vmatprep.subr.mxu0 %v403
      %1553 = vmatpush1.msra.mxu0 %v402
      %1554 = vmatprep.subr.mxu0 %v407
      %1555 = vmatpush1.msra.mxu0 %v406
      %1556 = vmatprep.subr.mxu0 %v411
      %1557 = vmatpush1.msra.mxu0 %v410
      %1558 = vmatprep.subr.mxu0 %v415
      %1559 = vmatpush1.msra.mxu0 %v414
      %1560 = vmatprep.subr.mxu0 %v419
      %1561 = vmatpush1.msra.mxu0 %v418
      %1562 = vmatprep.subr.mxu0 %v423
      %1563 = vmatpush1.msra.mxu0 %v422
      %1564 = vmatprep.subr.mxu0 %v427
      %1565 = vmatpush1.msra.mxu0 %v426
      %1566 = vmatprep.subr.mxu0 %v431
      %1567 = vmatpush1.msra.mxu0 %v430
      %1568 = vmatprep.subr.mxu0 %v435
      %1569 = vmatpush1.msra.mxu0 %v434
      %1570 = vmatprep.subr.mxu0 %v439
      %1571 = vmatpush1.msra.mxu0 %v438
      %1572 = vmatprep.subr.mxu0 %v443
      %1573 = vmatpush1.msra.mxu0 %v442
      %1574 = vmatprep.mubr.f32.mxu0 %v305
      %1575 = vmatmul.mubr.f32.gmra.mrb[0].mxu0 %v304
      %v1576 = vpop.f32.mrb[0].mxu0
      %v1577 = vadd.f32 0.0, %v1576
      %v1578 = vpop.f32.mrb[0].mxu0
      %v1579 = vadd.f32 0.0, %v1578
      %1580 = vdwg.mxu0
      %1581 = vmatprep.subr.mxu0 %v447
      %1582 = vmatpush1.msra.mxu0 %v446
      %1583 = vmatprep.subr.mxu0 %v451
      %1584 = vmatpush1.msra.mxu0 %v450
      %1585 = vmatprep.subr.mxu0 %v455
      %1586 = vmatpush1.msra.mxu0 %v454
      %1587 = vmatprep.subr.mxu0 %v459
      %1588 = vmatpush1.msra.mxu0 %v458
      %1589 = vmatprep.subr.mxu0 %v463
      %1590 = vmatpush1.msra.mxu0 %v462
      %1591 = vmatprep.subr.mxu0 %v467
      %1592 = vmatpush1.msra.mxu0 %v466
      %1593 = vmatprep.subr.mxu0 %v471
      %1594 = vmatpush1.msra.mxu0 %v470
      %1595 = vmatprep.subr.mxu0 %v475
      %1596 = vmatpush1.msra.mxu0 %v474
      %1597 = vmatprep.subr.mxu0 %v479
      %1598 = vmatpush1.msra.mxu0 %v478
      %1599 = vmatprep.subr.mxu0 %v483
      %1600 = vmatpush1.msra.mxu0 %v482
      %1601 = vmatprep.subr.mxu0 %v487
      %1602 = vmatpush1.msra.mxu0 %v486
      %1603 = vmatprep.subr.mxu0 %v491
      %1604 = vmatpush1.msra.mxu0 %v490
      %1605 = vmatprep.subr.mxu0 %v495
      %1606 = vmatpush1.msra.mxu0 %v494
      %1607 = vmatprep.subr.mxu0 %v499
      %1608 = vmatpush1.msra.mxu0 %v498
      %1609 = vmatprep.subr.mxu0 %v503
      %1610 = vmatpush1.msra.mxu0 %v502
      %1611 = vmatprep.subr.mxu0 %v507
      %1612 = vmatpush1.msra.mxu0 %v506
      %1613 = vmatprep.subr.mxu0 %v511
      %1614 = vmatpush1.msra.mxu0 %v510
      %1615 = vmatprep.subr.mxu0 %v515
      %1616 = vmatpush1.msra.mxu0 %v514
      %1617 = vmatprep.subr.mxu0 %v519
      %1618 = vmatpush1.msra.mxu0 %v518
      %1619 = vmatprep.subr.mxu0 %v523
      %1620 = vmatpush1.msra.mxu0 %v522
      %1621 = vmatprep.subr.mxu0 %v527
      %1622 = vmatpush1.msra.mxu0 %v526
      %1623 = vmatprep.subr.mxu0 %v531
      %1624 = vmatpush1.msra.mxu0 %v530
      %1625 = vmatprep.subr.mxu0 %v535
      %1626 = vmatpush1.msra.mxu0 %v534
      %1627 = vmatprep.subr.mxu0 %v539
      %1628 = vmatpush1.msra.mxu0 %v538
      %1629 = vmatprep.subr.mxu0 %v543
      %1630 = vmatpush1.msra.mxu0 %v542
      %1631 = vmatprep.subr.mxu0 %v547
      %1632 = vmatpush1.msra.mxu0 %v546
      %1633 = vmatprep.subr.mxu0 %v551
      %1634 = vmatpush1.msra.mxu0 %v550
      %1635 = vmatprep.subr.mxu0 %v555
      %1636 = vmatpush1.msra.mxu0 %v554
      %1637 = vmatprep.subr.mxu0 %v559
      %1638 = vmatpush1.msra.mxu0 %v558
      %1639 = vmatprep.subr.mxu0 %v563
      %1640 = vmatpush1.msra.mxu0 %v562
      %1641 = vmatprep.subr.mxu0 %v567
      %1642 = vmatpush1.msra.mxu0 %v566
      %1643 = vmatprep.subr.mxu0 %v571
      %1644 = vmatpush1.msra.mxu0 %v570
      %1645 = vmatprep.mubr.f32.mxu0 %v307
      %1646 = vmatmul.mubr.f32.gmra.mrb[0].mxu0 %v306
      %v1647 = vpop.f32.mrb[0].mxu0
      %v1648 = vadd.f32 %v1577, %v1647
      %v1649 = vpop.f32.mrb[0].mxu0
      %v1650 = vadd.f32 %v1579, %v1649
      %1651 = vdwg.mxu0
      %1652 = vmatprep.subr.mxu0 %v575
      %1653 = vmatpush1.msra.mxu0 %v574
      %1654 = vmatprep.subr.mxu0 %v579
      %1655 = vmatpush1.msra.mxu0 %v578
      %1656 = vmatprep.subr.mxu0 %v583
      %1657 = vmatpush1.msra.mxu0 %v582
      %1658 = vmatprep.subr.mxu0 %v587
      %1659 = vmatpush1.msra.mxu0 %v586
      %1660 = vmatprep.subr.mxu0 %v591
      %1661 = vmatpush1.msra.mxu0 %v590
      %1662 = vmatprep.subr.mxu0 %v595
      %1663 = vmatpush1.msra.mxu0 %v594
      %1664 = vmatprep.subr.mxu0 %v599
      %1665 = vmatpush1.msra.mxu0 %v598
      %1666 = vmatprep.subr.mxu0 %v603
      %1667 = vmatpush1.msra.mxu0 %v602
      %1668 = vmatprep.subr.mxu0 %v607
      %1669 = vmatpush1.msra.mxu0 %v606
      %1670 = vmatprep.subr.mxu0 %v611
      %1671 = vmatpush1.msra.mxu0 %v610
      %1672 = vmatprep.subr.mxu0 %v615
      %1673 = vmatpush1.msra.mxu0 %v614
      %1674 = vmatprep.subr.mxu0 %v619
      %1675 = vmatpush1.msra.mxu0 %v618
      %1676 = vmatprep.subr.mxu0 %v623
      %1677 = vmatpush1.msra.mxu0 %v622
      %1678 = vmatprep.subr.mxu0 %v627
      %1679 = vmatpush1.msra.mxu0 %v626
      %1680 = vmatprep.subr.mxu0 %v631
      %1681 = vmatpush1.msra.mxu0 %v630
      %1682 = vmatprep.subr.mxu0 %v635
      %1683 = vmatpush1.msra.mxu0 %v634
      %1684 = vmatprep.subr.mxu0 %v639
      %1685 = vmatpush1.msra.mxu0 %v638
      %1686 = vmatprep.subr.mxu0 %v643
      %1687 = vmatpush1.msra.mxu0 %v642
      %1688 = vmatprep.subr.mxu0 %v647
      %1689 = vmatpush1.msra.mxu0 %v646
      %1690 = vmatprep.subr.mxu0 %v651
      %1691 = vmatpush1.msra.mxu0 %v650
      %1692 = vmatprep.subr.mxu0 %v655
      %1693 = vmatpush1.msra.mxu0 %v654
      %1694 = vmatprep.subr.mxu0 %v659
      %1695 = vmatpush1.msra.mxu0 %v658
      %1696 = vmatprep.subr.mxu0 %v663
      %1697 = vmatpush1.msra.mxu0 %v662
      %1698 = vmatprep.subr.mxu0 %v667
      %1699 = vmatpush1.msra.mxu0 %v666
      %1700 = vmatprep.subr.mxu0 %v671
      %1701 = vmatpush1.msra.mxu0 %v670
      %1702 = vmatprep.subr.mxu0 %v675
      %1703 = vmatpush1.msra.mxu0 %v674
      %1704 = vmatprep.subr.mxu0 %v679
      %1705 = vmatpush1.msra.mxu0 %v678
      %1706 = vmatprep.subr.mxu0 %v683
      %1707 = vmatpush1.msra.mxu0 %v682
      %1708 = vmatprep.subr.mxu0 %v687
      %1709 = vmatpush1.msra.mxu0 %v686
      %1710 = vmatprep.subr.mxu0 %v691
      %1711 = vmatpush1.msra.mxu0 %v690
      %1712 = vmatprep.subr.mxu0 %v695
      %1713 = vmatpush1.msra.mxu0 %v694
      %1714 = vmatprep.subr.mxu0 %v699
      %1715 = vmatpush1.msra.mxu0 %v698
      %1716 = vmatprep.mubr.f32.mxu0 %v309
      %1717 = vmatmul.mubr.f32.gmra.mrb[0].mxu0 %v308
      %v1718 = vpop.f32.mrb[0].mxu0
      %v1719 = vadd.f32 %v1648, %v1718
      %v1720 = vpop.f32.mrb[0].mxu0
      %v1721 = vadd.f32 %v1650, %v1720
      %1722 = vdwg.mxu0
      %1723 = vmatprep.subr.mxu0 %v703
      %1724 = vmatpush1.msra.mxu0 %v702
      %1725 = vmatprep.subr.mxu0 %v707
      %1726 = vmatpush1.msra.mxu0 %v706
      %1727 = vmatprep.subr.mxu0 %v711
      %1728 = vmatpush1.msra.mxu0 %v710
      %1729 = vmatprep.subr.mxu0 %v715
      %1730 = vmatpush1.msra.mxu0 %v714
      %1731 = vmatprep.subr.mxu0 %v719
      %1732 = vmatpush1.msra.mxu0 %v718
      %1733 = vmatprep.subr.mxu0 %v723
      %1734 = vmatpush1.msra.mxu0 %v722
      %1735 = vmatprep.subr.mxu0 %v727
      %1736 = vmatpush1.msra.mxu0 %v726
      %1737 = vmatprep.subr.mxu0 %v731
      %1738 = vmatpush1.msra.mxu0 %v730
      %1739 = vmatprep.subr.mxu0 %v735
      %1740 = vmatpush1.msra.mxu0 %v734
      %1741 = vmatprep.subr.mxu0 %v739
      %1742 = vmatpush1.msra.mxu0 %v738
      %1743 = vmatprep.subr.mxu0 %v743
      %1744 = vmatpush1.msra.mxu0 %v742
      %1745 = vmatprep.subr.mxu0 %v747
      %1746 = vmatpush1.msra.mxu0 %v746
      %1747 = vmatprep.subr.mxu0 %v751
      %1748 = vmatpush1.msra.mxu0 %v750
      %1749 = vmatprep.subr.mxu0 %v755
      %1750 = vmatpush1.msra.mxu0 %v754
      %1751 = vmatprep.subr.mxu0 %v759
      %1752 = vmatpush1.msra.mxu0 %v758
      %1753 = vmatprep.subr.mxu0 %v763
      %1754 = vmatpush1.msra.mxu0 %v762
      %1755 = vmatprep.subr.mxu0 %v767
      %1756 = vmatpush1.msra.mxu0 %v766
      %1757 = vmatprep.subr.mxu0 %v771
      %1758 = vmatpush1.msra.mxu0 %v770
      %1759 = vmatprep.subr.mxu0 %v775
      %1760 = vmatpush1.msra.mxu0 %v774
      %1761 = vmatprep.subr.mxu0 %v779
      %1762 = vmatpush1.msra.mxu0 %v778
      %1763 = vmatprep.subr.mxu0 %v783
      %1764 = vmatpush1.msra.mxu0 %v782
      %1765 = vmatprep.subr.mxu0 %v787
      %1766 = vmatpush1.msra.mxu0 %v786
      %1767 = vmatprep.subr.mxu0 %v791
      %1768 = vmatpush1.msra.mxu0 %v790
      %1769 = vmatprep.subr.mxu0 %v795
      %1770 = vmatpush1.msra.mxu0 %v794
      %1771 = vmatprep.subr.mxu0 %v799
      %1772 = vmatpush1.msra.mxu0 %v798
      %1773 = vmatprep.subr.mxu0 %v803
      %1774 = vmatpush1.msra.mxu0 %v802
      %1775 = vmatprep.subr.mxu0 %v807
      %1776 = vmatpush1.msra.mxu0 %v806
      %1777 = vmatprep.subr.mxu0 %v811
      %1778 = vmatpush1.msra.mxu0 %v810
      %1779 = vmatprep.subr.mxu0 %v815
      %1780 = vmatpush1.msra.mxu0 %v814
      %1781 = vmatprep.subr.mxu0 %v819
      %1782 = vmatpush1.msra.mxu0 %v818
      %1783 = vmatprep.subr.mxu0 %v823
      %1784 = vmatpush1.msra.mxu0 %v822
      %1785 = vmatprep.subr.mxu0 %v827
      %1786 = vmatpush1.msra.mxu0 %v826
      %1787 = vmatprep.mubr.f32.mxu0 %v311
      %1788 = vmatmul.mubr.f32.gmra.mrb[0].mxu0 %v310
      %v1789 = vpop.f32.mrb[0].mxu0
      %v1790 = vadd.f32 %v1719, %v1789
      %v1791 = vpop.f32.mrb[0].mxu0
      %v1792 = vadd.f32 %v1721, %v1791
      %1793 = vdwg.mxu0
      %1794 = vmatprep.subr.mxu0 %v831
      %1795 = vmatpush1.msra.mxu0 %v830
      %1796 = vmatprep.subr.mxu0 %v835
      %1797 = vmatpush1.msra.mxu0 %v834
      %1798 = vmatprep.subr.mxu0 %v839
      %1799 = vmatpush1.msra.mxu0 %v838
      %1800 = vmatprep.subr.mxu0 %v843
      %1801 = vmatpush1.msra.mxu0 %v842
      %1802 = vmatprep.subr.mxu0 %v847
      %1803 = vmatpush1.msra.mxu0 %v846
      %1804 = vmatprep.subr.mxu0 %v851
      %1805 = vmatpush1.msra.mxu0 %v850
      %1806 = vmatprep.subr.mxu0 %v855
      %1807 = vmatpush1.msra.mxu0 %v854
      %1808 = vmatprep.subr.mxu0 %v859
      %1809 = vmatpush1.msra.mxu0 %v858
      %1810 = vmatprep.subr.mxu0 %v863
      %1811 = vmatpush1.msra.mxu0 %v862
      %1812 = vmatprep.subr.mxu0 %v867
      %1813 = vmatpush1.msra.mxu0 %v866
      %1814 = vmatprep.subr.mxu0 %v871
      %1815 = vmatpush1.msra.mxu0 %v870
      %1816 = vmatprep.subr.mxu0 %v875
      %1817 = vmatpush1.msra.mxu0 %v874
      %1818 = vmatprep.subr.mxu0 %v879
      %1819 = vmatpush1.msra.mxu0 %v878
      %1820 = vmatprep.subr.mxu0 %v883
      %1821 = vmatpush1.msra.mxu0 %v882
      %1822 = vmatprep.subr.mxu0 %v887
      %1823 = vmatpush1.msra.mxu0 %v886
      %1824 = vmatprep.subr.mxu0 %v891
      %1825 = vmatpush1.msra.mxu0 %v890
      %1826 = vmatprep.subr.mxu0 %v895
      %1827 = vmatpush1.msra.mxu0 %v894
      %1828 = vmatprep.subr.mxu0 %v899
      %1829 = vmatpush1.msra.mxu0 %v898
      %1830 = vmatprep.subr.mxu0 %v903
      %1831 = vmatpush1.msra.mxu0 %v902
      %1832 = vmatprep.subr.mxu0 %v907
      %1833 = vmatpush1.msra.mxu0 %v906
      %1834 = vmatprep.subr.mxu0 %v911
      %1835 = vmatpush1.msra.mxu0 %v910
      %1836 = vmatprep.subr.mxu0 %v915
      %1837 = vmatpush1.msra.mxu0 %v914
      %1838 = vmatprep.subr.mxu0 %v919
      %1839 = vmatpush1.msra.mxu0 %v918
      %1840 = vmatprep.subr.mxu0 %v923
      %1841 = vmatpush1.msra.mxu0 %v922
      %1842 = vmatprep.subr.mxu0 %v927
      %1843 = vmatpush1.msra.mxu0 %v926
      %1844 = vmatprep.subr.mxu0 %v931
      %1845 = vmatpush1.msra.mxu0 %v930
      %1846 = vmatprep.subr.mxu0 %v935
      %1847 = vmatpush1.msra.mxu0 %v934
      %1848 = vmatprep.subr.mxu0 %v939
      %1849 = vmatpush1.msra.mxu0 %v938
      %1850 = vmatprep.subr.mxu0 %v943
      %1851 = vmatpush1.msra.mxu0 %v942
      %1852 = vmatprep.subr.mxu0 %v947
      %1853 = vmatpush1.msra.mxu0 %v946
      %1854 = vmatprep.subr.mxu0 %v951
      %1855 = vmatpush1.msra.mxu0 %v950
      %1856 = vmatprep.subr.mxu0 %v955
      %1857 = vmatpush1.msra.mxu0 %v954
      %1858 = vmatprep.mubr.f32.mxu0 %v313
      %1859 = vmatmul.mubr.f32.gmra.mrb[0].mxu0 %v312
      %v1860 = vpop.f32.mrb[0].mxu0
      %v1861 = vadd.f32 %v1790, %v1860
      %v1862 = vpop.f32.mrb[0].mxu0
      %v1863 = vadd.f32 %v1792, %v1862
      %1864 = vdwg.mxu0
      %1865 = vmatprep.subr.mxu0 %v959
      %1866 = vmatpush1.msra.mxu0 %v958
      %1867 = vmatprep.subr.mxu0 %v963
      %1868 = vmatpush1.msra.mxu0 %v962
      %1869 = vmatprep.subr.mxu0 %v967
      %1870 = vmatpush1.msra.mxu0 %v966
      %1871 = vmatprep.subr.mxu0 %v971
      %1872 = vmatpush1.msra.mxu0 %v970
      %1873 = vmatprep.subr.mxu0 %v975
      %1874 = vmatpush1.msra.mxu0 %v974
      %1875 = vmatprep.subr.mxu0 %v979
      %1876 = vmatpush1.msra.mxu0 %v978
      %1877 = vmatprep.subr.mxu0 %v983
      %1878 = vmatpush1.msra.mxu0 %v982
      %1879 = vmatprep.subr.mxu0 %v987
      %1880 = vmatpush1.msra.mxu0 %v986
      %1881 = vmatprep.subr.mxu0 %v991
      %1882 = vmatpush1.msra.mxu0 %v990
      %1883 = vmatprep.subr.mxu0 %v995
      %1884 = vmatpush1.msra.mxu0 %v994
      %1885 = vmatprep.subr.mxu0 %v999
      %1886 = vmatpush1.msra.mxu0 %v998
      %1887 = vmatprep.subr.mxu0 %v1003
      %1888 = vmatpush1.msra.mxu0 %v1002
      %1889 = vmatprep.subr.mxu0 %v1007
      %1890 = vmatpush1.msra.mxu0 %v1006
      %1891 = vmatprep.subr.mxu0 %v1011
      %1892 = vmatpush1.msra.mxu0 %v1010
      %1893 = vmatprep.subr.mxu0 %v1015
      %1894 = vmatpush1.msra.mxu0 %v1014
      %1895 = vmatprep.subr.mxu0 %v1019
      %1896 = vmatpush1.msra.mxu0 %v1018
      %1897 = vmatprep.subr.mxu0 %v1023
      %1898 = vmatpush1.msra.mxu0 %v1022
      %1899 = vmatprep.subr.mxu0 %v1027
      %1900 = vmatpush1.msra.mxu0 %v1026
      %1901 = vmatprep.subr.mxu0 %v1031
      %1902 = vmatpush1.msra.mxu0 %v1030
      %1903 = vmatprep.subr.mxu0 %v1035
      %1904 = vmatpush1.msra.mxu0 %v1034
      %1905 = vmatprep.subr.mxu0 %v1039
      %1906 = vmatpush1.msra.mxu0 %v1038
      %1907 = vmatprep.subr.mxu0 %v1043
      %1908 = vmatpush1.msra.mxu0 %v1042
      %1909 = vmatprep.subr.mxu0 %v1047
      %1910 = vmatpush1.msra.mxu0 %v1046
      %1911 = vmatprep.subr.mxu0 %v1051
      %1912 = vmatpush1.msra.mxu0 %v1050
      %1913 = vmatprep.subr.mxu0 %v1055
      %1914 = vmatpush1.msra.mxu0 %v1054
      %1915 = vmatprep.subr.mxu0 %v1059
      %1916 = vmatpush1.msra.mxu0 %v1058
      %1917 = vmatprep.subr.mxu0 %v1063
      %1918 = vmatpush1.msra.mxu0 %v1062
      %1919 = vmatprep.subr.mxu0 %v1067
      %1920 = vmatpush1.msra.mxu0 %v1066
      %1921 = vmatprep.subr.mxu0 %v1071
      %1922 = vmatpush1.msra.mxu0 %v1070
      %1923 = vmatprep.subr.mxu0 %v1075
      %1924 = vmatpush1.msra.mxu0 %v1074
      %1925 = vmatprep.subr.mxu0 %v1079
      %1926 = vmatpush1.msra.mxu0 %v1078
      %1927 = vmatprep.subr.mxu0 %v1083
      %1928 = vmatpush1.msra.mxu0 %v1082
      %1929 = vmatprep.mubr.f32.mxu0 %v315
      %1930 = vmatmul.mubr.f32.gmra.mrb[0].mxu0 %v314
      %v1931 = vpop.f32.mrb[0].mxu0
      %v1932 = vadd.f32 %v1861, %v1931
      %v1933 = vpop.f32.mrb[0].mxu0
      %v1934 = vadd.f32 %v1863, %v1933
      %1935 = vdwg.mxu0
      %v1936 = vadd.f32 %v300, %v1506
      %v1937 = vadd.f32 %v301, %v1508
      %v1938 = vadd.f32 %v302, %v1932
      %v1939 = vadd.f32 %v303, %v1934
      %1940 = vst [vmem:[#allocation2] sm:$0xff] %v1936
      %1941 = vst [vmem:[#allocation2 + $0x8] sm:$0xff] %v1937
      %1942 = vst [vmem:[#allocation2 + $0x10] sm:$0xff] %v1938
      %vm1943 = vcmask 130048
      %1944 = vst.msk [vmem:[#allocation2 + $0x18] sm:$0xff] %vm1943, %v1939
      %p1945 = scmp.eq.s32.totalorder %s18, 6
      // Predicated region
      $region53: #{critic_forward.5} parent=47 // pred_check
        %p1946 = pneg %p1945
      $region54: #{critic_forward.5} parent=47 // pred_check_branch
        %1948 = sbr.rel (%p1946) target = $region56
      $region55: #{critic_forward.5} parent=47 // pred_region
        %v1949 = vld [vmem:[#allocation2] sm:$0xff]
        %v1950 = vld [vmem:[#allocation2 + $0x8] sm:$0xff]
        %v1951 = vld [vmem:[#allocation2 + $0x10] sm:$0xff]
        %v1952 = vld [vmem:[#allocation2 + $0x18] sm:$0xff]
        %v1953 = vld [vmem:[%s2] sm:$0xf]
        %v1955 = vlaneseq
        %v1956 = vshrl.u32 %v1955, 7
        %v1957 = vsub.s32 0, %v1956
        %v1958 = vrot.slane %v1953, %v1957
        %v1959 = vlaneseq
        %v1960 = vshrl.u32 %v1959, 7
        %v1961 = vsub.s32 1, %v1960
        %v1962 = vrot.slane %v1953, %v1961
        %v1963 = vlaneseq
        %v1964 = vshrl.u32 %v1963, 7
        %v1965 = vsub.s32 2, %v1964
        %v1966 = vrot.slane %v1953, %v1965
        %v1967 = vlaneseq
        %v1968 = vshrl.u32 %v1967, 7
        %v1969 = vsub.s32 3, %v1968
        %v1970 = vrot.slane %v1953, %v1969
        %v1975 = vadd.f32 %v1949, %v1958
        %v1976 = vadd.f32 %v1950, %v1962
        %v1977 = vadd.f32 %v1951, %v1966
        %v1978 = vadd.f32 %v1952, %v1970
        %v1979 = vmax.f32 %v1975, 0.0
        %v1980 = vmax.f32 %v1976, 0.0
        %v1981 = vmax.f32 %v1977, 0.0
        %v1982 = vmax.f32 %v1978, 0.0
        %v1983 = vld [vmem:[%s3] sm:$0xff]
        %v1984 = vld [vmem:[%s3 + $0x8] sm:$0xff]
        %v1985 = vld [vmem:[%s3 + $0x10] sm:$0xff]
        %v1986 = vld [vmem:[%s3 + $0x18] sm:$0xff]
        %v1987 = vld [vmem:[%s3 + $0x20] sm:$0xff]
        %v1988 = vld [vmem:[%s3 + $0x28] sm:$0xff]
        %v1989 = vld [vmem:[%s3 + $0x30] sm:$0xff]
        %v1990 = vld [vmem:[%s3 + $0x38] sm:$0xff]
        %v1991 = vld [vmem:[%s3 + $0x40] sm:$0xff]
        %v1992 = vld [vmem:[%s3 + $0x48] sm:$0xff]
        %v1993 = vld [vmem:[%s3 + $0x50] sm:$0xff]
        %v1994 = vld [vmem:[%s3 + $0x58] sm:$0xff]
        %v1995 = vld [vmem:[%s3 + $0x60] sm:$0xff]
        %v1996 = vld [vmem:[%s3 + $0x68] sm:$0xff]
        %v1997 = vld [vmem:[%s3 + $0x70] sm:$0xff]
        %v1998 = vld [vmem:[%s3 + $0x78] sm:$0xff]
        %v1999 = vld [vmem:[%s3 + $0x80] sm:$0xff]
        %v2000 = vld [vmem:[%s3 + $0x88] sm:$0xff]
        %v2001 = vld [vmem:[%s3 + $0x90] sm:$0xff]
        %v2002 = vld [vmem:[%s3 + $0x98] sm:$0xff]
        %v2003 = vld [vmem:[%s3 + $0xa0] sm:$0xff]
        %v2004 = vld [vmem:[%s3 + $0xa8] sm:$0xff]
        %v2005 = vld [vmem:[%s3 + $0xb0] sm:$0xff]
        %v2006 = vld [vmem:[%s3 + $0xb8] sm:$0xff]
        %v2007 = vld [vmem:[%s3 + $0xc0] sm:$0xff]
        %v2008 = vld [vmem:[%s3 + $0xc8] sm:$0xff]
        %v2009 = vld [vmem:[%s3 + $0xd0] sm:$0xff]
        %v2010 = vld [vmem:[%s3 + $0xd8] sm:$0xff]
        %v2011 = vld [vmem:[%s3 + $0xe0] sm:$0xff]
        %v2012 = vld [vmem:[%s3 + $0xe8] sm:$0xff]
        %v2013 = vld [vmem:[%s3 + $0xf0] sm:$0xff]
        %v2014 = vld [vmem:[%s3 + $0xf8] sm:$0xff]
        %v2015 = vld [vmem:[%s3 + $0x100] sm:$0xff]
        %v2016 = vld [vmem:[%s3 + $0x108] sm:$0xff]
        %v2017 = vld [vmem:[%s3 + $0x110] sm:$0xff]
        %v2018 = vld [vmem:[%s3 + $0x118] sm:$0xff]
        %v2019 = vld [vmem:[%s3 + $0x120] sm:$0xff]
        %v2020 = vld [vmem:[%s3 + $0x128] sm:$0xff]
        %v2021 = vld [vmem:[%s3 + $0x130] sm:$0xff]
        %v2022 = vld [vmem:[%s3 + $0x138] sm:$0xff]
        %v2023 = vld [vmem:[%s3 + $0x140] sm:$0xff]
        %v2024 = vld [vmem:[%s3 + $0x148] sm:$0xff]
        %v2025 = vld [vmem:[%s3 + $0x150] sm:$0xff]
        %v2026 = vld [vmem:[%s3 + $0x158] sm:$0xff]
        %v2027 = vld [vmem:[%s3 + $0x160] sm:$0xff]
        %v2028 = vld [vmem:[%s3 + $0x168] sm:$0xff]
        %v2029 = vld [vmem:[%s3 + $0x170] sm:$0xff]
        %v2030 = vld [vmem:[%s3 + $0x178] sm:$0xff]
        %v2031 = vld [vmem:[%s3 + $0x180] sm:$0xff]
        %v2032 = vld [vmem:[%s3 + $0x188] sm:$0xff]
        %v2033 = vld [vmem:[%s3 + $0x190] sm:$0xff]
        %v2034 = vld [vmem:[%s3 + $0x198] sm:$0xff]
        %v2035 = vld [vmem:[%s3 + $0x1a0] sm:$0xff]
        %v2036 = vld [vmem:[%s3 + $0x1a8] sm:$0xff]
        %v2037 = vld [vmem:[%s3 + $0x1b0] sm:$0xff]
        %v2038 = vld [vmem:[%s3 + $0x1b8] sm:$0xff]
        %v2039 = vld [vmem:[%s3 + $0x1c0] sm:$0xff]
        %v2040 = vld [vmem:[%s3 + $0x1c8] sm:$0xff]
        %v2041 = vld [vmem:[%s3 + $0x1d0] sm:$0xff]
        %v2042 = vld [vmem:[%s3 + $0x1d8] sm:$0xff]
        %v2043 = vld [vmem:[%s3 + $0x1e0] sm:$0xff]
        %v2044 = vld [vmem:[%s3 + $0x1e8] sm:$0xff]
        %v2045 = vld [vmem:[%s3 + $0x1f0] sm:$0xff]
        %v2046 = vld [vmem:[%s3 + $0x1f8] sm:$0xff]
        %v2047 = vld [vmem:[%s3 + $0x200] sm:$0xff]
        %v2048 = vld [vmem:[%s3 + $0x208] sm:$0xff]
        %v2049 = vld [vmem:[%s3 + $0x210] sm:$0xff]
        %v2050 = vld [vmem:[%s3 + $0x218] sm:$0xff]
        %v2051 = vld [vmem:[%s3 + $0x220] sm:$0xff]
        %v2052 = vld [vmem:[%s3 + $0x228] sm:$0xff]
        %v2053 = vld [vmem:[%s3 + $0x230] sm:$0xff]
        %v2054 = vld [vmem:[%s3 + $0x238] sm:$0xff]
        %v2055 = vld [vmem:[%s3 + $0x240] sm:$0xff]
        %v2056 = vld [vmem:[%s3 + $0x248] sm:$0xff]
        %v2057 = vld [vmem:[%s3 + $0x250] sm:$0xff]
        %v2058 = vld [vmem:[%s3 + $0x258] sm:$0xff]
        %v2059 = vld [vmem:[%s3 + $0x260] sm:$0xff]
        %v2060 = vld [vmem:[%s3 + $0x268] sm:$0xff]
        %v2061 = vld [vmem:[%s3 + $0x270] sm:$0xff]
        %v2062 = vld [vmem:[%s3 + $0x278] sm:$0xff]
        %v2063 = vld [vmem:[%s3 + $0x280] sm:$0xff]
        %v2064 = vld [vmem:[%s3 + $0x288] sm:$0xff]
        %v2065 = vld [vmem:[%s3 + $0x290] sm:$0xff]
        %v2066 = vld [vmem:[%s3 + $0x298] sm:$0xff]
        %v2067 = vld [vmem:[%s3 + $0x2a0] sm:$0xff]
        %v2068 = vld [vmem:[%s3 + $0x2a8] sm:$0xff]
        %v2069 = vld [vmem:[%s3 + $0x2b0] sm:$0xff]
        %v2070 = vld [vmem:[%s3 + $0x2b8] sm:$0xff]
        %v2071 = vld [vmem:[%s3 + $0x2c0] sm:$0xff]
        %v2072 = vld [vmem:[%s3 + $0x2c8] sm:$0xff]
        %v2073 = vld [vmem:[%s3 + $0x2d0] sm:$0xff]
        %v2074 = vld [vmem:[%s3 + $0x2d8] sm:$0xff]
        %v2075 = vld [vmem:[%s3 + $0x2e0] sm:$0xff]
        %v2076 = vld [vmem:[%s3 + $0x2e8] sm:$0xff]
        %v2077 = vld [vmem:[%s3 + $0x2f0] sm:$0xff]
        %v2078 = vld [vmem:[%s3 + $0x2f8] sm:$0xff]
        %v2079 = vld [vmem:[%s3 + $0x300] sm:$0xff]
        %v2080 = vld [vmem:[%s3 + $0x308] sm:$0xff]
        %v2081 = vld [vmem:[%s3 + $0x310] sm:$0xff]
        %v2082 = vld [vmem:[%s3 + $0x318] sm:$0xff]
        %v2083 = vld [vmem:[%s3 + $0x320] sm:$0xff]
        %v2084 = vld [vmem:[%s3 + $0x328] sm:$0xff]
        %v2085 = vld [vmem:[%s3 + $0x330] sm:$0xff]
        %v2086 = vld [vmem:[%s3 + $0x338] sm:$0xff]
        %v2087 = vld [vmem:[%s3 + $0x340] sm:$0xff]
        %v2088 = vld [vmem:[%s3 + $0x348] sm:$0xff]
        %v2089 = vld [vmem:[%s3 + $0x350] sm:$0xff]
        %v2090 = vld [vmem:[%s3 + $0x358] sm:$0xff]
        %v2091 = vld [vmem:[%s3 + $0x360] sm:$0xff]
        %v2092 = vld [vmem:[%s3 + $0x368] sm:$0xff]
        %v2093 = vld [vmem:[%s3 + $0x370] sm:$0xff]
        %v2094 = vld [vmem:[%s3 + $0x378] sm:$0xff]
        %v2095 = vld [vmem:[%s3 + $0x380] sm:$0xff]
        %v2096 = vld [vmem:[%s3 + $0x388] sm:$0xff]
        %v2097 = vld [vmem:[%s3 + $0x390] sm:$0xff]
        %v2098 = vld [vmem:[%s3 + $0x398] sm:$0xff]
        %v2099 = vld [vmem:[%s3 + $0x3a0] sm:$0xff]
        %v2100 = vld [vmem:[%s3 + $0x3a8] sm:$0xff]
        %v2101 = vld [vmem:[%s3 + $0x3b0] sm:$0xff]
        %v2102 = vld [vmem:[%s3 + $0x3b8] sm:$0xff]
        %v2103 = vld [vmem:[%s3 + $0x3c0] sm:$0xff]
        %v2104 = vld [vmem:[%s3 + $0x3c8] sm:$0xff]
        %v2105 = vld [vmem:[%s3 + $0x3d0] sm:$0xff]
        %v2106 = vld [vmem:[%s3 + $0x3d8] sm:$0xff]
        %v2107 = vld [vmem:[%s3 + $0x3e0] sm:$0xff]
        %v2108 = vld [vmem:[%s3 + $0x3e8] sm:$0xff]
        %v2109 = vld [vmem:[%s3 + $0x3f0] sm:$0xff]
        %v2110 = vld [vmem:[%s3 + $0x3f8] sm:$0xff]
        %v2111 = vld [vmem:[%s3 + $0x400] sm:$0xff]
        %v2112 = vld [vmem:[%s3 + $0x408] sm:$0xff]
        %v2113 = vld [vmem:[%s3 + $0x410] sm:$0xff]
        %v2114 = vld [vmem:[%s3 + $0x418] sm:$0xff]
        %v2115 = vld [vmem:[%s3 + $0x420] sm:$0xff]
        %v2116 = vld [vmem:[%s3 + $0x428] sm:$0xff]
        %v2117 = vld [vmem:[%s3 + $0x430] sm:$0xff]
        %v2118 = vld [vmem:[%s3 + $0x438] sm:$0xff]
        %v2119 = vld [vmem:[%s3 + $0x440] sm:$0xff]
        %v2120 = vld [vmem:[%s3 + $0x448] sm:$0xff]
        %v2121 = vld [vmem:[%s3 + $0x450] sm:$0xff]
        %v2122 = vld [vmem:[%s3 + $0x458] sm:$0xff]
        %v2123 = vld [vmem:[%s3 + $0x460] sm:$0xff]
        %v2124 = vld [vmem:[%s3 + $0x468] sm:$0xff]
        %v2125 = vld [vmem:[%s3 + $0x470] sm:$0xff]
        %v2126 = vld [vmem:[%s3 + $0x478] sm:$0xff]
        %v2127 = vld [vmem:[%s3 + $0x480] sm:$0xff]
        %v2128 = vld [vmem:[%s3 + $0x488] sm:$0xff]
        %v2129 = vld [vmem:[%s3 + $0x490] sm:$0xff]
        %v2130 = vld [vmem:[%s3 + $0x498] sm:$0xff]
        %v2131 = vld [vmem:[%s3 + $0x4a0] sm:$0xff]
        %v2132 = vld [vmem:[%s3 + $0x4a8] sm:$0xff]
        %v2133 = vld [vmem:[%s4] sm:$0x7]
        %v2135 = vlaneseq
        %v2136 = vshrl.u32 %v2135, 7
        %v2137 = vsub.s32 0, %v2136
        %v2138 = vrot.slane %v2133, %v2137
        %v2139 = vlaneseq
        %v2140 = vshrl.u32 %v2139, 7
        %v2141 = vsub.s32 1, %v2140
        %v2142 = vrot.slane %v2133, %v2141
        %v2143 = vlaneseq
        %v2144 = vshrl.u32 %v2143, 7
        %v2145 = vsub.s32 2, %v2144
        %v2146 = vrot.slane %v2133, %v2145
        %v2151 = vsel %vm1943, %v1982, 0
        %2153 = vmatprep.subr.mxu0 %v1984
        %2154 = vmatpush1.msra.mxu0 %v1983
        %2155 = vmatprep.subr.mxu0 %v1987
        %2156 = vmatpush1.msra.mxu0 %v1986
        %2157 = vmatprep.subr.mxu0 %v1990
        %2158 = vmatpush1.msra.mxu0 %v1989
        %2159 = vmatprep.subr.mxu0 %v1993
        %2160 = vmatpush1.msra.mxu0 %v1992
        %2161 = vmatprep.subr.mxu0 %v1996
        %2162 = vmatpush1.msra.mxu0 %v1995
        %2163 = vmatprep.subr.mxu0 %v1999
        %2164 = vmatpush1.msra.mxu0 %v1998
        %2165 = vmatprep.subr.mxu0 %v2002
        %2166 = vmatpush1.msra.mxu0 %v2001
        %2167 = vmatprep.subr.mxu0 %v2005
        %2168 = vmatpush1.msra.mxu0 %v2004
        %2169 = vmatprep.subr.mxu0 %v2008
        %2170 = vmatpush1.msra.mxu0 %v2007
        %2171 = vmatprep.subr.mxu0 %v2011
        %2172 = vmatpush1.msra.mxu0 %v2010
        %2173 = vmatprep.subr.mxu0 %v2014
        %2174 = vmatpush1.msra.mxu0 %v2013
        %2175 = vmatprep.subr.mxu0 %v2017
        %2176 = vmatpush1.msra.mxu0 %v2016
        %2177 = vmatprep.subr.mxu0 %v2020
        %2178 = vmatpush1.msra.mxu0 %v2019
        %2179 = vmatprep.subr.mxu0 %v2023
        %2180 = vmatpush1.msra.mxu0 %v2022
        %2181 = vmatprep.subr.mxu0 %v2026
        %2182 = vmatpush1.msra.mxu0 %v2025
        %2183 = vmatprep.subr.mxu0 %v2029
        %2184 = vmatpush1.msra.mxu0 %v2028
        %2185 = vmatprep.subr.mxu0 %v2032
        %2186 = vmatpush1.msra.mxu0 %v2031
        %2187 = vmatprep.subr.mxu0 %v2035
        %2188 = vmatpush1.msra.mxu0 %v2034
        %2189 = vmatprep.subr.mxu0 %v2038
        %2190 = vmatpush1.msra.mxu0 %v2037
        %2191 = vmatprep.subr.mxu0 %v2041
        %2192 = vmatpush1.msra.mxu0 %v2040
        %2193 = vmatprep.subr.mxu0 %v2044
        %2194 = vmatpush1.msra.mxu0 %v2043
        %2195 = vmatprep.subr.mxu0 %v2047
        %2196 = vmatpush1.msra.mxu0 %v2046
        %2197 = vmatprep.subr.mxu0 %v2050
        %2198 = vmatpush1.msra.mxu0 %v2049
        %2199 = vmatprep.subr.mxu0 %v2053
        %2200 = vmatpush1.msra.mxu0 %v2052
        %2201 = vmatprep.subr.mxu0 %v2056
        %2202 = vmatpush1.msra.mxu0 %v2055
        %2203 = vmatprep.subr.mxu0 %v2059
        %2204 = vmatpush1.msra.mxu0 %v2058
        %2205 = vmatprep.subr.mxu0 %v2062
        %2206 = vmatpush1.msra.mxu0 %v2061
        %2207 = vmatprep.subr.mxu0 %v2065
        %2208 = vmatpush1.msra.mxu0 %v2064
        %2209 = vmatprep.subr.mxu0 %v2068
        %2210 = vmatpush1.msra.mxu0 %v2067
        %2211 = vmatprep.subr.mxu0 %v2071
        %2212 = vmatpush1.msra.mxu0 %v2070
        %2213 = vmatprep.subr.mxu0 %v2074
        %2214 = vmatpush1.msra.mxu0 %v2073
        %2215 = vmatprep.subr.mxu0 %v2077
        %2216 = vmatpush1.msra.mxu0 %v2076
        %2217 = vmatprep.mubr.f32.mxu0 %v1980
        %2218 = vmatmul.mubr.f32.gmra.mrb[0].mxu0 %v1979
        %v2219 = vpop.f32.mrb[0].mxu0
        %v2220 = vadd.f32 %v2138, %v2219
        %v2221 = vpop.f32.mrb[0].mxu0
        %v2222 = vadd.f32 %v2142, %v2221
        %2223 = vdwg.mxu0
        %2224 = vmatprep.subr.mxu0 %v2080
        %2225 = vmatpush1.msra.mxu0 %v2079
        %2226 = vmatprep.subr.mxu0 %v2083
        %2227 = vmatpush1.msra.mxu0 %v2082
        %2228 = vmatprep.subr.mxu0 %v2086
        %2229 = vmatpush1.msra.mxu0 %v2085
        %2230 = vmatprep.subr.mxu0 %v2089
        %2231 = vmatpush1.msra.mxu0 %v2088
        %2232 = vmatprep.subr.mxu0 %v2092
        %2233 = vmatpush1.msra.mxu0 %v2091
        %2234 = vmatprep.subr.mxu0 %v2095
        %2235 = vmatpush1.msra.mxu0 %v2094
        %2236 = vmatprep.subr.mxu0 %v2098
        %2237 = vmatpush1.msra.mxu0 %v2097
        %2238 = vmatprep.subr.mxu0 %v2101
        %2239 = vmatpush1.msra.mxu0 %v2100
        %2240 = vmatprep.subr.mxu0 %v2104
        %2241 = vmatpush1.msra.mxu0 %v2103
        %2242 = vmatprep.subr.mxu0 %v2107
        %2243 = vmatpush1.msra.mxu0 %v2106
        %2244 = vmatprep.subr.mxu0 %v2110
        %2245 = vmatpush1.msra.mxu0 %v2109
        %2246 = vmatprep.subr.mxu0 %v2113
        %2247 = vmatpush1.msra.mxu0 %v2112
        %2248 = vmatprep.subr.mxu0 %v2116
        %2249 = vmatpush1.msra.mxu0 %v2115
        %2250 = vmatprep.subr.mxu0 %v2119
        %2251 = vmatpush1.msra.mxu0 %v2118
        %2252 = vmatprep.subr.mxu0 %v2122
        %2253 = vmatpush1.msra.mxu0 %v2121
        %2254 = vmatprep.subr.mxu0 %v2125
        %2255 = vmatpush1.msra.mxu0 %v2124
        %2256 = vmatprep.subr.mxu0 %v2128
        %2257 = vmatpush1.msra.mxu0 %v2127
        %2258 = vmatprep.subr.mxu0 %v2131
        %2259 = vmatpush1.msra.mxu0 %v2130
        %2260 = vmatprep.subr.mxu0 0.0
        %2261 = vmatpush1.msra.mxu0 0.0
        %2262 = vmatprep.subr.mxu0 0.0
        %2263 = vmatpush1.msra.mxu0 0.0
        %2264 = vmatprep.subr.mxu0 0.0
        %2265 = vmatpush1.msra.mxu0 0.0
        %2266 = vmatprep.subr.mxu0 0.0
        %2267 = vmatpush1.msra.mxu0 0.0
        %2268 = vmatprep.subr.mxu0 0.0
        %2269 = vmatpush1.msra.mxu0 0.0
        %2270 = vmatprep.subr.mxu0 0.0
        %2271 = vmatpush1.msra.mxu0 0.0
        %2272 = vmatprep.subr.mxu0 0.0
        %2273 = vmatpush1.msra.mxu0 0.0
        %2274 = vmatprep.subr.mxu0 0.0
        %2275 = vmatpush1.msra.mxu0 0.0
        %2276 = vmatprep.subr.mxu0 0.0
        %2277 = vmatpush1.msra.mxu0 0.0
        %2278 = vmatprep.subr.mxu0 0.0
        %2279 = vmatpush1.msra.mxu0 0.0
        %2280 = vmatprep.subr.mxu0 0.0
        %2281 = vmatpush1.msra.mxu0 0.0
        %2282 = vmatprep.subr.mxu0 0.0
        %2283 = vmatpush1.msra.mxu0 0.0
        %2284 = vmatprep.subr.mxu0 0.0
        %2285 = vmatpush1.msra.mxu0 0.0
        %2286 = vmatprep.subr.mxu0 0.0
        %2287 = vmatpush1.msra.mxu0 0.0
        %2288 = vmatprep.mubr.f32.mxu0 %v2151
        %2289 = vmatmul.mubr.f32.gmra.mrb[0].mxu0 %v1981
        %v2290 = vpop.f32.mrb[0].mxu0
        %v2291 = vadd.f32 %v2220, %v2290
        %v2292 = vpop.f32.mrb[0].mxu0
        %v2293 = vadd.f32 %v2222, %v2292
        %2294 = vdwg.mxu0
        %2295 = vmatprep.subr.mxu0 0.0
        %2296 = vmatpush1.msra.mxu0 %v1985
        %2297 = vmatprep.subr.mxu0 0.0
        %2298 = vmatpush1.msra.mxu0 %v1988
        %2299 = vmatprep.subr.mxu0 0.0
        %2300 = vmatpush1.msra.mxu0 %v1991
        %2301 = vmatprep.subr.mxu0 0.0
        %2302 = vmatpush1.msra.mxu0 %v1994
        %2303 = vmatprep.subr.mxu0 0.0
        %2304 = vmatpush1.msra.mxu0 %v1997
        %2305 = vmatprep.subr.mxu0 0.0
        %2306 = vmatpush1.msra.mxu0 %v2000
        %2307 = vmatprep.subr.mxu0 0.0
        %2308 = vmatpush1.msra.mxu0 %v2003
        %2309 = vmatprep.subr.mxu0 0.0
        %2310 = vmatpush1.msra.mxu0 %v2006
        %2311 = vmatprep.subr.mxu0 0.0
        %2312 = vmatpush1.msra.mxu0 %v2009
        %2313 = vmatprep.subr.mxu0 0.0
        %2314 = vmatpush1.msra.mxu0 %v2012
        %2315 = vmatprep.subr.mxu0 0.0
        %2316 = vmatpush1.msra.mxu0 %v2015
        %2317 = vmatprep.subr.mxu0 0.0
        %2318 = vmatpush1.msra.mxu0 %v2018
        %2319 = vmatprep.subr.mxu0 0.0
        %2320 = vmatpush1.msra.mxu0 %v2021
        %2321 = vmatprep.subr.mxu0 0.0
        %2322 = vmatpush1.msra.mxu0 %v2024
        %2323 = vmatprep.subr.mxu0 0.0
        %2324 = vmatpush1.msra.mxu0 %v2027
        %2325 = vmatprep.subr.mxu0 0.0
        %2326 = vmatpush1.msra.mxu0 %v2030
        %2327 = vmatprep.subr.mxu0 0.0
        %2328 = vmatpush1.msra.mxu0 %v2033
        %2329 = vmatprep.subr.mxu0 0.0
        %2330 = vmatpush1.msra.mxu0 %v2036
        %2331 = vmatprep.subr.mxu0 0.0
        %2332 = vmatpush1.msra.mxu0 %v2039
        %2333 = vmatprep.subr.mxu0 0.0
        %2334 = vmatpush1.msra.mxu0 %v2042
        %2335 = vmatprep.subr.mxu0 0.0
        %2336 = vmatpush1.msra.mxu0 %v2045
        %2337 = vmatprep.subr.mxu0 0.0
        %2338 = vmatpush1.msra.mxu0 %v2048
        %2339 = vmatprep.subr.mxu0 0.0
        %2340 = vmatpush1.msra.mxu0 %v2051
        %2341 = vmatprep.subr.mxu0 0.0
        %2342 = vmatpush1.msra.mxu0 %v2054
        %2343 = vmatprep.subr.mxu0 0.0
        %2344 = vmatpush1.msra.mxu0 %v2057
        %2345 = vmatprep.subr.mxu0 0.0
        %2346 = vmatpush1.msra.mxu0 %v2060
        %2347 = vmatprep.subr.mxu0 0.0
        %2348 = vmatpush1.msra.mxu0 %v2063
        %2349 = vmatprep.subr.mxu0 0.0
        %2350 = vmatpush1.msra.mxu0 %v2066
        %2351 = vmatprep.subr.mxu0 0.0
        %2352 = vmatpush1.msra.mxu0 %v2069
        %2353 = vmatprep.subr.mxu0 0.0
        %2354 = vmatpush1.msra.mxu0 %v2072
        %2355 = vmatprep.subr.mxu0 0.0
        %2356 = vmatpush1.msra.mxu0 %v2075
        %2357 = vmatprep.subr.mxu0 0.0
        %2358 = vmatpush1.msra.mxu0 %v2078
        %2359 = vmatprep.mubr.f32.mxu0 %v1980
        %2360 = vmatmul.mubr.f32.gmra.mrb[0].mxu0 %v1979
        %v2361 = vpop.f32.mrb[0].mxu0
        %v2362 = vadd.f32 %v2146, %v2361
        %v2363 = vpop.f32.mrb[0].mxu0
        %2364 = vdwg.mxu0
        %2365 = vmatprep.subr.mxu0 0.0
        %2366 = vmatpush1.msra.mxu0 %v2081
        %2367 = vmatprep.subr.mxu0 0.0
        %2368 = vmatpush1.msra.mxu0 %v2084
        %2369 = vmatprep.subr.mxu0 0.0
        %2370 = vmatpush1.msra.mxu0 %v2087
        %2371 = vmatprep.subr.mxu0 0.0
        %2372 = vmatpush1.msra.mxu0 %v2090
        %2373 = vmatprep.subr.mxu0 0.0
        %2374 = vmatpush1.msra.mxu0 %v2093
        %2375 = vmatprep.subr.mxu0 0.0
        %2376 = vmatpush1.msra.mxu0 %v2096
        %2377 = vmatprep.subr.mxu0 0.0
        %2378 = vmatpush1.msra.mxu0 %v2099
        %2379 = vmatprep.subr.mxu0 0.0
        %2380 = vmatpush1.msra.mxu0 %v2102
        %2381 = vmatprep.subr.mxu0 0.0
        %2382 = vmatpush1.msra.mxu0 %v2105
        %2383 = vmatprep.subr.mxu0 0.0
        %2384 = vmatpush1.msra.mxu0 %v2108
        %2385 = vmatprep.subr.mxu0 0.0
        %2386 = vmatpush1.msra.mxu0 %v2111
        %2387 = vmatprep.subr.mxu0 0.0
        %2388 = vmatpush1.msra.mxu0 %v2114
        %2389 = vmatprep.subr.mxu0 0.0
        %2390 = vmatpush1.msra.mxu0 %v2117
        %2391 = vmatprep.subr.mxu0 0.0
        %2392 = vmatpush1.msra.mxu0 %v2120
        %2393 = vmatprep.subr.mxu0 0.0
        %2394 = vmatpush1.msra.mxu0 %v2123
        %2395 = vmatprep.subr.mxu0 0.0
        %2396 = vmatpush1.msra.mxu0 %v2126
        %2397 = vmatprep.subr.mxu0 0.0
        %2398 = vmatpush1.msra.mxu0 %v2129
        %2399 = vmatprep.subr.mxu0 0.0
        %2400 = vmatpush1.msra.mxu0 %v2132
        %2401 = vmatprep.subr.mxu0 0.0
        %2402 = vmatpush1.msra.mxu0 0.0
        %2403 = vmatprep.subr.mxu0 0.0
        %2404 = vmatpush1.msra.mxu0 0.0
        %2405 = vmatprep.subr.mxu0 0.0
        %2406 = vmatpush1.msra.mxu0 0.0
        %2407 = vmatprep.subr.mxu0 0.0
        %2408 = vmatpush1.msra.mxu0 0.0
        %2409 = vmatprep.subr.mxu0 0.0
        %2410 = vmatpush1.msra.mxu0 0.0
        %2411 = vmatprep.subr.mxu0 0.0
        %2412 = vmatpush1.msra.mxu0 0.0
        %2413 = vmatprep.subr.mxu0 0.0
        %2414 = vmatpush1.msra.mxu0 0.0
        %2415 = vmatprep.subr.mxu0 0.0
        %2416 = vmatpush1.msra.mxu0 0.0
        %2417 = vmatprep.subr.mxu0 0.0
        %2418 = vmatpush1.msra.mxu0 0.0
        %2419 = vmatprep.subr.mxu0 0.0
        %2420 = vmatpush1.msra.mxu0 0.0
        %2421 = vmatprep.subr.mxu0 0.0
        %2422 = vmatpush1.msra.mxu0 0.0
        %2423 = vmatprep.subr.mxu0 0.0
        %2424 = vmatpush1.msra.mxu0 0.0
        %2425 = vmatprep.subr.mxu0 0.0
        %2426 = vmatpush1.msra.mxu0 0.0
        %2427 = vmatprep.subr.mxu0 0.0
        %2428 = vmatpush1.msra.mxu0 0.0
        %2429 = vmatprep.mubr.f32.mxu0 %v2151
        %2430 = vmatmul.mubr.f32.gmra.mrb[0].mxu0 %v1981
        %v2431 = vpop.f32.mrb[0].mxu0
        %v2432 = vadd.f32 %v2362, %v2431
        %v2433 = vpop.f32.mrb[0].mxu0
        %2434 = vdwg.mxu0
        %v2435 = vmax.f32 %v2291, 0.0
        %v2436 = vmax.f32 %v2293, 0.0
        %v2437 = vmax.f32 %v2432, 0.0
        %v2438 = vld [vmem:[%s5] sm:$0xff]
        %v2439 = vld [vmem:[%s5 + $0x8] sm:$0xff]
        %v2440 = vld [vmem:[%s5 + $0x10] sm:$0xff]
        %v2441 = vld [vmem:[%s5 + $0x18] sm:$0xff]
        %v2442 = vld [vmem:[%s5 + $0x20] sm:$0xff]
        %v2443 = vld [vmem:[%s5 + $0x28] sm:$0xff]
        %v2444 = vld [vmem:[%s5 + $0x30] sm:$0xff]
        %v2445 = vld [vmem:[%s5 + $0x38] sm:$0xff]
        %v2446 = vld [vmem:[%s5 + $0x40] sm:$0xff]
        %v2447 = vld [vmem:[%s5 + $0x48] sm:$0xff]
        %v2448 = vld [vmem:[%s5 + $0x50] sm:$0xff]
        %v2449 = vld [vmem:[%s5 + $0x58] sm:$0xff]
        %v2450 = vld [vmem:[%s5 + $0x60] sm:$0xff]
        %v2451 = vld [vmem:[%s5 + $0x68] sm:$0xff]
        %v2452 = vld [vmem:[%s5 + $0x70] sm:$0xff]
        %v2453 = vld [vmem:[%s5 + $0x78] sm:$0xff]
        %v2454 = vld [vmem:[%s5 + $0x80] sm:$0xff]
        %v2455 = vld [vmem:[%s5 + $0x88] sm:$0xff]
        %v2456 = vld [vmem:[%s5 + $0x90] sm:$0xff]
        %v2457 = vld [vmem:[%s5 + $0x98] sm:$0xff]
        %v2458 = vld [vmem:[%s5 + $0xa0] sm:$0xff]
        %v2459 = vld [vmem:[%s5 + $0xa8] sm:$0xff]
        %v2460 = vld [vmem:[%s5 + $0xb0] sm:$0xff]
        %v2461 = vld [vmem:[%s5 + $0xb8] sm:$0xff]
        %v2462 = vld [vmem:[%s5 + $0xc0] sm:$0xff]
        %v2463 = vld [vmem:[%s5 + $0xc8] sm:$0xff]
        %v2464 = vld [vmem:[%s5 + $0xd0] sm:$0xff]
        %v2465 = vld [vmem:[%s5 + $0xd8] sm:$0xff]
        %v2466 = vld [vmem:[%s5 + $0xe0] sm:$0xff]
        %v2467 = vld [vmem:[%s5 + $0xe8] sm:$0xff]
        %v2468 = vld [vmem:[%s5 + $0xf0] sm:$0xff]
        %v2469 = vld [vmem:[%s5 + $0xf8] sm:$0xff]
        %v2470 = vld [vmem:[%s5 + $0x100] sm:$0xff]
        %v2471 = vld [vmem:[%s5 + $0x108] sm:$0xff]
        %v2472 = vld [vmem:[%s5 + $0x110] sm:$0xff]
        %v2473 = vld [vmem:[%s5 + $0x118] sm:$0xff]
        %v2474 = vld [vmem:[%s5 + $0x120] sm:$0xff]
        %v2475 = vld [vmem:[%s5 + $0x128] sm:$0xf]
        %v2476 = vld [vmem:[%s6] sm:$0x1]
        %v2478 = vlaneseq
        %v2479 = vshrl.u32 %v2478, 7
        %v2480 = vsub.s32 0, %v2479
        %v2481 = vrot.slane %v2476, %v2480
        %vm2483 = vcmask 359424
        %v2485 = vsel %vm2483, %v2437, 0
        %vm2487 = vcmask 1043456
        %v2489 = vsel %vm2487, %v2475, 0
        %2491 = vmatprep.subr.mxu0 0.0
        %2492 = vmatpush1.msra.mxu0 %v2438
        %2493 = vmatprep.subr.mxu0 0.0
        %2494 = vmatpush1.msra.mxu0 %v2439
        %2495 = vmatprep.subr.mxu0 0.0
        %2496 = vmatpush1.msra.mxu0 %v2440
        %2497 = vmatprep.subr.mxu0 0.0
        %2498 = vmatpush1.msra.mxu0 %v2441
        %2499 = vmatprep.subr.mxu0 0.0
        %2500 = vmatpush1.msra.mxu0 %v2442
        %2501 = vmatprep.subr.mxu0 0.0
        %2502 = vmatpush1.msra.mxu0 %v2443
        %2503 = vmatprep.subr.mxu0 0.0
        %2504 = vmatpush1.msra.mxu0 %v2444
        %2505 = vmatprep.subr.mxu0 0.0
        %2506 = vmatpush1.msra.mxu0 %v2445
        %2507 = vmatprep.subr.mxu0 0.0
        %2508 = vmatpush1.msra.mxu0 %v2446
        %2509 = vmatprep.subr.mxu0 0.0
        %2510 = vmatpush1.msra.mxu0 %v2447
        %2511 = vmatprep.subr.mxu0 0.0
        %2512 = vmatpush1.msra.mxu0 %v2448
        %2513 = vmatprep.subr.mxu0 0.0
        %2514 = vmatpush1.msra.mxu0 %v2449
        %2515 = vmatprep.subr.mxu0 0.0
        %2516 = vmatpush1.msra.mxu0 %v2450
        %2517 = vmatprep.subr.mxu0 0.0
        %2518 = vmatpush1.msra.mxu0 %v2451
        %2519 = vmatprep.subr.mxu0 0.0
        %2520 = vmatpush1.msra.mxu0 %v2452
        %2521 = vmatprep.subr.mxu0 0.0
        %2522 = vmatpush1.msra.mxu0 %v2453
        %2523 = vmatprep.subr.mxu0 0.0
        %2524 = vmatpush1.msra.mxu0 %v2454
        %2525 = vmatprep.subr.mxu0 0.0
        %2526 = vmatpush1.msra.mxu0 %v2455
        %2527 = vmatprep.subr.mxu0 0.0
        %2528 = vmatpush1.msra.mxu0 %v2456
        %2529 = vmatprep.subr.mxu0 0.0
        %2530 = vmatpush1.msra.mxu0 %v2457
        %2531 = vmatprep.subr.mxu0 0.0
        %2532 = vmatpush1.msra.mxu0 %v2458
        %2533 = vmatprep.subr.mxu0 0.0
        %2534 = vmatpush1.msra.mxu0 %v2459
        %2535 = vmatprep.subr.mxu0 0.0
        %2536 = vmatpush1.msra.mxu0 %v2460
        %2537 = vmatprep.subr.mxu0 0.0
        %2538 = vmatpush1.msra.mxu0 %v2461
        %2539 = vmatprep.subr.mxu0 0.0
        %2540 = vmatpush1.msra.mxu0 %v2462
        %2541 = vmatprep.subr.mxu0 0.0
        %2542 = vmatpush1.msra.mxu0 %v2463
        %2543 = vmatprep.subr.mxu0 0.0
        %2544 = vmatpush1.msra.mxu0 %v2464
        %2545 = vmatprep.subr.mxu0 0.0
        %2546 = vmatpush1.msra.mxu0 %v2465
        %2547 = vmatprep.subr.mxu0 0.0
        %2548 = vmatpush1.msra.mxu0 %v2466
        %2549 = vmatprep.subr.mxu0 0.0
        %2550 = vmatpush1.msra.mxu0 %v2467
        %2551 = vmatprep.subr.mxu0 0.0
        %2552 = vmatpush1.msra.mxu0 %v2468
        %2553 = vmatprep.subr.mxu0 0.0
        %2554 = vmatpush1.msra.mxu0 %v2469
        %2555 = vmatprep.mubr.f32.mxu0 %v2436
        %2556 = vmatmul.mubr.f32.gmra.mrb[0].mxu0 %v2435
        %v2557 = vpop.f32.mrb[0].mxu0
        %v2558 = vadd.f32 %v2481, %v2557
        %v2559 = vpop.f32.mrb[0].mxu0
        %2560 = vdwg.mxu0
        %2561 = vmatprep.subr.mxu0 0.0
        %2562 = vmatpush1.msra.mxu0 %v2470
        %2563 = vmatprep.subr.mxu0 0.0
        %2564 = vmatpush1.msra.mxu0 %v2471
        %2565 = vmatprep.subr.mxu0 0.0
        %2566 = vmatpush1.msra.mxu0 %v2472
        %2567 = vmatprep.subr.mxu0 0.0
        %2568 = vmatpush1.msra.mxu0 %v2473
        %2569 = vmatprep.subr.mxu0 0.0
        %2570 = vmatpush1.msra.mxu0 %v2474
        %2571 = vmatprep.subr.mxu0 0.0
        %2572 = vmatpush1.msra.mxu0 %v2489
        %2573 = vmatprep.subr.mxu0 0.0
        %2574 = vmatpush1.msra.mxu0 0.0
        %2575 = vmatprep.subr.mxu0 0.0
        %2576 = vmatpush1.msra.mxu0 0.0
        %2577 = vmatprep.subr.mxu0 0.0
        %2578 = vmatpush1.msra.mxu0 0.0
        %2579 = vmatprep.subr.mxu0 0.0
        %2580 = vmatpush1.msra.mxu0 0.0
        %2581 = vmatprep.subr.mxu0 0.0
        %2582 = vmatpush1.msra.mxu0 0.0
        %2583 = vmatprep.subr.mxu0 0.0
        %2584 = vmatpush1.msra.mxu0 0.0
        %2585 = vmatprep.subr.mxu0 0.0
        %2586 = vmatpush1.msra.mxu0 0.0
        %2587 = vmatprep.subr.mxu0 0.0
        %2588 = vmatpush1.msra.mxu0 0.0
        %2589 = vmatprep.subr.mxu0 0.0
        %2590 = vmatpush1.msra.mxu0 0.0
        %2591 = vmatprep.subr.mxu0 0.0
        %2592 = vmatpush1.msra.mxu0 0.0
        %2593 = vmatprep.subr.mxu0 0.0
        %2594 = vmatpush1.msra.mxu0 0.0
        %2595 = vmatprep.subr.mxu0 0.0
        %2596 = vmatpush1.msra.mxu0 0.0
        %2597 = vmatprep.subr.mxu0 0.0
        %2598 = vmatpush1.msra.mxu0 0.0
        %2599 = vmatprep.subr.mxu0 0.0
        %2600 = vmatpush1.msra.mxu0 0.0
        %2601 = vmatprep.subr.mxu0 0.0
        %2602 = vmatpush1.msra.mxu0 0.0
        %2603 = vmatprep.subr.mxu0 0.0
        %2604 = vmatpush1.msra.mxu0 0.0
        %2605 = vmatprep.subr.mxu0 0.0
        %2606 = vmatpush1.msra.mxu0 0.0
        %2607 = vmatprep.subr.mxu0 0.0
        %2608 = vmatpush1.msra.mxu0 0.0
        %2609 = vmatprep.subr.mxu0 0.0
        %2610 = vmatpush1.msra.mxu0 0.0
        %2611 = vmatprep.subr.mxu0 0.0
        %2612 = vmatpush1.msra.mxu0 0.0
        %2613 = vmatprep.subr.mxu0 0.0
        %2614 = vmatpush1.msra.mxu0 0.0
        %2615 = vmatprep.subr.mxu0 0.0
        %2616 = vmatpush1.msra.mxu0 0.0
        %2617 = vmatprep.subr.mxu0 0.0
        %2618 = vmatpush1.msra.mxu0 0.0
        %2619 = vmatprep.subr.mxu0 0.0
        %2620 = vmatpush1.msra.mxu0 0.0
        %2621 = vmatprep.subr.mxu0 0.0
        %2622 = vmatpush1.msra.mxu0 0.0
        %2623 = vmatprep.subr.mxu0 0.0
        %2624 = vmatpush1.msra.mxu0 0.0
        %2625 = vmatprep.mubr.f32.mxu0 0.0
        %2626 = vmatmul.mubr.f32.gmra.mrb[0].mxu0 %v2485
        %v2627 = vpop.f32.mrb[0].mxu0
        %v2628 = vadd.f32 %v2558, %v2627
        %v2629 = vpop.f32.mrb[0].mxu0
        %2630 = vdwg.mxu0
        %v2631 = vmax.f32 %v2628, 0.0
        %2632 = vst [vmem:[%s7] sm:$0xff] %v2631
      $region56: #{critic_forward.5} parent=47 // pred_fallthru
        _
      // Predicated region
      $region57: #{critic_forward.5} parent=47 // pred_check
        %p2633 = pneg %p188
      $region58: #{critic_forward.5} parent=47 // pred_check_branch
        %2635 = sbr.rel (%p2633) target = $region60
      $region59: #{critic_forward.5} parent=47 // pred_region
        _
      $region60: #{critic_forward.5} parent=47 // pred_fallthru
        _
      // Predicated region
      $region61: #{critic_forward.5} parent=47 // pred_check
        %p2636 = pneg %p188
      $region62: #{critic_forward.5} parent=47 // pred_check_branch
        %2638 = sbr.rel (%p2636) target = $region64
      $region63: #{critic_forward.5} parent=47 // pred_region
        _
      $region64: #{critic_forward.5} parent=47 // pred_fallthru
        _
    $region48: #{critic_forward.5} parent=5 // pred_fallthru
      _
    %p2639 = scmp.le.s32.totalorder 2, %s13
    // Predicated region
    $region65: #{critic_forward.5} parent=5 // pred_check
      %p2640 = pneg %p2639
    $region66: #{critic_forward.5} parent=5 // pred_check_branch
      %2642 = sbr.rel (%p2640) target = $region68
    $region67: #{critic_forward.5} parent=5 // pred_region
      %s2643 = ssub.s32 %s13, 2
    $region68: #{critic_forward.5} parent=5 // pred_fallthru
      _
  $region6: #{critic_forward.5} parent=0 // loop_footer
    %s17 = sadd.s32 1, %s13
  $region7: #{critic_forward.5} parent=0 // loop_footer_branch
    %12 = sbr.rel target = $region3
  $region8: #{critic_forward.5} parent=0 // loop_exit
    _

</llo_original>
